<compile_context>
chip_gen: v6e
topology: v6e:2x2x1
jax: 0.10.0
libtpu: 0.0.40
codegen_flags: <defaults>
</compile_context>

<pallas_src>
import functools

import numpy as np
import jax
import jax.numpy as jnp
from jax.experimental import pallas as pl
from jax.experimental.pallas import tpu as pltpu

F32 = jnp.float32
VMEM = pl.BlockSpec(memory_space=pltpu.MemorySpace.VMEM)
SMEM = pl.BlockSpec(memory_space=pltpu.MemorySpace.SMEM)


# ----------------------------------------------------------------------------
# Host-side packing helpers (run once at parameter construction time)
# ----------------------------------------------------------------------------
def _pack_cmat(w):
    """Complex (K, M) -> packed real (2K, 2M) so that
       [xr | xi] @ pack(W) = [Re(x @ W) | Im(x @ W)]."""
    wr = jnp.real(w).astype(F32)
    wi = jnp.imag(w).astype(F32)
    top = jnp.concatenate([wr, wi], axis=1)
    bot = jnp.concatenate([-wi, wr], axis=1)
    return jnp.concatenate([top, bot], axis=0)


def _pack_conv(wr, wi):
    """Complex conv weight (3, Cin, Cout) -> packed (6*Cin, 2*Cout) matching
       im2col column order [tap0:(r,i) | tap1:(r,i) | tap2:(r,i)]."""
    blocks = []
    for k in range(3):
        top = jnp.concatenate([wr[k], wi[k]], axis=1)       # (Cin, 2*Cout)
        bot = jnp.concatenate([-wi[k], wr[k]], axis=1)      # (Cin, 2*Cout)
        blocks.append(jnp.concatenate([top, bot], axis=0))  # (2*Cin, 2*Cout)
    return jnp.concatenate(blocks, axis=0)                  # (6*Cin, 2*Cout)


def _pack_slab(pieces):
    """pieces: list of (name, 2-D array with width <= 128).
       Returns one (R, 128) f32 slab (each piece 8-row aligned, zero padded)
       plus a layout dict name -> (row_offset, rows, cols) of static ints."""
    layout = {}
    bufs = []
    off = 0
    for name, arr in pieces:
        a = np.asarray(arr, np.float32)
        assert a.ndim == 2 and a.shape[1] <= 128, (name, a.shape)
        r, c = a.shape
        rpad = -(-r // 8) * 8
        buf = np.zeros((rpad, 128), np.float32)
        buf[:r, :c] = a
        layout[name] = (off, r, c)
        bufs.append(buf)
        off += rpad
    return jnp.asarray(np.concatenate(bufs, axis=0)), layout


def _const_pieces(B, N):
    """Tiny gather/scatter/mask constants.
       NOTE: Mm grows as (B*N, 2N); keep B*N modest or replace by roll logic
       before scaling up (the O((BN)^2) Sdn/Sup matrices are already gone)."""
    BN = B * N
    l = np.arange(BN) % N
    b = np.arange(BN) // N
    E = (b[:, None] == np.arange(B)[None, :]).astype(np.float32)          # (BN, B)
    E2 = np.ascontiguousarray(E.T)                                        # (B, BN)
    m = np.arange(2 * N)
    Q = (np.arange(2)[:, None] == (m[None, :] // N)).astype(np.float32)   # (2, 2N)
    Mm = (l[:, None] == (m[None, :] % N)).astype(np.float32)              # (BN, 2N)
    # conv boundary masks: col 0 -> "previous row valid", col 1 -> "next row valid"
    masks = np.stack([(l >= 1).astype(np.float32),
                      (l <= N - 2).astype(np.float32)], axis=1)           # (BN, 2)
    return [('E', E), ('E2', E2), ('Q', Q), ('Qt', np.ascontiguousarray(Q.T)),
            ('Mm', Mm), ('masks', masks)]


def _proj_pieces(key, M, N):
    """Synthetic complex measurement operators A (Aori) and B (Agrid), packed
       both individually and pre-fused for the wide merged matmuls."""
    def cmat(k, shape):
        kr, ki = jax.random.split(k)
        return (jax.lax.complex(jax.random.normal(kr, shape, F32),
                                jax.random.normal(ki, shape, F32))
                / jnp.sqrt(shape[1] * 1.0))
    kA, kB = jax.random.split(key)
    A = cmat(kA, (M, N))
    Bm = cmat(kB, (M, N))
    pAc = _pack_cmat(jnp.conj(A))    # (2M, 2N)
    pBc = _pack_cmat(jnp.conj(Bm))   # (2M, 2N)
    pAt = _pack_cmat(A.T)            # (2N, 2M)
    pBt = _pack_cmat(Bm.T)           # (2N, 2M)
    return [
        ('pcat_c', jnp.concatenate([pAc, pBc], axis=1)),   # (2M, 4N)
        ('pcat_t', jnp.concatenate([pAt, pBt], axis=0)),   # (4N, 2M)
        ('pvc',    jnp.concatenate([pAc, pBc], axis=0)),   # (4M, 2N)
        ('pAt', pAt), ('pBt', pBt), ('pBc', pBc),
    ]


def _branch_pieces(key, C, tag):
    """Synthetic weights for one ISTA branch (x: tag='0', beta: tag='1')."""
    ks = jax.random.split(key, 7)

    def conv_wb(k, cin, cout, scale=0.2):
        kk = jax.random.split(k, 4)
        wr = scale * jax.random.normal(kk[0], (3, cin, cout), F32)
        wi = scale * jax.random.normal(kk[1], (3, cin, cout), F32)
        br = scale * jax.random.normal(kk[2], (1, cout), F32)
        bi = scale * jax.random.normal(kk[3], (1, cout), F32)
        return _pack_conv(wr, wi), jnp.concatenate([br, bi], axis=-1)

    WD, bD = conv_wb(ks[0], 1, C)
    W1f, b1f = conv_wb(ks[1], C, C)
    W2f, b2f = conv_wb(ks[2], C, C)
    W1b, b1b = conv_wb(ks[3], C, C)
    W2b, b2b = conv_wb(ks[4], C, C)
    WG, bG = conv_wb(ks[5], C, 1)
    kf = jax.random.split(ks[6], 4)
    fw1 = jax.random.normal(kf[0], (C, C), F32) / jnp.sqrt(C * 1.0)
    fb1 = 0.1 * jax.random.normal(kf[1], (1, C), F32)
    gam = jnp.ones((1, C), F32)        # BatchNorm gamma
    bnb = jnp.zeros((1, C), F32)       # BatchNorm beta
    fw2 = jax.random.normal(kf[2], (C, C), F32) / jnp.sqrt(C * 1.0)
    fb2 = 0.1 * jax.random.normal(kf[3], (1, C), F32)
    named = dict(WD=WD, bD=bD, W1f=W1f, b1f=b1f, W2f=W2f, b2f=b2f,
                 W1b=W1b, b1b=b1b, W2b=W2b, b2b=b2b, WG=WG, bG=bG,
                 fw1=fw1, fb1=fb1, gam=gam, bnb=bnb, fw2=fw2, fb2=fb2)
    return [(n + tag, v) for n, v in named.items()]


def init_params(key, B, N, M, C, reslu=0.5):
    kx, kb, km = jax.random.split(key, 3)
    pieces = []
    pieces += _proj_pieces(km, M, N)
    pieces += _const_pieces(B, N)
    pieces += _branch_pieces(kx, C, '0')     # x branch
    pieces += _branch_pieces(kb, C, '1')     # beta branch
    slab, layout = _pack_slab(pieces)
    return dict(n_filters=C, reslu=reslu,
                soft_thr_x=0.01, soft_thr_beta=0.01,
                slab=slab, layout=layout)


# ----------------------------------------------------------------------------
# The single fused Pallas kernel
# ----------------------------------------------------------------------------
def _build_kernel(B, N, M, C, layout):
    BN = B * N
    n2, m2 = 2 * N, 2 * M
    inv_n = 1.0 / float(N)

    def kernel(sc_ref, act_ref, slab_ref, out_ref):
        # --- deferred slab access: static 8-row-aligned slices at point of use
        def W(name):
            off, r, c = layout[name]
            return slab_ref[off:off + r, :c]

        def dot(a, b):
            return jnp.dot(a, b, preferred_element_type=F32)

        # packed-complex row-vector helpers, width 2N = [real | imag]
        def csplit(v):
            return v[:, :N], v[:, N:]

        def cpack(re, im):
            return jnp.concatenate([re, im], axis=-1)

        def cconj(v):
            re, im = csplit(v)
            return cpack(re, -im)

        def cmul(u, v):
            ur, ui = csplit(u)
            vr, vi = csplit(v)
            return cpack(ur * vr - ui * vi, ur * vi + ui * vr)

        reslu = sc_ref[0]
        thr_x = sc_ref[1]
        thr_b = sc_ref[2]

        def conv(z, w, bias, mdn, mup):
            # z: (BN, 2*Cin) packed [r|i]. k=3/pad=1 conv as one im2col matmul;
            # the +-1 length shifts are sublane rolls + boundary masks.
            prev = pltpu.roll(z, 1, axis=0) * mdn
            nxt = pltpu.roll(z, BN - 1, axis=0) * mup
            col = jnp.concatenate([prev, z, nxt], axis=-1)   # (BN, 6*Cin)
            return dot(col, w) + bias

        def ista(xf2, br, use_abs, thr):
            masks = W('masks')
            mdn, mup = masks[:, 0:1], masks[:, 1:2]
            # --- conv_D entry: flat packed row-vector (B,2N) -> conv layout (BN,2)
            rep = dot(W('E'), xf2)                           # (BN, 2N)
            zf = dot(rep * W('Mm'), W('Qt'))                 # (BN, 2)
            z = conv(zf, W('WD' + br), W('bD' + br), mdn, mup)          # (BN, 2C)
            # --- forward convs
            z = jnp.maximum(conv(z, W('W1f' + br), W('b1f' + br), mdn, mup), 0.0)
            z = conv(z, W('W2f' + br), W('b2f' + br), mdn, mup)
            zr, zi = z[:, :C], z[:, C:]
            # --- attention: avgpool(L) -> Linear -> BN(train) -> ReLU -> Linear -> Sigmoid
            feat = jnp.sqrt(zr * zr + zi * zi) if use_abs else zr
            avg = dot(W('E2'), feat) * inv_n                 # (B, C)
            h = dot(avg, W('fw1' + br)) + W('fb1' + br)
            mu = jnp.mean(h, axis=0, keepdims=True)
            var = jnp.mean((h - mu) ** 2, axis=0, keepdims=True)   # biased (train)
            h = W('gam' + br) * (h - mu) * jax.lax.rsqrt(var + 1e-5) + W('bnb' + br)
            h = jnp.maximum(h, 0.0)
            attn = jax.nn.sigmoid(dot(h, W('fw2' + br)) + W('fb2' + br))
            sub = dot(W('E'), attn * avg)                    # (BN, C) broadcast over L
            zr = zr - sub     # complex - real => real part only (torch semantics)
            # --- complex soft threshold (rsqrt form, no divide / extra sqrt)
            inv = jax.lax.rsqrt(zr * zr + zi * zi + 1e-24)
            scl = jnp.maximum(1.0 - thr * inv, 0.0)
            z = jnp.concatenate([scl * zr, scl * zi], axis=-1)
            # --- backward convs
            z = jnp.maximum(conv(z, W('W1b' + br), W('b1b' + br), mdn, mup), 0.0)
            z = conv(z, W('W2b' + br), W('b2b' + br), mdn, mup)
            zg = conv(z, W('WG' + br), W('bG' + br), mdn, mup)          # (BN, 2)
            # --- conv_G exit: scatter (BN, 2) back to packed row-vector (B, 2N)
            xg2 = dot(W('E2'), dot(zg, W('Q')) * W('Mm'))
            return xf2 + xg2

        # ----------------- main flow (packed complex row vectors) -------------
        beta2 = act_ref[:, :n2]            # (B, 2N)
        ya = act_ref[:, n2:]               # (B, 2M) = alpha + y (pre-summed host-side)

        # AoriH / AgridH applied to y_alpha, fused into one wide matmul each way
        uv = dot(ya, W('pcat_c'))          # (B, 4N) = [AHy | AgridHy]
        AHy, AgridHy = uv[:, :n2], uv[:, n2:]
        errH1 = 2.0 * ya - dot(uv, W('pcat_t'))     # AoriH_err + AgridH_err(1st)

        x_forward = AHy + reslu * cmul(cconj(beta2), AgridHy)
        bx = reslu * cmul(beta2, x_forward)
        A_Agrid_err = dot(jnp.concatenate([x_forward, bx], axis=-1),
                          W('pcat_t')) - ya

        x_new = ista(x_forward, '0', True, thr_x)

        Ax = dot(x_new, W('pAt'))                   # Aori forward
        beta_y = ya - Ax
        BHbetay = dot(beta_y, W('pBc'))             # AgridH (again)
        agh2 = beta_y - dot(BHbetay, W('pBt'))

        beta_fwd = reslu * cmul(cconj(x_new), BHbetay)
        beta_new = ista(beta_fwd, '1', False, thr_b)

        # beta[|beta| > 1/2] = sgn(beta) / 100   (rsqrt form)
        br_, bi_ = csplit(beta_new)
        sq = br_ * br_ + bi_ * bi_
        inv = jax.lax.rsqrt(sq + 1e-24)
        scl = jnp.where(sq > 0.25, 0.01 * inv, 1.0)
        beta_new = cpack(br_ * scl, bi_ * scl)

        v = reslu * cmul(beta_new, x_new)
        Bxb = dot(v, W('pBt'))                      # Agrid forward
        backx = dot(jnp.concatenate([Ax, Bxb], axis=-1), W('pvc'))
        alpha_new = ya - (Ax + Bxb)

        x_err = (x_new + v - backx) * 0.5
        y_err = (errH1 + agh2 + A_Agrid_err) * 0.25

        # single lane-dense output slab: [x_new | beta_new | x_err | alpha_new | y_err]
        out_ref[...] = jnp.concatenate(
            [x_new, beta_new, x_err, alpha_new, y_err], axis=-1)

    return kernel


# ----------------------------------------------------------------------------
# Host wrapper
# ----------------------------------------------------------------------------
def basic_block_forward(params, x, beta, y, alpha):
    """x, beta: (B, N, 1) complex64; y, alpha: (B, M, 1) complex64.
       Returns [x_new, beta_new, alpha_new, x_err, y_err] (complex64).
       (The input x only determines shape, exactly as in the PyTorch module.)"""
    B, N = x.shape[0], x.shape[1]
    M = y.shape[1]
    C = params['n_filters']
    n2, m2 = 2 * N, 2 * M
    width = 3 * n2 + 2 * m2

    def pack_vec(z):
        zs = z[..., 0]
        return jnp.concatenate([jnp.real(zs), jnp.imag(zs)], axis=-1).astype(F32)

    # only alpha + y is ever used by the block -> pre-sum host-side
    act = jnp.concatenate([pack_vec(beta), pack_vec(alpha + y)], axis=-1)  # (B, 2N+2M)

    sc = jnp.stack([jnp.asarray(params['reslu'], F32),
                    jnp.asarray(params['soft_thr_x'], F32),
                    jnp.asarray(params['soft_thr_beta'], F32)])

    kern = _build_kernel(B, N, M, C, params['layout'])

    out = pl.pallas_call(
        kern,
        out_shape=jax.ShapeDtypeStruct((B, width), F32),
        in_specs=[SMEM, VMEM, VMEM],
        out_specs=VMEM,
    )(sc, act, params['slab'])

    def unpack(v, K):
        return jax.lax.complex(v[:, :K], v[:, K:])[..., None]

    x_new = unpack(out[:, 0:n2], N)
    beta_new = unpack(out[:, n2:2 * n2], N)
    x_err = unpack(out[:, 2 * n2:3 * n2], N)
    alpha_new = unpack(out[:, 3 * n2:3 * n2 + m2], M)
    y_err = unpack(out[:, 3 * n2 + m2:], M)
    return [x_new, beta_new, alpha_new, x_err, y_err]


# ----------------------------------------------------------------------------
if __name__ == "__main__":
    key = jax.random.PRNGKey(0)
    Bsz, N, M, C = 2, 16, 8, 8        # batch, fr_size, measurements, n_filters

    kp, kx, kb, ky, ka = jax.random.split(key, 5)
    params = init_params(kp, Bsz, N, M, C, reslu=0.5)

    def c_randn(k, shape, scale=1.0):
        kr, ki = jax.random.split(k)
        return scale * jax.lax.complex(jax.random.normal(kr, shape, F32),
                                       jax.random.normal(ki, shape, F32))

    x = c_randn(kx, (Bsz, N, 1))
    beta = c_randn(kb, (Bsz, N, 1), 0.1)
    y = c_randn(ky, (Bsz, M, 1))
    alpha = c_randn(ka, (Bsz, M, 1), 0.1)

    fwd = jax.jit(functools.partial(basic_block_forward, params))
    out = fwd(x, beta, y, alpha)
    jax.block_until_ready(out)
    print("KERNEL_OK")
</pallas_src>

<mosaic_0001>
module attributes {stable_mosaic.version = 11 : i64} {
  func.func @kernel(%arg0: memref<3xf32, #tpu.memory_space<smem>>, %arg1: memref<2x48xf32, #tpu.memory_space<vmem>>, %arg2: memref<1024x128xf32, #tpu.memory_space<vmem>>, %arg3: memref<2x128xf32, #tpu.memory_space<vmem>>) attributes {dimension_semantics = [], scalar_prefetch = 0 : i64, scratch_operands = 0 : i64, tpu.core_type = #tpu.core_type<tc>} {
    %c0 = arith.constant 0 : index
    %0 = memref.load %arg0[%c0] : memref<3xf32, #tpu.memory_space<smem>>
    %c1 = arith.constant 1 : index
    %1 = memref.load %arg0[%c1] : memref<3xf32, #tpu.memory_space<smem>>
    %c2 = arith.constant 2 : index
    %2 = memref.load %arg0[%c2] : memref<3xf32, #tpu.memory_space<smem>>
    %c0_0 = arith.constant 0 : index
    %c0_1 = arith.constant 0 : index
    %3 = vector.load %arg1[%c0_0, %c0_1] : memref<2x48xf32, #tpu.memory_space<vmem>>, vector<2x32xf32>
    %c0_2 = arith.constant 0 : index
    %c32 = arith.constant 32 : index
    %4 = vector.load %arg1[%c0_2, %c32] : memref<2x48xf32, #tpu.memory_space<vmem>>, vector<2x16xf32>
    %c0_3 = arith.constant 0 : index
    %c0_4 = arith.constant 0 : index
    %5 = vector.load %arg2[%c0_3, %c0_4] : memref<1024x128xf32, #tpu.memory_space<vmem>>, vector<16x64xf32>
    %cst = arith.constant dense<0.000000e+00> : vector<2x64xf32>
    %6 = tpu.matmul %4, %5, %cst {dimension_numbers = #tpu.dot_dimension_numbers<[1], [0], [0], [1], [0, 0, 1, 1], [], []>} : vector<2x16xf32>, vector<16x64xf32>, vector<2x64xf32> -> vector<2x64xf32>
    %7 = vector.extract_strided_slice %6 {offsets = [0, 0], sizes = [2, 32], strides = [1, 1]} : vector<2x64xf32> to vector<2x32xf32>
    %8 = vector.extract_strided_slice %6 {offsets = [0, 32], sizes = [2, 32], strides = [1, 1]} : vector<2x64xf32> to vector<2x32xf32>
    %cst_5 = arith.constant 2.000000e+00 : f32
    %9 = vector.broadcast %cst_5 : f32 to vector<2x16xf32>
    %10 = arith.mulf %9, %4 : vector<2x16xf32>
    %c16 = arith.constant 16 : index
    %c0_6 = arith.constant 0 : index
    %11 = vector.load %arg2[%c16, %c0_6] : memref<1024x128xf32, #tpu.memory_space<vmem>>, vector<64x16xf32>
    %cst_7 = arith.constant dense<0.000000e+00> : vector<2x16xf32>
    %12 = tpu.matmul %6, %11, %cst_7 {dimension_numbers = #tpu.dot_dimension_numbers<[1], [0], [0], [1], [0, 0, 1, 1], [], []>} : vector<2x64xf32>, vector<64x16xf32>, vector<2x16xf32> -> vector<2x16xf32>
    %13 = arith.subf %10, %12 : vector<2x16xf32>
    %14 = vector.extract_strided_slice %3 {offsets = [0, 0], sizes = [2, 16], strides = [1, 1]} : vector<2x32xf32> to vector<2x16xf32>
    %15 = vector.extract_strided_slice %3 {offsets = [0, 16], sizes = [2, 16], strides = [1, 1]} : vector<2x32xf32> to vector<2x16xf32>
    %cst_8 = arith.constant 0.000000e+00 : f32
    %16 = vector.broadcast %cst_8 : f32 to vector<2x16xf32>
    %17 = arith.subf %16, %15 : vector<2x16xf32>
    %18 = tpu.concatenate %14, %17 in 1 : vector<2x16xf32>, vector<2x16xf32> -> vector<2x32xf32>
    %19 = vector.extract_strided_slice %18 {offsets = [0, 0], sizes = [2, 16], strides = [1, 1]} : vector<2x32xf32> to vector<2x16xf32>
    %20 = vector.extract_strided_slice %18 {offsets = [0, 16], sizes = [2, 16], strides = [1, 1]} : vector<2x32xf32> to vector<2x16xf32>
    %21 = vector.extract_strided_slice %8 {offsets = [0, 0], sizes = [2, 16], strides = [1, 1]} : vector<2x32xf32> to vector<2x16xf32>
    %22 = vector.extract_strided_slice %8 {offsets = [0, 16], sizes = [2, 16], strides = [1, 1]} : vector<2x32xf32> to vector<2x16xf32>
    %23 = arith.mulf %19, %21 : vector<2x16xf32>
    %24 = arith.mulf %20, %22 : vector<2x16xf32>
    %25 = arith.subf %23, %24 : vector<2x16xf32>
    %26 = arith.mulf %19, %22 : vector<2x16xf32>
    %27 = arith.mulf %20, %21 : vector<2x16xf32>
    %28 = arith.addf %26, %27 : vector<2x16xf32>
    %29 = tpu.concatenate %25, %28 in 1 : vector<2x16xf32>, vector<2x16xf32> -> vector<2x32xf32>
    %30 = vector.broadcast %0 : f32 to vector<2x32xf32>
    %31 = arith.mulf %30, %29 : vector<2x32xf32>
    %32 = arith.addf %7, %31 : vector<2x32xf32>
    %33 = vector.extract_strided_slice %3 {offsets = [0, 0], sizes = [2, 16], strides = [1, 1]} : vector<2x32xf32> to vector<2x16xf32>
    %34 = vector.extract_strided_slice %3 {offsets = [0, 16], sizes = [2, 16], strides = [1, 1]} : vector<2x32xf32> to vector<2x16xf32>
    %35 = vector.extract_strided_slice %32 {offsets = [0, 0], sizes = [2, 16], strides = [1, 1]} : vector<2x32xf32> to vector<2x16xf32>
    %36 = vector.extract_strided_slice %32 {offsets = [0, 16], sizes = [2, 16], strides = [1, 1]} : vector<2x32xf32> to vector<2x16xf32>
    %37 = arith.mulf %33, %35 : vector<2x16xf32>
    %38 = arith.mulf %34, %36 : vector<2x16xf32>
    %39 = arith.subf %37, %38 : vector<2x16xf32>
    %40 = arith.mulf %33, %36 : vector<2x16xf32>
    %41 = arith.mulf %34, %35 : vector<2x16xf32>
    %42 = arith.addf %40, %41 : vector<2x16xf32>
    %43 = tpu.concatenate %39, %42 in 1 : vector<2x16xf32>, vector<2x16xf32> -> vector<2x32xf32>
    %44 = vector.broadcast %0 : f32 to vector<2x32xf32>
    %45 = arith.mulf %44, %43 : vector<2x32xf32>
    %46 = tpu.concatenate %32, %45 in 1 : vector<2x32xf32>, vector<2x32xf32> -> vector<2x64xf32>
    %c16_9 = arith.constant 16 : index
    %c0_10 = arith.constant 0 : index
    %47 = vector.load %arg2[%c16_9, %c0_10] : memref<1024x128xf32, #tpu.memory_space<vmem>>, vector<64x16xf32>
    %cst_11 = arith.constant dense<0.000000e+00> : vector<2x16xf32>
    %48 = tpu.matmul %46, %47, %cst_11 {dimension_numbers = #tpu.dot_dimension_numbers<[1], [0], [0], [1], [0, 0, 1, 1], [], []>} : vector<2x64xf32>, vector<64x16xf32>, vector<2x16xf32> -> vector<2x16xf32>
    %49 = arith.subf %48, %4 : vector<2x16xf32>
    %c304 = arith.constant 304 : index
    %c0_12 = arith.constant 0 : index
    %50 = vector.load %arg2[%c304, %c0_12] : memref<1024x128xf32, #tpu.memory_space<vmem>>, vector<32x2xf32>
    %51 = vector.extract_strided_slice %50 {offsets = [0, 0], sizes = [32, 1], strides = [1, 1]} : vector<32x2xf32> to vector<32x1xf32>
    %52 = vector.extract_strided_slice %50 {offsets = [0, 1], sizes = [32, 1], strides = [1, 1]} : vector<32x2xf32> to vector<32x1xf32>
    %c192 = arith.constant 192 : index
    %c0_13 = arith.constant 0 : index
    %53 = vector.load %arg2[%c192, %c0_13] : memref<1024x128xf32, #tpu.memory_space<vmem>>, vector<32x2xf32>
    %cst_14 = arith.constant dense<0.000000e+00> : vector<32x32xf32>
    %54 = tpu.matmul %53, %32, %cst_14 {dimension_numbers = #tpu.dot_dimension_numbers<[1], [0], [0], [1], [0, 0, 1, 1], [], []>} : vector<32x2xf32>, vector<2x32xf32>, vector<32x32xf32> -> vector<32x32xf32>
    %c272 = arith.constant 272 : index
    %c0_15 = arith.constant 0 : index
    %55 = vector.load %arg2[%c272, %c0_15] : memref<1024x128xf32, #tpu.memory_space<vmem>>, vector<32x32xf32>
    %56 = arith.mulf %54, %55 : vector<32x32xf32>
    %c240 = arith.constant 240 : index
    %c0_16 = arith.constant 0 : index
    %57 = vector.load %arg2[%c240, %c0_16] : memref<1024x128xf32, #tpu.memory_space<vmem>>, vector<32x2xf32>
    %cst_17 = arith.constant dense<0.000000e+00> : vector<32x2xf32>
    %58 = tpu.matmul %56, %57, %cst_17 {dimension_numbers = #tpu.dot_dimension_numbers<[1], [0], [0], [1], [0, 0, 1, 1], [], []>} : vector<32x32xf32>, vector<32x2xf32>, vector<32x2xf32> -> vector<32x2xf32>
    %c336 = arith.constant 336 : index
    %c0_18 = arith.constant 0 : index
    %59 = vector.load %arg2[%c336, %c0_18] : memref<1024x128xf32, #tpu.memory_space<vmem>>, vector<6x16xf32>
    %c344 = arith.constant 344 : index
    %c0_19 = arith.constant 0 : index
    %60 = vector.load %arg2[%c344, %c0_19] : memref<1024x128xf32, #tpu.memory_space<vmem>>, vector<1x16xf32>
    %c1_i32 = arith.constant 1 : i32
    %61 = tpu.dynamic_rotate %58 by %c1_i32 dim 0 : vector<32x2xf32>, i32 -> vector<32x2xf32>
    %62 = vector.broadcast %51 : vector<32x1xf32> to vector<32x2xf32>
    %63 = arith.mulf %61, %62 : vector<32x2xf32>
    %c31_i32 = arith.constant 31 : i32
    %64 = tpu.dynamic_rotate %58 by %c31_i32 dim 0 : vector<32x2xf32>, i32 -> vector<32x2xf32>
    %65 = vector.broadcast %52 : vector<32x1xf32> to vector<32x2xf32>
    %66 = arith.mulf %64, %65 : vector<32x2xf32>
    %67 = tpu.concatenate %63, %58, %66 in 1 : vector<32x2xf32>, vector<32x2xf32>, vector<32x2xf32> -> vector<32x6xf32>
    %cst_20 = arith.constant dense<0.000000e+00> : vector<32x16xf32>
    %68 = tpu.matmul %67, %59, %cst_20 {dimension_numbers = #tpu.dot_dimension_numbers<[1], [0], [0], [1], [0, 0, 1, 1], [], []>} : vector<32x6xf32>, vector<6x16xf32>, vector<32x16xf32> -> vector<32x16xf32>
    %69 = vector.broadcast %60 : vector<1x16xf32> to vector<32x16xf32>
    %70 = arith.addf %68, %69 : vector<32x16xf32>
    %c352 = arith.constant 352 : index
    %c0_21 = arith.constant 0 : index
    %71 = vector.load %arg2[%c352, %c0_21] : memref<1024x128xf32, #tpu.memory_space<vmem>>, vector<48x16xf32>
    %c400 = arith.constant 400 : index
    %c0_22 = arith.constant 0 : index
    %72 = vector.load %arg2[%c400, %c0_22] : memref<1024x128xf32, #tpu.memory_space<vmem>>, vector<1x16xf32>
    %c1_i32_23 = arith.constant 1 : i32
    %73 = tpu.dynamic_rotate %70 by %c1_i32_23 dim 0 : vector<32x16xf32>, i32 -> vector<32x16xf32>
    %74 = vector.broadcast %51 : vector<32x1xf32> to vector<32x16xf32>
    %75 = arith.mulf %73, %74 : vector<32x16xf32>
    %c31_i32_24 = arith.constant 31 : i32
    %76 = tpu.dynamic_rotate %70 by %c31_i32_24 dim 0 : vector<32x16xf32>, i32 -> vector<32x16xf32>
    %77 = vector.broadcast %52 : vector<32x1xf32> to vector<32x16xf32>
    %78 = arith.mulf %76, %77 : vector<32x16xf32>
    %79 = tpu.concatenate %75, %70, %78 in 1 : vector<32x16xf32>, vector<32x16xf32>, vector<32x16xf32> -> vector<32x48xf32>
    %cst_25 = arith.constant dense<0.000000e+00> : vector<32x16xf32>
    %80 = tpu.matmul %79, %71, %cst_25 {dimension_numbers = #tpu.dot_dimension_numbers<[1], [0], [0], [1], [0, 0, 1, 1], [], []>} : vector<32x48xf32>, vector<48x16xf32>, vector<32x16xf32> -> vector<32x16xf32>
    %81 = vector.broadcast %72 : vector<1x16xf32> to vector<32x16xf32>
    %82 = arith.addf %80, %81 : vector<32x16xf32>
    %cst_26 = arith.constant 0.000000e+00 : f32
    %83 = vector.broadcast %cst_26 : f32 to vector<32x16xf32>
    %84 = arith.maximumf %82, %83 : vector<32x16xf32>
    %c408 = arith.constant 408 : index
    %c0_27 = arith.constant 0 : index
    %85 = vector.load %arg2[%c408, %c0_27] : memref<1024x128xf32, #tpu.memory_space<vmem>>, vector<48x16xf32>
    %c456 = arith.constant 456 : index
    %c0_28 = arith.constant 0 : index
    %86 = vector.load %arg2[%c456, %c0_28] : memref<1024x128xf32, #tpu.memory_space<vmem>>, vector<1x16xf32>
    %c1_i32_29 = arith.constant 1 : i32
    %87 = tpu.dynamic_rotate %84 by %c1_i32_29 dim 0 : vector<32x16xf32>, i32 -> vector<32x16xf32>
    %88 = vector.broadcast %51 : vector<32x1xf32> to vector<32x16xf32>
    %89 = arith.mulf %87, %88 : vector<32x16xf32>
    %c31_i32_30 = arith.constant 31 : i32
    %90 = tpu.dynamic_rotate %84 by %c31_i32_30 dim 0 : vector<32x16xf32>, i32 -> vector<32x16xf32>
    %91 = vector.broadcast %52 : vector<32x1xf32> to vector<32x16xf32>
    %92 = arith.mulf %90, %91 : vector<32x16xf32>
    %93 = tpu.concatenate %89, %84, %92 in 1 : vector<32x16xf32>, vector<32x16xf32>, vector<32x16xf32> -> vector<32x48xf32>
    %cst_31 = arith.constant dense<0.000000e+00> : vector<32x16xf32>
    %94 = tpu.matmul %93, %85, %cst_31 {dimension_numbers = #tpu.dot_dimension_numbers<[1], [0], [0], [1], [0, 0, 1, 1], [], []>} : vector<32x48xf32>, vector<48x16xf32>, vector<32x16xf32> -> vector<32x16xf32>
    %95 = vector.broadcast %86 : vector<1x16xf32> to vector<32x16xf32>
    %96 = arith.addf %94, %95 : vector<32x16xf32>
    %97 = vector.extract_strided_slice %96 {offsets = [0, 0], sizes = [32, 8], strides = [1, 1]} : vector<32x16xf32> to vector<32x8xf32>
    %98 = vector.extract_strided_slice %96 {offsets = [0, 8], sizes = [32, 8], strides = [1, 1]} : vector<32x16xf32> to vector<32x8xf32>
    %99 = arith.mulf %97, %97 : vector<32x8xf32>
    %100 = arith.mulf %98, %98 : vector<32x8xf32>
    %101 = arith.addf %99, %100 : vector<32x8xf32>
    %102 = math.sqrt %101 : vector<32x8xf32>
    %c224 = arith.constant 224 : index
    %c0_32 = arith.constant 0 : index
    %103 = vector.load %arg2[%c224, %c0_32] : memref<1024x128xf32, #tpu.memory_space<vmem>>, vector<2x32xf32>
    %cst_33 = arith.constant dense<0.000000e+00> : vector<2x8xf32>
    %104 = tpu.matmul %103, %102, %cst_33 {dimension_numbers = #tpu.dot_dimension_numbers<[1], [0], [0], [1], [0, 0, 1, 1], [], []>} : vector<2x32xf32>, vector<32x8xf32>, vector<2x8xf32> -> vector<2x8xf32>
    %cst_34 = arith.constant 6.250000e-02 : f32
    %105 = vector.broadcast %cst_34 : f32 to vector<2x8xf32>
    %106 = arith.mulf %104, %105 : vector<2x8xf32>
    %c632 = arith.constant 632 : index
    %c0_35 = arith.constant 0 : index
    %107 = vector.load %arg2[%c632, %c0_35] : memref<1024x128xf32, #tpu.memory_space<vmem>>, vector<8x8xf32>
    %cst_36 = arith.constant dense<0.000000e+00> : vector<2x8xf32>
    %108 = tpu.matmul %106, %107, %cst_36 {dimension_numbers = #tpu.dot_dimension_numbers<[1], [0], [0], [1], [0, 0, 1, 1], [], []>} : vector<2x8xf32>, vector<8x8xf32>, vector<2x8xf32> -> vector<2x8xf32>
    %c640 = arith.constant 640 : index
    %c0_37 = arith.constant 0 : index
    %109 = vector.load %arg2[%c640, %c0_37] : memref<1024x128xf32, #tpu.memory_space<vmem>>, vector<1x8xf32>
    %110 = vector.broadcast %109 : vector<1x8xf32> to vector<2x8xf32>
    %111 = arith.addf %108, %110 : vector<2x8xf32>
    %cst_38 = arith.constant dense<0.000000e+00> : vector<8xf32>
    %112 = vector.multi_reduction <add>, %111, %cst_38 [0] : vector<2x8xf32> to vector<8xf32>
    %113 = vector.shape_cast %112 : vector<8xf32> to vector<1x8xf32>
    %cst_39 = arith.constant 2.000000e+00 : f32
    %114 = vector.broadcast %cst_39 : f32 to vector<1x8xf32>
    %115 = arith.divf %113, %114 : vector<1x8xf32>
    %116 = vector.broadcast %115 : vector<1x8xf32> to vector<2x8xf32>
    %117 = arith.subf %111, %116 : vector<2x8xf32>
    %118 = arith.mulf %117, %117 : vector<2x8xf32>
    %cst_40 = arith.constant dense<0.000000e+00> : vector<8xf32>
    %119 = vector.multi_reduction <add>, %118, %cst_40 [0] : vector<2x8xf32> to vector<8xf32>
    %120 = vector.shape_cast %119 : vector<8xf32> to vector<1x8xf32>
    %cst_41 = arith.constant 2.000000e+00 : f32
    %121 = vector.broadcast %cst_41 : f32 to vector<1x8xf32>
    %122 = arith.divf %120, %121 : vector<1x8xf32>
    %c648 = arith.constant 648 : index
    %c0_42 = arith.constant 0 : index
    %123 = vector.load %arg2[%c648, %c0_42] : memref<1024x128xf32, #tpu.memory_space<vmem>>, vector<1x8xf32>
    %124 = vector.broadcast %115 : vector<1x8xf32> to vector<2x8xf32>
    %125 = arith.subf %111, %124 : vector<2x8xf32>
    %126 = vector.broadcast %123 : vector<1x8xf32> to vector<2x8xf32>
    %127 = arith.mulf %126, %125 : vector<2x8xf32>
    %cst_43 = arith.constant 9.99999974E-6 : f32
    %128 = vector.broadcast %cst_43 : f32 to vector<1x8xf32>
    %129 = arith.addf %122, %128 : vector<1x8xf32>
    %130 = math.rsqrt %129 : vector<1x8xf32>
    %131 = vector.broadcast %130 : vector<1x8xf32> to vector<2x8xf32>
    %132 = arith.mulf %127, %131 : vector<2x8xf32>
    %c656 = arith.constant 656 : index
    %c0_44 = arith.constant 0 : index
    %133 = vector.load %arg2[%c656, %c0_44] : memref<1024x128xf32, #tpu.memory_space<vmem>>, vector<1x8xf32>
    %134 = vector.broadcast %133 : vector<1x8xf32> to vector<2x8xf32>
    %135 = arith.addf %132, %134 : vector<2x8xf32>
    %cst_45 = arith.constant 0.000000e+00 : f32
    %136 = vector.broadcast %cst_45 : f32 to vector<2x8xf32>
    %137 = arith.maximumf %135, %136 : vector<2x8xf32>
    %c664 = arith.constant 664 : index
    %c0_46 = arith.constant 0 : index
    %138 = vector.load %arg2[%c664, %c0_46] : memref<1024x128xf32, #tpu.memory_space<vmem>>, vector<8x8xf32>
    %cst_47 = arith.constant dense<0.000000e+00> : vector<2x8xf32>
    %139 = tpu.matmul %137, %138, %cst_47 {dimension_numbers = #tpu.dot_dimension_numbers<[1], [0], [0], [1], [0, 0, 1, 1], [], []>} : vector<2x8xf32>, vector<8x8xf32>, vector<2x8xf32> -> vector<2x8xf32>
    %c672 = arith.constant 672 : index
    %c0_48 = arith.constant 0 : index
    %140 = vector.load %arg2[%c672, %c0_48] : memref<1024x128xf32, #tpu.memory_space<vmem>>, vector<1x8xf32>
    %141 = vector.broadcast %140 : vector<1x8xf32> to vector<2x8xf32>
    %142 = arith.addf %139, %141 : vector<2x8xf32>
    %143 = arith.negf %142 : vector<2x8xf32>
    %144 = math.exp %143 : vector<2x8xf32>
    %cst_49 = arith.constant 1.000000e+00 : f32
    %145 = vector.broadcast %cst_49 : f32 to vector<2x8xf32>
    %146 = arith.addf %145, %144 : vector<2x8xf32>
    %147 = arith.divf %145, %146 : vector<2x8xf32>
    %c192_50 = arith.constant 192 : index
    %c0_51 = arith.constant 0 : index
    %148 = vector.load %arg2[%c192_50, %c0_51] : memref<1024x128xf32, #tpu.memory_space<vmem>>, vector<32x2xf32>
    %149 = arith.mulf %147, %106 : vector<2x8xf32>
    %cst_52 = arith.constant dense<0.000000e+00> : vector<32x8xf32>
    %150 = tpu.matmul %148, %149, %cst_52 {dimension_numbers = #tpu.dot_dimension_numbers<[1], [0], [0], [1], [0, 0, 1, 1], [], []>} : vector<32x2xf32>, vector<2x8xf32>, vector<32x8xf32> -> vector<32x8xf32>
    %151 = arith.subf %97, %150 : vector<32x8xf32>
    %152 = arith.mulf %151, %151 : vector<32x8xf32>
    %153 = arith.mulf %98, %98 : vector<32x8xf32>
    %154 = arith.addf %152, %153 : vector<32x8xf32>
    %cst_53 = arith.constant 1.000000e-24 : f32
    %155 = vector.broadcast %cst_53 : f32 to vector<32x8xf32>
    %156 = arith.addf %154, %155 : vector<32x8xf32>
    %157 = math.rsqrt %156 : vector<32x8xf32>
    %158 = vector.broadcast %1 : f32 to vector<32x8xf32>
    %159 = arith.mulf %158, %157 : vector<32x8xf32>
    %cst_54 = arith.constant 1.000000e+00 : f32
    %160 = vector.broadcast %cst_54 : f32 to vector<32x8xf32>
    %161 = arith.subf %160, %159 : vector<32x8xf32>
    %cst_55 = arith.constant 0.000000e+00 : f32
    %162 = vector.broadcast %cst_55 : f32 to vector<32x8xf32>
    %163 = arith.maximumf %161, %162 : vector<32x8xf32>
    %164 = arith.mulf %163, %151 : vector<32x8xf32>
    %165 = arith.mulf %163, %98 : vector<32x8xf32>
    %166 = tpu.concatenate %164, %165 in 1 : vector<32x8xf32>, vector<32x8xf32> -> vector<32x16xf32>
    %c464 = arith.constant 464 : index
    %c0_56 = arith.constant 0 : index
    %167 = vector.load %arg2[%c464, %c0_56] : memref<1024x128xf32, #tpu.memory_space<vmem>>, vector<48x16xf32>
    %c512 = arith.constant 512 : index
    %c0_57 = arith.constant 0 : index
    %168 = vector.load %arg2[%c512, %c0_57] : memref<1024x128xf32, #tpu.memory_space<vmem>>, vector<1x16xf32>
    %c1_i32_58 = arith.constant 1 : i32
    %169 = tpu.dynamic_rotate %166 by %c1_i32_58 dim 0 : vector<32x16xf32>, i32 -> vector<32x16xf32>
    %170 = vector.broadcast %51 : vector<32x1xf32> to vector<32x16xf32>
    %171 = arith.mulf %169, %170 : vector<32x16xf32>
    %c31_i32_59 = arith.constant 31 : i32
    %172 = tpu.dynamic_rotate %166 by %c31_i32_59 dim 0 : vector<32x16xf32>, i32 -> vector<32x16xf32>
    %173 = vector.broadcast %52 : vector<32x1xf32> to vector<32x16xf32>
    %174 = arith.mulf %172, %173 : vector<32x16xf32>
    %175 = tpu.concatenate %171, %166, %174 in 1 : vector<32x16xf32>, vector<32x16xf32>, vector<32x16xf32> -> vector<32x48xf32>
    %cst_60 = arith.constant dense<0.000000e+00> : vector<32x16xf32>
    %176 = tpu.matmul %175, %167, %cst_60 {dimension_numbers = #tpu.dot_dimension_numbers<[1], [0], [0], [1], [0, 0, 1, 1], [], []>} : vector<32x48xf32>, vector<48x16xf32>, vector<32x16xf32> -> vector<32x16xf32>
    %177 = vector.broadcast %168 : vector<1x16xf32> to vector<32x16xf32>
    %178 = arith.addf %176, %177 : vector<32x16xf32>
    %cst_61 = arith.constant 0.000000e+00 : f32
    %179 = vector.broadcast %cst_61 : f32 to vector<32x16xf32>
    %180 = arith.maximumf %178, %179 : vector<32x16xf32>
    %c520 = arith.constant 520 : index
    %c0_62 = arith.constant 0 : index
    %181 = vector.load %arg2[%c520, %c0_62] : memref<1024x128xf32, #tpu.memory_space<vmem>>, vector<48x16xf32>
    %c568 = arith.constant 568 : index
    %c0_63 = arith.constant 0 : index
    %182 = vector.load %arg2[%c568, %c0_63] : memref<1024x128xf32, #tpu.memory_space<vmem>>, vector<1x16xf32>
    %c1_i32_64 = arith.constant 1 : i32
    %183 = tpu.dynamic_rotate %180 by %c1_i32_64 dim 0 : vector<32x16xf32>, i32 -> vector<32x16xf32>
    %184 = vector.broadcast %51 : vector<32x1xf32> to vector<32x16xf32>
    %185 = arith.mulf %183, %184 : vector<32x16xf32>
    %c31_i32_65 = arith.constant 31 : i32
    %186 = tpu.dynamic_rotate %180 by %c31_i32_65 dim 0 : vector<32x16xf32>, i32 -> vector<32x16xf32>
    %187 = vector.broadcast %52 : vector<32x1xf32> to vector<32x16xf32>
    %188 = arith.mulf %186, %187 : vector<32x16xf32>
    %189 = tpu.concatenate %185, %180, %188 in 1 : vector<32x16xf32>, vector<32x16xf32>, vector<32x16xf32> -> vector<32x48xf32>
    %cst_66 = arith.constant dense<0.000000e+00> : vector<32x16xf32>
    %190 = tpu.matmul %189, %181, %cst_66 {dimension_numbers = #tpu.dot_dimension_numbers<[1], [0], [0], [1], [0, 0, 1, 1], [], []>} : vector<32x48xf32>, vector<48x16xf32>, vector<32x16xf32> -> vector<32x16xf32>
    %191 = vector.broadcast %182 : vector<1x16xf32> to vector<32x16xf32>
    %192 = arith.addf %190, %191 : vector<32x16xf32>
    %c576 = arith.constant 576 : index
    %c0_67 = arith.constant 0 : index
    %193 = vector.load %arg2[%c576, %c0_67] : memref<1024x128xf32, #tpu.memory_space<vmem>>, vector<48x2xf32>
    %c624 = arith.constant 624 : index
    %c0_68 = arith.constant 0 : index
    %194 = vector.load %arg2[%c624, %c0_68] : memref<1024x128xf32, #tpu.memory_space<vmem>>, vector<1x2xf32>
    %c1_i32_69 = arith.constant 1 : i32
    %195 = tpu.dynamic_rotate %192 by %c1_i32_69 dim 0 : vector<32x16xf32>, i32 -> vector<32x16xf32>
    %196 = vector.broadcast %51 : vector<32x1xf32> to vector<32x16xf32>
    %197 = arith.mulf %195, %196 : vector<32x16xf32>
    %c31_i32_70 = arith.constant 31 : i32
    %198 = tpu.dynamic_rotate %192 by %c31_i32_70 dim 0 : vector<32x16xf32>, i32 -> vector<32x16xf32>
    %199 = vector.broadcast %52 : vector<32x1xf32> to vector<32x16xf32>
    %200 = arith.mulf %198, %199 : vector<32x16xf32>
    %201 = tpu.concatenate %197, %192, %200 in 1 : vector<32x16xf32>, vector<32x16xf32>, vector<32x16xf32> -> vector<32x48xf32>
    %cst_71 = arith.constant dense<0.000000e+00> : vector<32x2xf32>
    %202 = tpu.matmul %201, %193, %cst_71 {dimension_numbers = #tpu.dot_dimension_numbers<[1], [0], [0], [1], [0, 0, 1, 1], [], []>} : vector<32x48xf32>, vector<48x2xf32>, vector<32x2xf32> -> vector<32x2xf32>
    %203 = vector.broadcast %194 : vector<1x2xf32> to vector<32x2xf32>
    %204 = arith.addf %202, %203 : vector<32x2xf32>
    %c224_72 = arith.constant 224 : index
    %c0_73 = arith.constant 0 : index
    %205 = vector.load %arg2[%c224_72, %c0_73] : memref<1024x128xf32, #tpu.memory_space<vmem>>, vector<2x32xf32>
    %c232 = arith.constant 232 : index
    %c0_74 = arith.constant 0 : index
    %206 = vector.load %arg2[%c232, %c0_74] : memref<1024x128xf32, #tpu.memory_space<vmem>>, vector<2x32xf32>
    %cst_75 = arith.constant dense<0.000000e+00> : vector<32x32xf32>
    %207 = tpu.matmul %204, %206, %cst_75 {dimension_numbers = #tpu.dot_dimension_numbers<[1], [0], [0], [1], [0, 0, 1, 1], [], []>} : vector<32x2xf32>, vector<2x32xf32>, vector<32x32xf32> -> vector<32x32xf32>
    %c272_76 = arith.constant 272 : index
    %c0_77 = arith.constant 0 : index
    %208 = vector.load %arg2[%c272_76, %c0_77] : memref<1024x128xf32, #tpu.memory_space<vmem>>, vector<32x32xf32>
    %209 = arith.mulf %207, %208 : vector<32x32xf32>
    %cst_78 = arith.constant dense<0.000000e+00> : vector<2x32xf32>
    %210 = tpu.matmul %205, %209, %cst_78 {dimension_numbers = #tpu.dot_dimension_numbers<[1], [0], [0], [1], [0, 0, 1, 1], [], []>} : vector<2x32xf32>, vector<32x32xf32>, vector<2x32xf32> -> vector<2x32xf32>
    %211 = arith.addf %32, %210 : vector<2x32xf32>
    %c112 = arith.constant 112 : index
    %c0_79 = arith.constant 0 : index
    %212 = vector.load %arg2[%c112, %c0_79] : memref<1024x128xf32, #tpu.memory_space<vmem>>, vector<32x16xf32>
    %cst_80 = arith.constant dense<0.000000e+00> : vector<2x16xf32>
    %213 = tpu.matmul %211, %212, %cst_80 {dimension_numbers = #tpu.dot_dimension_numbers<[1], [0], [0], [1], [0, 0, 1, 1], [], []>} : vector<2x32xf32>, vector<32x16xf32>, vector<2x16xf32> -> vector<2x16xf32>
    %214 = arith.subf %4, %213 : vector<2x16xf32>
    %c176 = arith.constant 176 : index
    %c0_81 = arith.constant 0 : index
    %215 = vector.load %arg2[%c176, %c0_81] : memref<1024x128xf32, #tpu.memory_space<vmem>>, vector<16x32xf32>
    %cst_82 = arith.constant dense<0.000000e+00> : vector<2x32xf32>
    %216 = tpu.matmul %214, %215, %cst_82 {dimension_numbers = #tpu.dot_dimension_numbers<[1], [0], [0], [1], [0, 0, 1, 1], [], []>} : vector<2x16xf32>, vector<16x32xf32>, vector<2x32xf32> -> vector<2x32xf32>
    %c144 = arith.constant 144 : index
    %c0_83 = arith.constant 0 : index
    %217 = vector.load %arg2[%c144, %c0_83] : memref<1024x128xf32, #tpu.memory_space<vmem>>, vector<32x16xf32>
    %cst_84 = arith.constant dense<0.000000e+00> : vector<2x16xf32>
    %218 = tpu.matmul %216, %217, %cst_84 {dimension_numbers = #tpu.dot_dimension_numbers<[1], [0], [0], [1], [0, 0, 1, 1], [], []>} : vector<2x32xf32>, vector<32x16xf32>, vector<2x16xf32> -> vector<2x16xf32>
    %219 = arith.subf %214, %218 : vector<2x16xf32>
    %220 = vector.extract_strided_slice %211 {offsets = [0, 0], sizes = [2, 16], strides = [1, 1]} : vector<2x32xf32> to vector<2x16xf32>
    %221 = vector.extract_strided_slice %211 {offsets = [0, 16], sizes = [2, 16], strides = [1, 1]} : vector<2x32xf32> to vector<2x16xf32>
    %cst_85 = arith.constant 0.000000e+00 : f32
    %222 = vector.broadcast %cst_85 : f32 to vector<2x16xf32>
    %223 = arith.subf %222, %221 : vector<2x16xf32>
    %224 = tpu.concatenate %220, %223 in 1 : vector<2x16xf32>, vector<2x16xf32> -> vector<2x32xf32>
    %225 = vector.extract_strided_slice %224 {offsets = [0, 0], sizes = [2, 16], strides = [1, 1]} : vector<2x32xf32> to vector<2x16xf32>
    %226 = vector.extract_strided_slice %224 {offsets = [0, 16], sizes = [2, 16], strides = [1, 1]} : vector<2x32xf32> to vector<2x16xf32>
    %227 = vector.extract_strided_slice %216 {offsets = [0, 0], sizes = [2, 16], strides = [1, 1]} : vector<2x32xf32> to vector<2x16xf32>
    %228 = vector.extract_strided_slice %216 {offsets = [0, 16], sizes = [2, 16], strides = [1, 1]} : vector<2x32xf32> to vector<2x16xf32>
    %229 = arith.mulf %225, %227 : vector<2x16xf32>
    %230 = arith.mulf %226, %228 : vector<2x16xf32>
    %231 = arith.subf %229, %230 : vector<2x16xf32>
    %232 = arith.mulf %225, %228 : vector<2x16xf32>
    %233 = arith.mulf %226, %227 : vector<2x16xf32>
    %234 = arith.addf %232, %233 : vector<2x16xf32>
    %235 = tpu.concatenate %231, %234 in 1 : vector<2x16xf32>, vector<2x16xf32> -> vector<2x32xf32>
    %236 = vector.broadcast %0 : f32 to vector<2x32xf32>
    %237 = arith.mulf %236, %235 : vector<2x32xf32>
    %c304_86 = arith.constant 304 : index
    %c0_87 = arith.constant 0 : index
    %238 = vector.load %arg2[%c304_86, %c0_87] : memref<1024x128xf32, #tpu.memory_space<vmem>>, vector<32x2xf32>
    %239 = vector.extract_strided_slice %238 {offsets = [0, 0], sizes = [32, 1], strides = [1, 1]} : vector<32x2xf32> to vector<32x1xf32>
    %240 = vector.extract_strided_slice %238 {offsets = [0, 1], sizes = [32, 1], strides = [1, 1]} : vector<32x2xf32> to vector<32x1xf32>
    %c192_88 = arith.constant 192 : index
    %c0_89 = arith.constant 0 : index
    %241 = vector.load %arg2[%c192_88, %c0_89] : memref<1024x128xf32, #tpu.memory_space<vmem>>, vector<32x2xf32>
    %cst_90 = arith.constant dense<0.000000e+00> : vector<32x32xf32>
    %242 = tpu.matmul %241, %237, %cst_90 {dimension_numbers = #tpu.dot_dimension_numbers<[1], [0], [0], [1], [0, 0, 1, 1], [], []>} : vector<32x2xf32>, vector<2x32xf32>, vector<32x32xf32> -> vector<32x32xf32>
    %c272_91 = arith.constant 272 : index
    %c0_92 = arith.constant 0 : index
    %243 = vector.load %arg2[%c272_91, %c0_92] : memref<1024x128xf32, #tpu.memory_space<vmem>>, vector<32x32xf32>
    %244 = arith.mulf %242, %243 : vector<32x32xf32>
    %c240_93 = arith.constant 240 : index
    %c0_94 = arith.constant 0 : index
    %245 = vector.load %arg2[%c240_93, %c0_94] : memref<1024x128xf32, #tpu.memory_space<vmem>>, vector<32x2xf32>
    %cst_95 = arith.constant dense<0.000000e+00> : vector<32x2xf32>
    %246 = tpu.matmul %244, %245, %cst_95 {dimension_numbers = #tpu.dot_dimension_numbers<[1], [0], [0], [1], [0, 0, 1, 1], [], []>} : vector<32x32xf32>, vector<32x2xf32>, vector<32x2xf32> -> vector<32x2xf32>
    %c680 = arith.constant 680 : index
    %c0_96 = arith.constant 0 : index
    %247 = vector.load %arg2[%c680, %c0_96] : memref<1024x128xf32, #tpu.memory_space<vmem>>, vector<6x16xf32>
    %c688 = arith.constant 688 : index
    %c0_97 = arith.constant 0 : index
    %248 = vector.load %arg2[%c688, %c0_97] : memref<1024x128xf32, #tpu.memory_space<vmem>>, vector<1x16xf32>
    %c1_i32_98 = arith.constant 1 : i32
    %249 = tpu.dynamic_rotate %246 by %c1_i32_98 dim 0 : vector<32x2xf32>, i32 -> vector<32x2xf32>
    %250 = vector.broadcast %239 : vector<32x1xf32> to vector<32x2xf32>
    %251 = arith.mulf %249, %250 : vector<32x2xf32>
    %c31_i32_99 = arith.constant 31 : i32
    %252 = tpu.dynamic_rotate %246 by %c31_i32_99 dim 0 : vector<32x2xf32>, i32 -> vector<32x2xf32>
    %253 = vector.broadcast %240 : vector<32x1xf32> to vector<32x2xf32>
    %254 = arith.mulf %252, %253 : vector<32x2xf32>
    %255 = tpu.concatenate %251, %246, %254 in 1 : vector<32x2xf32>, vector<32x2xf32>, vector<32x2xf32> -> vector<32x6xf32>
    %cst_100 = arith.constant dense<0.000000e+00> : vector<32x16xf32>
    %256 = tpu.matmul %255, %247, %cst_100 {dimension_numbers = #tpu.dot_dimension_numbers<[1], [0], [0], [1], [0, 0, 1, 1], [], []>} : vector<32x6xf32>, vector<6x16xf32>, vector<32x16xf32> -> vector<32x16xf32>
    %257 = vector.broadcast %248 : vector<1x16xf32> to vector<32x16xf32>
    %258 = arith.addf %256, %257 : vector<32x16xf32>
    %c696 = arith.constant 696 : index
    %c0_101 = arith.constant 0 : index
    %259 = vector.load %arg2[%c696, %c0_101] : memref<1024x128xf32, #tpu.memory_space<vmem>>, vector<48x16xf32>
    %c744 = arith.constant 744 : index
    %c0_102 = arith.constant 0 : index
    %260 = vector.load %arg2[%c744, %c0_102] : memref<1024x128xf32, #tpu.memory_space<vmem>>, vector<1x16xf32>
    %c1_i32_103 = arith.constant 1 : i32
    %261 = tpu.dynamic_rotate %258 by %c1_i32_103 dim 0 : vector<32x16xf32>, i32 -> vector<32x16xf32>
    %262 = vector.broadcast %239 : vector<32x1xf32> to vector<32x16xf32>
    %263 = arith.mulf %261, %262 : vector<32x16xf32>
    %c31_i32_104 = arith.constant 31 : i32
    %264 = tpu.dynamic_rotate %258 by %c31_i32_104 dim 0 : vector<32x16xf32>, i32 -> vector<32x16xf32>
    %265 = vector.broadcast %240 : vector<32x1xf32> to vector<32x16xf32>
    %266 = arith.mulf %264, %265 : vector<32x16xf32>
    %267 = tpu.concatenate %263, %258, %266 in 1 : vector<32x16xf32>, vector<32x16xf32>, vector<32x16xf32> -> vector<32x48xf32>
    %cst_105 = arith.constant dense<0.000000e+00> : vector<32x16xf32>
    %268 = tpu.matmul %267, %259, %cst_105 {dimension_numbers = #tpu.dot_dimension_numbers<[1], [0], [0], [1], [0, 0, 1, 1], [], []>} : vector<32x48xf32>, vector<48x16xf32>, vector<32x16xf32> -> vector<32x16xf32>
    %269 = vector.broadcast %260 : vector<1x16xf32> to vector<32x16xf32>
    %270 = arith.addf %268, %269 : vector<32x16xf32>
    %cst_106 = arith.constant 0.000000e+00 : f32
    %271 = vector.broadcast %cst_106 : f32 to vector<32x16xf32>
    %272 = arith.maximumf %270, %271 : vector<32x16xf32>
    %c752 = arith.constant 752 : index
    %c0_107 = arith.constant 0 : index
    %273 = vector.load %arg2[%c752, %c0_107] : memref<1024x128xf32, #tpu.memory_space<vmem>>, vector<48x16xf32>
    %c800 = arith.constant 800 : index
    %c0_108 = arith.constant 0 : index
    %274 = vector.load %arg2[%c800, %c0_108] : memref<1024x128xf32, #tpu.memory_space<vmem>>, vector<1x16xf32>
    %c1_i32_109 = arith.constant 1 : i32
    %275 = tpu.dynamic_rotate %272 by %c1_i32_109 dim 0 : vector<32x16xf32>, i32 -> vector<32x16xf32>
    %276 = vector.broadcast %239 : vector<32x1xf32> to vector<32x16xf32>
    %277 = arith.mulf %275, %276 : vector<32x16xf32>
    %c31_i32_110 = arith.constant 31 : i32
    %278 = tpu.dynamic_rotate %272 by %c31_i32_110 dim 0 : vector<32x16xf32>, i32 -> vector<32x16xf32>
    %279 = vector.broadcast %240 : vector<32x1xf32> to vector<32x16xf32>
    %280 = arith.mulf %278, %279 : vector<32x16xf32>
    %281 = tpu.concatenate %277, %272, %280 in 1 : vector<32x16xf32>, vector<32x16xf32>, vector<32x16xf32> -> vector<32x48xf32>
    %cst_111 = arith.constant dense<0.000000e+00> : vector<32x16xf32>
    %282 = tpu.matmul %281, %273, %cst_111 {dimension_numbers = #tpu.dot_dimension_numbers<[1], [0], [0], [1], [0, 0, 1, 1], [], []>} : vector<32x48xf32>, vector<48x16xf32>, vector<32x16xf32> -> vector<32x16xf32>
    %283 = vector.broadcast %274 : vector<1x16xf32> to vector<32x16xf32>
    %284 = arith.addf %282, %283 : vector<32x16xf32>
    %285 = vector.extract_strided_slice %284 {offsets = [0, 0], sizes = [32, 8], strides = [1, 1]} : vector<32x16xf32> to vector<32x8xf32>
    %286 = vector.extract_strided_slice %284 {offsets = [0, 8], sizes = [32, 8], strides = [1, 1]} : vector<32x16xf32> to vector<32x8xf32>
    %c224_112 = arith.constant 224 : index
    %c0_113 = arith.constant 0 : index
    %287 = vector.load %arg2[%c224_112, %c0_113] : memref<1024x128xf32, #tpu.memory_space<vmem>>, vector<2x32xf32>
    %cst_114 = arith.constant dense<0.000000e+00> : vector<2x8xf32>
    %288 = tpu.matmul %287, %285, %cst_114 {dimension_numbers = #tpu.dot_dimension_numbers<[1], [0], [0], [1], [0, 0, 1, 1], [], []>} : vector<2x32xf32>, vector<32x8xf32>, vector<2x8xf32> -> vector<2x8xf32>
    %cst_115 = arith.constant 6.250000e-02 : f32
    %289 = vector.broadcast %cst_115 : f32 to vector<2x8xf32>
    %290 = arith.mulf %288, %289 : vector<2x8xf32>
    %c976 = arith.constant 976 : index
    %c0_116 = arith.constant 0 : index
    %291 = vector.load %arg2[%c976, %c0_116] : memref<1024x128xf32, #tpu.memory_space<vmem>>, vector<8x8xf32>
    %cst_117 = arith.constant dense<0.000000e+00> : vector<2x8xf32>
    %292 = tpu.matmul %290, %291, %cst_117 {dimension_numbers = #tpu.dot_dimension_numbers<[1], [0], [0], [1], [0, 0, 1, 1], [], []>} : vector<2x8xf32>, vector<8x8xf32>, vector<2x8xf32> -> vector<2x8xf32>
    %c984 = arith.constant 984 : index
    %c0_118 = arith.constant 0 : index
    %293 = vector.load %arg2[%c984, %c0_118] : memref<1024x128xf32, #tpu.memory_space<vmem>>, vector<1x8xf32>
    %294 = vector.broadcast %293 : vector<1x8xf32> to vector<2x8xf32>
    %295 = arith.addf %292, %294 : vector<2x8xf32>
    %cst_119 = arith.constant dense<0.000000e+00> : vector<8xf32>
    %296 = vector.multi_reduction <add>, %295, %cst_119 [0] : vector<2x8xf32> to vector<8xf32>
    %297 = vector.shape_cast %296 : vector<8xf32> to vector<1x8xf32>
    %cst_120 = arith.constant 2.000000e+00 : f32
    %298 = vector.broadcast %cst_120 : f32 to vector<1x8xf32>
    %299 = arith.divf %297, %298 : vector<1x8xf32>
    %300 = vector.broadcast %299 : vector<1x8xf32> to vector<2x8xf32>
    %301 = arith.subf %295, %300 : vector<2x8xf32>
    %302 = arith.mulf %301, %301 : vector<2x8xf32>
    %cst_121 = arith.constant dense<0.000000e+00> : vector<8xf32>
    %303 = vector.multi_reduction <add>, %302, %cst_121 [0] : vector<2x8xf32> to vector<8xf32>
    %304 = vector.shape_cast %303 : vector<8xf32> to vector<1x8xf32>
    %cst_122 = arith.constant 2.000000e+00 : f32
    %305 = vector.broadcast %cst_122 : f32 to vector<1x8xf32>
    %306 = arith.divf %304, %305 : vector<1x8xf32>
    %c992 = arith.constant 992 : index
    %c0_123 = arith.constant 0 : index
    %307 = vector.load %arg2[%c992, %c0_123] : memref<1024x128xf32, #tpu.memory_space<vmem>>, vector<1x8xf32>
    %308 = vector.broadcast %299 : vector<1x8xf32> to vector<2x8xf32>
    %309 = arith.subf %295, %308 : vector<2x8xf32>
    %310 = vector.broadcast %307 : vector<1x8xf32> to vector<2x8xf32>
    %311 = arith.mulf %310, %309 : vector<2x8xf32>
    %cst_124 = arith.constant 9.99999974E-6 : f32
    %312 = vector.broadcast %cst_124 : f32 to vector<1x8xf32>
    %313 = arith.addf %306, %312 : vector<1x8xf32>
    %314 = math.rsqrt %313 : vector<1x8xf32>
    %315 = vector.broadcast %314 : vector<1x8xf32> to vector<2x8xf32>
    %316 = arith.mulf %311, %315 : vector<2x8xf32>
    %c1000 = arith.constant 1000 : index
    %c0_125 = arith.constant 0 : index
    %317 = vector.load %arg2[%c1000, %c0_125] : memref<1024x128xf32, #tpu.memory_space<vmem>>, vector<1x8xf32>
    %318 = vector.broadcast %317 : vector<1x8xf32> to vector<2x8xf32>
    %319 = arith.addf %316, %318 : vector<2x8xf32>
    %cst_126 = arith.constant 0.000000e+00 : f32
    %320 = vector.broadcast %cst_126 : f32 to vector<2x8xf32>
    %321 = arith.maximumf %319, %320 : vector<2x8xf32>
    %c1008 = arith.constant 1008 : index
    %c0_127 = arith.constant 0 : index
    %322 = vector.load %arg2[%c1008, %c0_127] : memref<1024x128xf32, #tpu.memory_space<vmem>>, vector<8x8xf32>
    %cst_128 = arith.constant dense<0.000000e+00> : vector<2x8xf32>
    %323 = tpu.matmul %321, %322, %cst_128 {dimension_numbers = #tpu.dot_dimension_numbers<[1], [0], [0], [1], [0, 0, 1, 1], [], []>} : vector<2x8xf32>, vector<8x8xf32>, vector<2x8xf32> -> vector<2x8xf32>
    %c1016 = arith.constant 1016 : index
    %c0_129 = arith.constant 0 : index
    %324 = vector.load %arg2[%c1016, %c0_129] : memref<1024x128xf32, #tpu.memory_space<vmem>>, vector<1x8xf32>
    %325 = vector.broadcast %324 : vector<1x8xf32> to vector<2x8xf32>
    %326 = arith.addf %323, %325 : vector<2x8xf32>
    %327 = arith.negf %326 : vector<2x8xf32>
    %328 = math.exp %327 : vector<2x8xf32>
    %cst_130 = arith.constant 1.000000e+00 : f32
    %329 = vector.broadcast %cst_130 : f32 to vector<2x8xf32>
    %330 = arith.addf %329, %328 : vector<2x8xf32>
    %331 = arith.divf %329, %330 : vector<2x8xf32>
    %c192_131 = arith.constant 192 : index
    %c0_132 = arith.constant 0 : index
    %332 = vector.load %arg2[%c192_131, %c0_132] : memref<1024x128xf32, #tpu.memory_space<vmem>>, vector<32x2xf32>
    %333 = arith.mulf %331, %290 : vector<2x8xf32>
    %cst_133 = arith.constant dense<0.000000e+00> : vector<32x8xf32>
    %334 = tpu.matmul %332, %333, %cst_133 {dimension_numbers = #tpu.dot_dimension_numbers<[1], [0], [0], [1], [0, 0, 1, 1], [], []>} : vector<32x2xf32>, vector<2x8xf32>, vector<32x8xf32> -> vector<32x8xf32>
    %335 = arith.subf %285, %334 : vector<32x8xf32>
    %336 = arith.mulf %335, %335 : vector<32x8xf32>
    %337 = arith.mulf %286, %286 : vector<32x8xf32>
    %338 = arith.addf %336, %337 : vector<32x8xf32>
    %cst_134 = arith.constant 1.000000e-24 : f32
    %339 = vector.broadcast %cst_134 : f32 to vector<32x8xf32>
    %340 = arith.addf %338, %339 : vector<32x8xf32>
    %341 = math.rsqrt %340 : vector<32x8xf32>
    %342 = vector.broadcast %2 : f32 to vector<32x8xf32>
    %343 = arith.mulf %342, %341 : vector<32x8xf32>
    %cst_135 = arith.constant 1.000000e+00 : f32
    %344 = vector.broadcast %cst_135 : f32 to vector<32x8xf32>
    %345 = arith.subf %344, %343 : vector<32x8xf32>
    %cst_136 = arith.constant 0.000000e+00 : f32
    %346 = vector.broadcast %cst_136 : f32 to vector<32x8xf32>
    %347 = arith.maximumf %345, %346 : vector<32x8xf32>
    %348 = arith.mulf %347, %335 : vector<32x8xf32>
    %349 = arith.mulf %347, %286 : vector<32x8xf32>
    %350 = tpu.concatenate %348, %349 in 1 : vector<32x8xf32>, vector<32x8xf32> -> vector<32x16xf32>
    %c808 = arith.constant 808 : index
    %c0_137 = arith.constant 0 : index
    %351 = vector.load %arg2[%c808, %c0_137] : memref<1024x128xf32, #tpu.memory_space<vmem>>, vector<48x16xf32>
    %c856 = arith.constant 856 : index
    %c0_138 = arith.constant 0 : index
    %352 = vector.load %arg2[%c856, %c0_138] : memref<1024x128xf32, #tpu.memory_space<vmem>>, vector<1x16xf32>
    %c1_i32_139 = arith.constant 1 : i32
    %353 = tpu.dynamic_rotate %350 by %c1_i32_139 dim 0 : vector<32x16xf32>, i32 -> vector<32x16xf32>
    %354 = vector.broadcast %239 : vector<32x1xf32> to vector<32x16xf32>
    %355 = arith.mulf %353, %354 : vector<32x16xf32>
    %c31_i32_140 = arith.constant 31 : i32
    %356 = tpu.dynamic_rotate %350 by %c31_i32_140 dim 0 : vector<32x16xf32>, i32 -> vector<32x16xf32>
    %357 = vector.broadcast %240 : vector<32x1xf32> to vector<32x16xf32>
    %358 = arith.mulf %356, %357 : vector<32x16xf32>
    %359 = tpu.concatenate %355, %350, %358 in 1 : vector<32x16xf32>, vector<32x16xf32>, vector<32x16xf32> -> vector<32x48xf32>
    %cst_141 = arith.constant dense<0.000000e+00> : vector<32x16xf32>
    %360 = tpu.matmul %359, %351, %cst_141 {dimension_numbers = #tpu.dot_dimension_numbers<[1], [0], [0], [1], [0, 0, 1, 1], [], []>} : vector<32x48xf32>, vector<48x16xf32>, vector<32x16xf32> -> vector<32x16xf32>
    %361 = vector.broadcast %352 : vector<1x16xf32> to vector<32x16xf32>
    %362 = arith.addf %360, %361 : vector<32x16xf32>
    %cst_142 = arith.constant 0.000000e+00 : f32
    %363 = vector.broadcast %cst_142 : f32 to vector<32x16xf32>
    %364 = arith.maximumf %362, %363 : vector<32x16xf32>
    %c864 = arith.constant 864 : index
    %c0_143 = arith.constant 0 : index
    %365 = vector.load %arg2[%c864, %c0_143] : memref<1024x128xf32, #tpu.memory_space<vmem>>, vector<48x16xf32>
    %c912 = arith.constant 912 : index
    %c0_144 = arith.constant 0 : index
    %366 = vector.load %arg2[%c912, %c0_144] : memref<1024x128xf32, #tpu.memory_space<vmem>>, vector<1x16xf32>
    %c1_i32_145 = arith.constant 1 : i32
    %367 = tpu.dynamic_rotate %364 by %c1_i32_145 dim 0 : vector<32x16xf32>, i32 -> vector<32x16xf32>
    %368 = vector.broadcast %239 : vector<32x1xf32> to vector<32x16xf32>
    %369 = arith.mulf %367, %368 : vector<32x16xf32>
    %c31_i32_146 = arith.constant 31 : i32
    %370 = tpu.dynamic_rotate %364 by %c31_i32_146 dim 0 : vector<32x16xf32>, i32 -> vector<32x16xf32>
    %371 = vector.broadcast %240 : vector<32x1xf32> to vector<32x16xf32>
    %372 = arith.mulf %370, %371 : vector<32x16xf32>
    %373 = tpu.concatenate %369, %364, %372 in 1 : vector<32x16xf32>, vector<32x16xf32>, vector<32x16xf32> -> vector<32x48xf32>
    %cst_147 = arith.constant dense<0.000000e+00> : vector<32x16xf32>
    %374 = tpu.matmul %373, %365, %cst_147 {dimension_numbers = #tpu.dot_dimension_numbers<[1], [0], [0], [1], [0, 0, 1, 1], [], []>} : vector<32x48xf32>, vector<48x16xf32>, vector<32x16xf32> -> vector<32x16xf32>
    %375 = vector.broadcast %366 : vector<1x16xf32> to vector<32x16xf32>
    %376 = arith.addf %374, %375 : vector<32x16xf32>
    %c920 = arith.constant 920 : index
    %c0_148 = arith.constant 0 : index
    %377 = vector.load %arg2[%c920, %c0_148] : memref<1024x128xf32, #tpu.memory_space<vmem>>, vector<48x2xf32>
    %c968 = arith.constant 968 : index
    %c0_149 = arith.constant 0 : index
    %378 = vector.load %arg2[%c968, %c0_149] : memref<1024x128xf32, #tpu.memory_space<vmem>>, vector<1x2xf32>
    %c1_i32_150 = arith.constant 1 : i32
    %379 = tpu.dynamic_rotate %376 by %c1_i32_150 dim 0 : vector<32x16xf32>, i32 -> vector<32x16xf32>
    %380 = vector.broadcast %239 : vector<32x1xf32> to vector<32x16xf32>
    %381 = arith.mulf %379, %380 : vector<32x16xf32>
    %c31_i32_151 = arith.constant 31 : i32
    %382 = tpu.dynamic_rotate %376 by %c31_i32_151 dim 0 : vector<32x16xf32>, i32 -> vector<32x16xf32>
    %383 = vector.broadcast %240 : vector<32x1xf32> to vector<32x16xf32>
    %384 = arith.mulf %382, %383 : vector<32x16xf32>
    %385 = tpu.concatenate %381, %376, %384 in 1 : vector<32x16xf32>, vector<32x16xf32>, vector<32x16xf32> -> vector<32x48xf32>
    %cst_152 = arith.constant dense<0.000000e+00> : vector<32x2xf32>
    %386 = tpu.matmul %385, %377, %cst_152 {dimension_numbers = #tpu.dot_dimension_numbers<[1], [0], [0], [1], [0, 0, 1, 1], [], []>} : vector<32x48xf32>, vector<48x2xf32>, vector<32x2xf32> -> vector<32x2xf32>
    %387 = vector.broadcast %378 : vector<1x2xf32> to vector<32x2xf32>
    %388 = arith.addf %386, %387 : vector<32x2xf32>
    %c224_153 = arith.constant 224 : index
    %c0_154 = arith.constant 0 : index
    %389 = vector.load %arg2[%c224_153, %c0_154] : memref<1024x128xf32, #tpu.memory_space<vmem>>, vector<2x32xf32>
    %c232_155 = arith.constant 232 : index
    %c0_156 = arith.constant 0 : index
    %390 = vector.load %arg2[%c232_155, %c0_156] : memref<1024x128xf32, #tpu.memory_space<vmem>>, vector<2x32xf32>
    %cst_157 = arith.constant dense<0.000000e+00> : vector<32x32xf32>
    %391 = tpu.matmul %388, %390, %cst_157 {dimension_numbers = #tpu.dot_dimension_numbers<[1], [0], [0], [1], [0, 0, 1, 1], [], []>} : vector<32x2xf32>, vector<2x32xf32>, vector<32x32xf32> -> vector<32x32xf32>
    %c272_158 = arith.constant 272 : index
    %c0_159 = arith.constant 0 : index
    %392 = vector.load %arg2[%c272_158, %c0_159] : memref<1024x128xf32, #tpu.memory_space<vmem>>, vector<32x32xf32>
    %393 = arith.mulf %391, %392 : vector<32x32xf32>
    %cst_160 = arith.constant dense<0.000000e+00> : vector<2x32xf32>
    %394 = tpu.matmul %389, %393, %cst_160 {dimension_numbers = #tpu.dot_dimension_numbers<[1], [0], [0], [1], [0, 0, 1, 1], [], []>} : vector<2x32xf32>, vector<32x32xf32>, vector<2x32xf32> -> vector<2x32xf32>
    %395 = arith.addf %237, %394 : vector<2x32xf32>
    %396 = vector.extract_strided_slice %395 {offsets = [0, 0], sizes = [2, 16], strides = [1, 1]} : vector<2x32xf32> to vector<2x16xf32>
    %397 = vector.extract_strided_slice %395 {offsets = [0, 16], sizes = [2, 16], strides = [1, 1]} : vector<2x32xf32> to vector<2x16xf32>
    %398 = arith.mulf %396, %396 : vector<2x16xf32>
    %399 = arith.mulf %397, %397 : vector<2x16xf32>
    %400 = arith.addf %398, %399 : vector<2x16xf32>
    %cst_161 = arith.constant 1.000000e-24 : f32
    %401 = vector.broadcast %cst_161 : f32 to vector<2x16xf32>
    %402 = arith.addf %400, %401 : vector<2x16xf32>
    %403 = math.rsqrt %402 : vector<2x16xf32>
    %cst_162 = arith.constant 2.500000e-01 : f32
    %404 = vector.broadcast %cst_162 : f32 to vector<2x16xf32>
    %405 = arith.cmpf ogt, %400, %404 : vector<2x16xf32>
    %cst_163 = arith.constant 0.00999999977 : f32
    %406 = vector.broadcast %cst_163 : f32 to vector<2x16xf32>
    %407 = arith.mulf %406, %403 : vector<2x16xf32>
    %cst_164 = arith.constant 1.000000e+00 : f32
    %408 = vector.broadcast %cst_164 : f32 to vector<2x16xf32>
    %409 = arith.select %405, %407, %408 : vector<2x16xi1>, vector<2x16xf32>
    %410 = arith.mulf %396, %409 : vector<2x16xf32>
    %411 = arith.mulf %397, %409 : vector<2x16xf32>
    %412 = tpu.concatenate %410, %411 in 1 : vector<2x16xf32>, vector<2x16xf32> -> vector<2x32xf32>
    %413 = vector.extract_strided_slice %412 {offsets = [0, 0], sizes = [2, 16], strides = [1, 1]} : vector<2x32xf32> to vector<2x16xf32>
    %414 = vector.extract_strided_slice %412 {offsets = [0, 16], sizes = [2, 16], strides = [1, 1]} : vector<2x32xf32> to vector<2x16xf32>
    %415 = vector.extract_strided_slice %211 {offsets = [0, 0], sizes = [2, 16], strides = [1, 1]} : vector<2x32xf32> to vector<2x16xf32>
    %416 = vector.extract_strided_slice %211 {offsets = [0, 16], sizes = [2, 16], strides = [1, 1]} : vector<2x32xf32> to vector<2x16xf32>
    %417 = arith.mulf %413, %415 : vector<2x16xf32>
    %418 = arith.mulf %414, %416 : vector<2x16xf32>
    %419 = arith.subf %417, %418 : vector<2x16xf32>
    %420 = arith.mulf %413, %416 : vector<2x16xf32>
    %421 = arith.mulf %414, %415 : vector<2x16xf32>
    %422 = arith.addf %420, %421 : vector<2x16xf32>
    %423 = tpu.concatenate %419, %422 in 1 : vector<2x16xf32>, vector<2x16xf32> -> vector<2x32xf32>
    %424 = vector.broadcast %0 : f32 to vector<2x32xf32>
    %425 = arith.mulf %424, %423 : vector<2x32xf32>
    %c144_165 = arith.constant 144 : index
    %c0_166 = arith.constant 0 : index
    %426 = vector.load %arg2[%c144_165, %c0_166] : memref<1024x128xf32, #tpu.memory_space<vmem>>, vector<32x16xf32>
    %cst_167 = arith.constant dense<0.000000e+00> : vector<2x16xf32>
    %427 = tpu.matmul %425, %426, %cst_167 {dimension_numbers = #tpu.dot_dimension_numbers<[1], [0], [0], [1], [0, 0, 1, 1], [], []>} : vector<2x32xf32>, vector<32x16xf32>, vector<2x16xf32> -> vector<2x16xf32>
    %428 = tpu.concatenate %213, %427 in 1 : vector<2x16xf32>, vector<2x16xf32> -> vector<2x32xf32>
    %c80 = arith.constant 80 : index
    %c0_168 = arith.constant 0 : index
    %429 = vector.load %arg2[%c80, %c0_168] : memref<1024x128xf32, #tpu.memory_space<vmem>>, vector<32x32xf32>
    %cst_169 = arith.constant dense<0.000000e+00> : vector<2x32xf32>
    %430 = tpu.matmul %428, %429, %cst_169 {dimension_numbers = #tpu.dot_dimension_numbers<[1], [0], [0], [1], [0, 0, 1, 1], [], []>} : vector<2x32xf32>, vector<32x32xf32>, vector<2x32xf32> -> vector<2x32xf32>
    %431 = arith.addf %213, %427 : vector<2x16xf32>
    %432 = arith.subf %4, %431 : vector<2x16xf32>
    %433 = arith.addf %211, %425 : vector<2x32xf32>
    %434 = arith.subf %433, %430 : vector<2x32xf32>
    %cst_170 = arith.constant 5.000000e-01 : f32
    %435 = vector.broadcast %cst_170 : f32 to vector<2x32xf32>
    %436 = arith.mulf %434, %435 : vector<2x32xf32>
    %437 = arith.addf %13, %219 : vector<2x16xf32>
    %438 = arith.addf %437, %49 : vector<2x16xf32>
    %cst_171 = arith.constant 2.500000e-01 : f32
    %439 = vector.broadcast %cst_171 : f32 to vector<2x16xf32>
    %440 = arith.mulf %438, %439 : vector<2x16xf32>
    %441 = tpu.concatenate %211, %412, %436, %432, %440 in 1 : vector<2x32xf32>, vector<2x32xf32>, vector<2x32xf32>, vector<2x16xf32>, vector<2x16xf32> -> vector<2x128xf32>
    %c0_172 = arith.constant 0 : index
    %c0_173 = arith.constant 0 : index
    %442 = vector.load %arg3[%c0_172, %c0_173] : memref<2x128xf32, #tpu.memory_space<vmem>>, vector<2x128xf32>
    tpu.vector_store %arg3[%c0_172, %c0_173], %441 {strides = array<i32>} : memref<2x128xf32, #tpu.memory_space<vmem>>, vector<2x128xf32>,
    return
  }
}

</mosaic_0001>

<llo_original>
// kernel: custom-call.2
$region0: #{custom-call.2}
  %s0 = inlined_call_operand.hbm [shape: c64[2,8,1], index: 0, kind: input, shape index: {}]
  %s1 = inlined_call_operand.vmem [shape: f32[2,8,1], index: 1, kind: output, shape index: {}]
  $region1: #{custom-call.2} parent=0
    #allocation0 [shape = 's32[1]{0}', space=sflag, size = 0x4, scoped, tag = 'scoped memory for custom-call.2']
    %2 = vsyncpa [#allocation0], 0
    %s3 = sshll.u32 %s1, 4
    %s4 = int_to_ptr.vmem [resolvable:$true] %s3
    %6 = dma.hbm_to_vmem [thread:$0]  %s0, 32, %s4, [#allocation0]
    %7 = dma.done [#allocation0], 32
    %8 = vsyncpa [#allocation0], 1

// kernel: custom-call.1
$region0: #{custom-call.1}
  %s0 = inlined_call_operand.hbm [shape: c64[2,16,1], index: 0, kind: input, shape index: {}]
  %s1 = inlined_call_operand.vmem [shape: f32[2,16,1], index: 1, kind: output, shape index: {}]
  %s2 = scalar_lea.hbm %s0, 32
  $region1: #{custom-call.1} parent=0
    #allocation0 [shape = 's32[1]{0}', space=sflag, size = 0x4, scoped, tag = 'scoped memory for custom-call.1']
    %3 = vsyncpa [#allocation0], 0
    %s4 = sshll.u32 %s1, 4
    %s5 = int_to_ptr.vmem [resolvable:$true] %s4
    %7 = dma.hbm_to_vmem [thread:$0]  %s2, 32, %s5, [#allocation0]
    %8 = dma.done [#allocation0], 32
    %9 = vsyncpa [#allocation0], 1

// kernel: custom-call
$region0: #{custom-call}
  %s0 = inlined_call_operand.hbm [shape: c64[2,16,1], index: 0, kind: input, shape index: {}]
  %s1 = inlined_call_operand.vmem [shape: f32[2,16,1], index: 1, kind: output, shape index: {}]
  $region1: #{custom-call} parent=0
    #allocation0 [shape = 's32[1]{0}', space=sflag, size = 0x4, scoped, tag = 'scoped memory for custom-call']
    %2 = vsyncpa [#allocation0], 0
    %s3 = sshll.u32 %s1, 4
    %s4 = int_to_ptr.vmem [resolvable:$true] %s3
    %6 = dma.hbm_to_vmem [thread:$0]  %s0, 32, %s4, [#allocation0]
    %7 = dma.done [#allocation0], 32
    %8 = vsyncpa [#allocation0], 1

// kernel: custom-call.3
$region0: #{custom-call.3}
  %s0 = inlined_call_operand.hbm [shape: c64[2,8,1], index: 0, kind: input, shape index: {}]
  %s1 = inlined_call_operand.vmem [shape: f32[2,8,1], index: 1, kind: output, shape index: {}]
  %s2 = scalar_lea.hbm %s0, 32
  $region1: #{custom-call.3} parent=0
    #allocation0 [shape = 's32[1]{0}', space=sflag, size = 0x4, scoped, tag = 'scoped memory for custom-call.3']
    %3 = vsyncpa [#allocation0], 0
    %s4 = sshll.u32 %s1, 4
    %s5 = int_to_ptr.vmem [resolvable:$true] %s4
    %7 = dma.hbm_to_vmem [thread:$0]  %s2, 32, %s5, [#allocation0]
    %8 = dma.done [#allocation0], 32
    %9 = vsyncpa [#allocation0], 1

// kernel: custom-call.10
$region0: #{custom-call.10}
  %s0 = inlined_call_operand.vmem [shape: f32[2,8,1], index: 0, kind: input, shape index: {}]
  %s1 = inlined_call_operand.vmem [shape: f32[2,8,1], index: 1, kind: input, shape index: {}]
  %s2 = inlined_call_operand.hbm [shape: c64[2,8,1], index: 2, kind: output, shape index: {}]
  %s3 = scalar_lea.hbm %s2, 32
  $region1: #{custom-call.10} parent=0
    #allocation0 [shape = 's32[1]{0}', space=sflag, size = 0x4, scoped, tag = 'scoped memory for custom-call.10']
    %4 = vsyncpa [#allocation0], 0
    %s5 = sshll.u32 %s0, 4
    %s6 = int_to_ptr.vmem [resolvable:$true] %s5
    %8 = dma.vmem_to_hbm [thread:$0]  %s6, 32, %s2, [#allocation0]
    %9 = dma.done [#allocation0], 32
    %10 = vsyncpa [#allocation0], 1
  $region2: #{custom-call.10} parent=0
    #allocation1 [shape = 's32[1]{0}', space=sflag, size = 0x4, scoped, tag = 'scoped memory for custom-call.10']
    %11 = vsyncpa [#allocation1], 0
    %s12 = sshll.u32 %s1, 4
    %s13 = int_to_ptr.vmem [resolvable:$true] %s12
    %15 = dma.vmem_to_hbm [thread:$0]  %s13, 32, %s3, [#allocation1]
    %16 = dma.done [#allocation1], 32
    %17 = vsyncpa [#allocation1], 1

// kernel: custom-call.9
$region0: #{custom-call.9}
  %s0 = inlined_call_operand.vmem [shape: f32[2,16,1], index: 0, kind: input, shape index: {}]
  %s1 = inlined_call_operand.vmem [shape: f32[2,16,1], index: 1, kind: input, shape index: {}]
  %s2 = inlined_call_operand.hbm [shape: c64[2,16,1], index: 2, kind: output, shape index: {}]
  %s3 = scalar_lea.hbm %s2, 32
  $region1: #{custom-call.9} parent=0
    #allocation0 [shape = 's32[1]{0}', space=sflag, size = 0x4, scoped, tag = 'scoped memory for custom-call.9']
    %4 = vsyncpa [#allocation0], 0
    %s5 = sshll.u32 %s0, 4
    %s6 = int_to_ptr.vmem [resolvable:$true] %s5
    %8 = dma.vmem_to_hbm [thread:$0]  %s6, 32, %s2, [#allocation0]
    %9 = dma.done [#allocation0], 32
    %10 = vsyncpa [#allocation0], 1
  $region2: #{custom-call.9} parent=0
    #allocation1 [shape = 's32[1]{0}', space=sflag, size = 0x4, scoped, tag = 'scoped memory for custom-call.9']
    %11 = vsyncpa [#allocation1], 0
    %s12 = sshll.u32 %s1, 4
    %s13 = int_to_ptr.vmem [resolvable:$true] %s12
    %15 = dma.vmem_to_hbm [thread:$0]  %s13, 32, %s3, [#allocation1]
    %16 = dma.done [#allocation1], 32
    %17 = vsyncpa [#allocation1], 1

// kernel: basic_block_forward.1
$region0: #{basic_block_forward.1}
  #allocation0 [shape = 'u32[]', space=smem, size = 0x4, offset = 0x4, fixed_abs, tag = 'smem constant byte address 0x4 - core index']
  #allocation1 [shape = 'u32[144,128]{1,0:T(1,128)}', space=vmem, size = 0x12000, scoped, tag = 'internal scratch']
  %s0 = inlined_call_operand.vmem [shape: f32[3], index: 0, kind: input, shape index: {}]
  %s1 = inlined_call_operand.vmem [shape: f32[2,48], index: 1, kind: input, shape index: {}]
  %s2 = inlined_call_operand.hbm [shape: f32[1024,128], index: 2, kind: input, shape index: {}]
  %s3 = inlined_call_operand.vmem [shape: f32[2,128], index: 3, kind: output, shape index: {}]
  %s4 = sld [smem:[#allocation0]]
  $region30: #{basic_block_forward.1} parent=0
    _
  %s6 = ssub.s32 1, %s4
  %s7 = scalar_select 0, %s6, %s4
  $region1: #{basic_block_forward.1} parent=0
    #allocation2 [shape = 'u8[512]{0}', space=smem, size = 0x200, scoped, tag = 'input window, operand 0, single buffered']
    #allocation3 [shape = 's32[1]{0}', space=sflag, size = 0x4, scoped, tag = 'scoped memory for basic_block_forward.1']
    #allocation4 [shape = 's32[1]{0}', space=sflag, size = 0x4, scoped, tag = 'scoped memory for basic_block_forward.1']
    #allocation5 [shape = 'u8[524288]{0}', space=vmem, size = 0x80000, scoped, tag = 'input window, operand 2, single buffered']
    %8 = vsyncpa [#allocation4], 0
    %9 = vsyncpa [#allocation3], 0
    // Predicated region
    $region2: #{basic_block_forward.1} parent=1 // pred_check
      _
    $region3: #{basic_block_forward.1} parent=1 // pred_check_branch
      %11 = sbr.rel (0) target = $region5
    $region4: #{basic_block_forward.1} parent=1 // pred_region
      %s13 = ssub.s32 16, 16
      %14 = vsyncadd [#allocation4], %s13
      %s16 = sshll.u32 %s0, 4
      %s17 = int_to_ptr.vmem [resolvable:$true] %s16
      %19 = dma.vmem_to_smem %s17, 16, [#allocation2], [#allocation4]
    $region5: #{basic_block_forward.1} parent=1 // pred_fallthru
      _
    // Predicated region
    $region6: #{basic_block_forward.1} parent=1 // pred_check
      _
    $region7: #{basic_block_forward.1} parent=1 // pred_check_branch
      %21 = sbr.rel (0) target = $region9
    $region8: #{basic_block_forward.1} parent=1 // pred_region
      _
    $region9: #{basic_block_forward.1} parent=1 // pred_fallthru
      _
    // Predicated region
    $region10: #{basic_block_forward.1} parent=1 // pred_check
      _
    $region11: #{basic_block_forward.1} parent=1 // pred_check_branch
      %23 = sbr.rel (0) target = $region13
    $region12: #{basic_block_forward.1} parent=1 // pred_region
      %s25 = ssub.s32 16384, 16384
      %26 = vsyncadd [#allocation3], %s25
      %s27 = sshll.u32 [#allocation5], 4
      %s28 = int_to_ptr.vmem [resolvable:$true] %s27
      %33 = dma.hbm_to_vmem [thread:$0]  %s2, 16384, %s28, [#allocation3], 128, 128, 8
    $region13: #{basic_block_forward.1} parent=1 // pred_fallthru
      _
    // Predicated region
    $region14: #{basic_block_forward.1} parent=1 // pred_check
      _
    $region15: #{basic_block_forward.1} parent=1 // pred_check_branch
      %35 = sbr.rel (0) target = $region17
    $region16: #{basic_block_forward.1} parent=1 // pred_region
      %36 = dma.done [#allocation4], 16
    $region17: #{basic_block_forward.1} parent=1 // pred_fallthru
      _
    // Predicated region
    $region18: #{basic_block_forward.1} parent=1 // pred_check
      _
    $region19: #{basic_block_forward.1} parent=1 // pred_check_branch
      %38 = sbr.rel (0) target = $region21
    $region20: #{basic_block_forward.1} parent=1 // pred_region
      %39 = dma.done [#allocation3], 16384
    $region21: #{basic_block_forward.1} parent=1 // pred_fallthru
      _
    %40 = sfence
    %s41 = sld [smem:[#allocation2]]
    %s42 = sld [smem:[#allocation2 + $0x1]]
    %s43 = sld [smem:[#allocation2 + $0x2]]
    %v44 = vld [vmem:[%s1] sm:$0x3]
    %v45 = vld [vmem:[#allocation5] sm:$0xff]
    %v46 = vld [vmem:[#allocation5 + $0x8] sm:$0xff]
    %48 = vrot.lane.b32.xlu0 %v44, 96
    %v49 = vpop.permute.xlu0 %48
    %vm50 = vcmask 130048
    %v51 = vsel %vm50, %v49, 0
    %53 = vmatprep.subr.mxu0 0.0
    %54 = vmatpush1.msra.mxu0 0.0
    %55 = vmatprep.subr.mxu0 0.0
    %56 = vmatpush1.msra.mxu0 0.0
    %57 = vmatprep.subr.mxu0 0.0
    %58 = vmatpush1.msra.mxu0 0.0
    %59 = vmatprep.subr.mxu0 0.0
    %60 = vmatpush1.msra.mxu0 0.0
    %61 = vmatprep.subr.mxu0 0.0
    %62 = vmatpush1.msra.mxu0 0.0
    %63 = vmatprep.subr.mxu0 0.0
    %64 = vmatpush1.msra.mxu0 0.0
    %65 = vmatprep.subr.mxu0 0.0
    %66 = vmatpush1.msra.mxu0 0.0
    %67 = vmatprep.subr.mxu0 0.0
    %68 = vmatpush1.msra.mxu0 0.0
    %69 = vmatprep.subr.mxu0 0.0
    %70 = vmatpush1.msra.mxu0 0.0
    %71 = vmatprep.subr.mxu0 0.0
    %72 = vmatpush1.msra.mxu0 0.0
    %73 = vmatprep.subr.mxu0 0.0
    %74 = vmatpush1.msra.mxu0 0.0
    %75 = vmatprep.subr.mxu0 0.0
    %76 = vmatpush1.msra.mxu0 0.0
    %77 = vmatprep.subr.mxu0 0.0
    %78 = vmatpush1.msra.mxu0 0.0
    %79 = vmatprep.subr.mxu0 0.0
    %80 = vmatpush1.msra.mxu0 0.0
    %81 = vmatprep.subr.mxu0 0.0
    %82 = vmatpush1.msra.mxu0 %v46
    %83 = vmatprep.subr.mxu0 0.0
    %84 = vmatpush1.msra.mxu0 %v45
    %85 = vmatprep.subr.mxu0 0.0
    %86 = vmatpush2.msra.mxu0 0.0
    %87 = vmatprep.subr.mxu0 0.0
    %88 = vmatpush2.msra.mxu0 0.0
    %89 = vmatprep.subr.mxu0 0.0
    %90 = vmatpush2.msra.mxu0 0.0
    %91 = vmatprep.subr.mxu0 0.0
    %92 = vmatpush2.msra.mxu0 0.0
    %93 = vmatprep.subr.mxu0 0.0
    %94 = vmatpush2.msra.mxu0 0.0
    %95 = vmatprep.subr.mxu0 0.0
    %96 = vmatpush2.msra.mxu0 0.0
    %97 = vmatprep.subr.mxu0 0.0
    %98 = vmatpush2.msra.mxu0 0.0
    %99 = vmatprep.subr.mxu0 0.0
    %100 = vmatpush2.msra.mxu0 0.0
    %101 = vmatprep.subr.mxu0 0.0
    %102 = vmatpush2.msra.mxu0 0.0
    %103 = vmatprep.subr.mxu0 0.0
    %104 = vmatpush2.msra.mxu0 0.0
    %105 = vmatprep.subr.mxu0 0.0
    %106 = vmatpush2.msra.mxu0 0.0
    %107 = vmatprep.subr.mxu0 0.0
    %108 = vmatpush2.msra.mxu0 0.0
    %109 = vmatprep.subr.mxu0 0.0
    %110 = vmatpush2.msra.mxu0 0.0
    %111 = vmatprep.subr.mxu0 0.0
    %112 = vmatpush2.msra.mxu0 0.0
    %113 = vmatprep.subr.mxu0 0.0
    %114 = vmatpush2.msra.mxu0 0.0
    %115 = vmatprep.subr.mxu0 0.0
    %116 = vmatpush2.msra.mxu0 0.0
    %117 = vmatprep.mubr.f32.mxu0 0.0
    %118 = vmatmul.mubr.f32.gmra.mxu0 %v51
    %v119 = vpop.f32.mrf.mxu0
    %v120 = vadd.f32 0.0, %v119
    %v121 = vpop.f32.mrf.mxu0
    %122 = vdwg.mxu0
    %v123 = vmul.f32 %v44, 2.0
    %v124 = vld [vmem:[#allocation5 + $0x10] sm:$0xff]
    %v125 = vld [vmem:[#allocation5 + $0x18] sm:$0xff]
    %v126 = vld [vmem:[#allocation5 + $0x20] sm:$0xff]
    %v127 = vld [vmem:[#allocation5 + $0x28] sm:$0xff]
    %v128 = vld [vmem:[#allocation5 + $0x30] sm:$0xff]
    %v129 = vld [vmem:[#allocation5 + $0x38] sm:$0xff]
    %v130 = vld [vmem:[#allocation5 + $0x40] sm:$0xff]
    %v131 = vld [vmem:[#allocation5 + $0x48] sm:$0xff]
    %vm132 = vcmask 523264
    %v134 = vsel %vm132, %v120, 0
    %136 = vmatprep.subr.mxu0 0.0
    %137 = vmatpush1.msra.mxu0 0.0
    %138 = vmatprep.subr.mxu0 0.0
    %139 = vmatpush1.msra.mxu0 0.0
    %140 = vmatprep.subr.mxu0 0.0
    %141 = vmatpush1.msra.mxu0 0.0
    %142 = vmatprep.subr.mxu0 0.0
    %143 = vmatpush1.msra.mxu0 0.0
    %144 = vmatprep.subr.mxu0 0.0
    %145 = vmatpush1.msra.mxu0 0.0
    %146 = vmatprep.subr.mxu0 0.0
    %147 = vmatpush1.msra.mxu0 0.0
    %148 = vmatprep.subr.mxu0 0.0
    %149 = vmatpush1.msra.mxu0 0.0
    %150 = vmatprep.subr.mxu0 0.0
    %151 = vmatpush1.msra.mxu0 0.0
    %152 = vmatprep.subr.mxu0 0.0
    %153 = vmatpush1.msra.mxu0 %v131
    %154 = vmatprep.subr.mxu0 0.0
    %155 = vmatpush1.msra.mxu0 %v130
    %156 = vmatprep.subr.mxu0 0.0
    %157 = vmatpush1.msra.mxu0 %v129
    %158 = vmatprep.subr.mxu0 0.0
    %159 = vmatpush1.msra.mxu0 %v128
    %160 = vmatprep.subr.mxu0 0.0
    %161 = vmatpush1.msra.mxu0 %v127
    %162 = vmatprep.subr.mxu0 0.0
    %163 = vmatpush1.msra.mxu0 %v126
    %164 = vmatprep.subr.mxu0 0.0
    %165 = vmatpush1.msra.mxu0 %v125
    %166 = vmatprep.subr.mxu0 0.0
    %167 = vmatpush1.msra.mxu0 %v124
    %168 = vmatprep.subr.mxu0 0.0
    %169 = vmatpush2.msra.mxu0 0.0
    %170 = vmatprep.subr.mxu0 0.0
    %171 = vmatpush2.msra.mxu0 0.0
    %172 = vmatprep.subr.mxu0 0.0
    %173 = vmatpush2.msra.mxu0 0.0
    %174 = vmatprep.subr.mxu0 0.0
    %175 = vmatpush2.msra.mxu0 0.0
    %176 = vmatprep.subr.mxu0 0.0
    %177 = vmatpush2.msra.mxu0 0.0
    %178 = vmatprep.subr.mxu0 0.0
    %179 = vmatpush2.msra.mxu0 0.0
    %180 = vmatprep.subr.mxu0 0.0
    %181 = vmatpush2.msra.mxu0 0.0
    %182 = vmatprep.subr.mxu0 0.0
    %183 = vmatpush2.msra.mxu0 0.0
    %184 = vmatprep.subr.mxu0 0.0
    %185 = vmatpush2.msra.mxu0 0.0
    %186 = vmatprep.subr.mxu0 0.0
    %187 = vmatpush2.msra.mxu0 0.0
    %188 = vmatprep.subr.mxu0 0.0
    %189 = vmatpush2.msra.mxu0 0.0
    %190 = vmatprep.subr.mxu0 0.0
    %191 = vmatpush2.msra.mxu0 0.0
    %192 = vmatprep.subr.mxu0 0.0
    %193 = vmatpush2.msra.mxu0 0.0
    %194 = vmatprep.subr.mxu0 0.0
    %195 = vmatpush2.msra.mxu0 0.0
    %196 = vmatprep.subr.mxu0 0.0
    %197 = vmatpush2.msra.mxu0 0.0
    %198 = vmatprep.subr.mxu0 0.0
    %199 = vmatpush2.msra.mxu0 0.0
    %200 = vmatprep.mubr.f32.mxu0 0.0
    %201 = vmatmul.mubr.f32.gmra.mxu0 %v134
    %v202 = vpop.f32.mrf.mxu0
    %v203 = vadd.f32 0.0, %v202
    %v204 = vpop.f32.mrf.mxu0
    %205 = vdwg.mxu0
    %207 = vrot.lane.b32.xlu0 %v203, 32
    %v208 = vpop.permute.xlu0 %207
    %v210 = vsub.f32 %v123, %v208
    %v211 = vsub.f32 0.0, %v44
    %v212 = vsel %vm50, %v44, %v211
    %213 = vrot.lane.b32.xlu0 %v120, 96
    %v214 = vpop.permute.xlu0 %213
    %v216 = vmul.f32 %v212, %v214
    %218 = vrot.lane.b32.xlu0 %v216, 112
    %v219 = vpop.permute.xlu0 %218
    %v221 = vsub.f32 %v216, %v219
    %222 = vrot.lane.b32.xlu0 %v120, 80
    %v223 = vpop.permute.xlu0 %222
    %v225 = vmul.f32 %v212, %v223
    %226 = vrot.lane.b32.xlu0 %v120, 112
    %v227 = vpop.permute.xlu0 %226
    %v229 = vmul.f32 %v212, %v227
    %231 = vrot.lane.b32.xlu0 %v229, 112
    %v232 = vpop.permute.xlu0 %231
    %v234 = vadd.f32 %v225, %v232
    %236 = vrot.lane.b32.xlu0 %v234, 16
    %v237 = vpop.permute.xlu0 %236
    %v239 = vsel %vm50, %v221, %v237
    %v240 = vstv %s41
    %v241 = vmul.f32 %v240, %v239
    %v242 = vadd.f32 %v120, %v241
    %v243 = vmul.f32 %v44, %v242
    %245 = vrot.lane.b32.xlu0 %v243, 112
    %v246 = vpop.permute.xlu0 %245
    %v248 = vsub.f32 %v243, %v246
    %250 = vrot.lane.b32.xlu0 %v242, 112
    %v251 = vpop.permute.xlu0 %250
    %v253 = vmul.f32 %v44, %v251
    %254 = vrot.lane.b32.xlu0 %v242, 16
    %v255 = vpop.permute.xlu0 %254
    %v257 = vmul.f32 %v44, %v255
    %259 = vrot.lane.b32.xlu0 %v257, 112
    %v260 = vpop.permute.xlu0 %259
    %v262 = vadd.f32 %v253, %v260
    %264 = vrot.lane.b32.xlu0 %v262, 16
    %v265 = vpop.permute.xlu0 %264
    %v267 = vsel %vm50, %v248, %v265
    %v268 = vmul.f32 %v240, %v267
    %270 = vrot.lane.b32.xlu0 %v268, 32
    %v271 = vpop.permute.xlu0 %270
    %vm273 = vcmask 261120
    %v274 = vsel %vm273, %v242, %v271
    %v276 = vsel %vm132, %v274, 0
    %278 = vmatprep.subr.mxu0 0.0
    %279 = vmatpush1.msra.mxu0 0.0
    %280 = vmatprep.subr.mxu0 0.0
    %281 = vmatpush1.msra.mxu0 0.0
    %282 = vmatprep.subr.mxu0 0.0
    %283 = vmatpush1.msra.mxu0 0.0
    %284 = vmatprep.subr.mxu0 0.0
    %285 = vmatpush1.msra.mxu0 0.0
    %286 = vmatprep.subr.mxu0 0.0
    %287 = vmatpush1.msra.mxu0 0.0
    %288 = vmatprep.subr.mxu0 0.0
    %289 = vmatpush1.msra.mxu0 0.0
    %290 = vmatprep.subr.mxu0 0.0
    %291 = vmatpush1.msra.mxu0 0.0
    %292 = vmatprep.subr.mxu0 0.0
    %293 = vmatpush1.msra.mxu0 0.0
    %294 = vmatprep.subr.mxu0 0.0
    %295 = vmatpush1.msra.mxu0 %v131
    %296 = vmatprep.subr.mxu0 0.0
    %297 = vmatpush1.msra.mxu0 %v130
    %298 = vmatprep.subr.mxu0 0.0
    %299 = vmatpush1.msra.mxu0 %v129
    %300 = vmatprep.subr.mxu0 0.0
    %301 = vmatpush1.msra.mxu0 %v128
    %302 = vmatprep.subr.mxu0 0.0
    %303 = vmatpush1.msra.mxu0 %v127
    %304 = vmatprep.subr.mxu0 0.0
    %305 = vmatpush1.msra.mxu0 %v126
    %306 = vmatprep.subr.mxu0 0.0
    %307 = vmatpush1.msra.mxu0 %v125
    %308 = vmatprep.subr.mxu0 0.0
    %309 = vmatpush1.msra.mxu0 %v124
    %310 = vmatprep.subr.mxu0 0.0
    %311 = vmatpush2.msra.mxu0 0.0
    %312 = vmatprep.subr.mxu0 0.0
    %313 = vmatpush2.msra.mxu0 0.0
    %314 = vmatprep.subr.mxu0 0.0
    %315 = vmatpush2.msra.mxu0 0.0
    %316 = vmatprep.subr.mxu0 0.0
    %317 = vmatpush2.msra.mxu0 0.0
    %318 = vmatprep.subr.mxu0 0.0
    %319 = vmatpush2.msra.mxu0 0.0
    %320 = vmatprep.subr.mxu0 0.0
    %321 = vmatpush2.msra.mxu0 0.0
    %322 = vmatprep.subr.mxu0 0.0
    %323 = vmatpush2.msra.mxu0 0.0
    %324 = vmatprep.subr.mxu0 0.0
    %325 = vmatpush2.msra.mxu0 0.0
    %326 = vmatprep.subr.mxu0 0.0
    %327 = vmatpush2.msra.mxu0 0.0
    %328 = vmatprep.subr.mxu0 0.0
    %329 = vmatpush2.msra.mxu0 0.0
    %330 = vmatprep.subr.mxu0 0.0
    %331 = vmatpush2.msra.mxu0 0.0
    %332 = vmatprep.subr.mxu0 0.0
    %333 = vmatpush2.msra.mxu0 0.0
    %334 = vmatprep.subr.mxu0 0.0
    %335 = vmatpush2.msra.mxu0 0.0
    %336 = vmatprep.subr.mxu0 0.0
    %337 = vmatpush2.msra.mxu0 0.0
    %338 = vmatprep.subr.mxu0 0.0
    %339 = vmatpush2.msra.mxu0 0.0
    %340 = vmatprep.subr.mxu0 0.0
    %341 = vmatpush2.msra.mxu0 0.0
    %342 = vmatprep.mubr.f32.mxu0 0.0
    %343 = vmatmul.mubr.f32.gmra.mxu0 %v276
    %v344 = vpop.f32.mrf.mxu0
    %v345 = vadd.f32 0.0, %v344
    %v346 = vpop.f32.mrf.mxu0
    %347 = vdwg.mxu0
    %v349 = vsub.f32 %v345, %v49
    %v350 = vld [vmem:[#allocation5 + $0x130] sm:$0xff]
    %v351 = vld [vmem:[#allocation5 + $0x138] sm:$0xff]
    %v352 = vld [vmem:[#allocation5 + $0x140] sm:$0xff]
    %v353 = vld [vmem:[#allocation5 + $0x148] sm:$0xff]
    %v354 = vld [vmem:[#allocation5 + $0xc0] sm:$0xff]
    %v355 = vld [vmem:[#allocation5 + $0xc8] sm:$0xff]
    %v356 = vld [vmem:[#allocation5 + $0xd0] sm:$0xff]
    %v357 = vld [vmem:[#allocation5 + $0xd8] sm:$0xff]
    %vm358 = vcmask 15360
    %v360 = vsel %vm358, %v354, 0
    %v363 = vsel %vm358, %v355, 0
    %v366 = vsel %vm358, %v356, 0
    %v369 = vsel %vm358, %v357, 0
    %vm371 = vcmask 1041408
    %v372 = vsel %vm371, %v242, 0
    %374 = vmatprep.subr.mxu0 0.0
    %375 = vmatpush1.msra.mxu0 0.0
    %376 = vmatprep.subr.mxu0 0.0
    %377 = vmatpush1.msra.mxu0 0.0
    %378 = vmatprep.subr.mxu0 0.0
    %379 = vmatpush1.msra.mxu0 0.0
    %380 = vmatprep.subr.mxu0 0.0
    %381 = vmatpush1.msra.mxu0 0.0
    %382 = vmatprep.subr.mxu0 0.0
    %383 = vmatpush1.msra.mxu0 0.0
    %384 = vmatprep.subr.mxu0 0.0
    %385 = vmatpush1.msra.mxu0 0.0
    %386 = vmatprep.subr.mxu0 0.0
    %387 = vmatpush1.msra.mxu0 0.0
    %388 = vmatprep.subr.mxu0 0.0
    %389 = vmatpush1.msra.mxu0 0.0
    %390 = vmatprep.subr.mxu0 0.0
    %391 = vmatpush1.msra.mxu0 0.0
    %392 = vmatprep.subr.mxu0 0.0
    %393 = vmatpush1.msra.mxu0 0.0
    %394 = vmatprep.subr.mxu0 0.0
    %395 = vmatpush1.msra.mxu0 0.0
    %396 = vmatprep.subr.mxu0 0.0
    %397 = vmatpush1.msra.mxu0 0.0
    %398 = vmatprep.subr.mxu0 0.0
    %399 = vmatpush1.msra.mxu0 0.0
    %400 = vmatprep.subr.mxu0 0.0
    %401 = vmatpush1.msra.mxu0 0.0
    %402 = vmatprep.subr.mxu0 0.0
    %403 = vmatpush1.msra.mxu0 0.0
    %404 = vmatprep.subr.mxu0 0.0
    %405 = vmatpush1.msra.mxu0 %v372
    %406 = vmatprep.subr.mxu0 0.0
    %407 = vmatpush2.msra.mxu0 0.0
    %408 = vmatprep.subr.mxu0 0.0
    %409 = vmatpush2.msra.mxu0 0.0
    %410 = vmatprep.subr.mxu0 0.0
    %411 = vmatpush2.msra.mxu0 0.0
    %412 = vmatprep.subr.mxu0 0.0
    %413 = vmatpush2.msra.mxu0 0.0
    %414 = vmatprep.subr.mxu0 0.0
    %415 = vmatpush2.msra.mxu0 0.0
    %416 = vmatprep.subr.mxu0 0.0
    %417 = vmatpush2.msra.mxu0 0.0
    %418 = vmatprep.subr.mxu0 0.0
    %419 = vmatpush2.msra.mxu0 0.0
    %420 = vmatprep.subr.mxu0 0.0
    %421 = vmatpush2.msra.mxu0 0.0
    %422 = vmatprep.subr.mxu0 0.0
    %423 = vmatpush2.msra.mxu0 0.0
    %424 = vmatprep.subr.mxu0 0.0
    %425 = vmatpush2.msra.mxu0 0.0
    %426 = vmatprep.subr.mxu0 0.0
    %427 = vmatpush2.msra.mxu0 0.0
    %428 = vmatprep.subr.mxu0 0.0
    %429 = vmatpush2.msra.mxu0 0.0
    %430 = vmatprep.subr.mxu0 0.0
    %431 = vmatpush2.msra.mxu0 0.0
    %432 = vmatprep.subr.mxu0 0.0
    %433 = vmatpush2.msra.mxu0 0.0
    %434 = vmatprep.subr.mxu0 0.0
    %435 = vmatpush2.msra.mxu0 0.0
    %436 = vmatprep.subr.mxu0 0.0
    %437 = vmatpush2.msra.mxu0 0.0
    %438 = vmatprep.mubr.f32.mxu0 0.0
    %439 = vmatmul.mubr.f32.gmra.mxu0 %v360
    %v440 = vpop.f32.mrf.mxu0
    %v441 = vadd.f32 0.0, %v440
    %v442 = vpop.f32.mrf.mxu0
    %443 = vmatprep.mubr.f32.mxu0 0.0
    %444 = vmatmul.mubr.f32.gmra.mxu0 %v363
    %v445 = vpop.f32.mrf.mxu0
    %v446 = vadd.f32 0.0, %v445
    %v447 = vpop.f32.mrf.mxu0
    %448 = vmatprep.mubr.f32.mxu0 0.0
    %449 = vmatmul.mubr.f32.gmra.mxu0 %v366
    %v450 = vpop.f32.mrf.mxu0
    %v451 = vadd.f32 0.0, %v450
    %v452 = vpop.f32.mrf.mxu0
    %453 = vmatprep.mubr.f32.mxu0 0.0
    %454 = vmatmul.mubr.f32.gmra.mxu0 %v369
    %v455 = vpop.f32.mrf.mxu0
    %v456 = vadd.f32 0.0, %v455
    %v457 = vpop.f32.mrf.mxu0
    %458 = vdwg.mxu0
    %v459 = vld [vmem:[#allocation5 + $0x110] sm:$0xff]
    %v460 = vld [vmem:[#allocation5 + $0x118] sm:$0xff]
    %v461 = vld [vmem:[#allocation5 + $0x120] sm:$0xff]
    %v462 = vld [vmem:[#allocation5 + $0x128] sm:$0xff]
    %v463 = vmul.f32 %v441, %v459
    %v464 = vmul.f32 %v446, %v460
    %v465 = vmul.f32 %v451, %v461
    %v466 = vmul.f32 %v456, %v462
    %v467 = vld [vmem:[#allocation5 + $0xf0] sm:$0xff]
    %v468 = vld [vmem:[#allocation5 + $0xf8] sm:$0xff]
    %v469 = vld [vmem:[#allocation5 + $0x100] sm:$0xff]
    %v470 = vld [vmem:[#allocation5 + $0x108] sm:$0xff]
    %v472 = vsel %vm273, %v463, 0
    %v475 = vsel %vm273, %v464, 0
    %v478 = vsel %vm273, %v465, 0
    %v481 = vsel %vm273, %v466, 0
    %483 = vmatprep.subr.mxu0 0.0
    %484 = vmatpush1.msra.mxu0 0.0
    %485 = vmatprep.subr.mxu0 0.0
    %486 = vmatpush1.msra.mxu0 0.0
    %487 = vmatprep.subr.mxu0 0.0
    %488 = vmatpush1.msra.mxu0 0.0
    %489 = vmatprep.subr.mxu0 0.0
    %490 = vmatpush1.msra.mxu0 0.0
    %491 = vmatprep.subr.mxu0 0.0
    %492 = vmatpush1.msra.mxu0 0.0
    %493 = vmatprep.subr.mxu0 0.0
    %494 = vmatpush1.msra.mxu0 0.0
    %495 = vmatprep.subr.mxu0 0.0
    %496 = vmatpush1.msra.mxu0 0.0
    %497 = vmatprep.subr.mxu0 0.0
    %498 = vmatpush1.msra.mxu0 0.0
    %499 = vmatprep.subr.mxu0 0.0
    %500 = vmatpush1.msra.mxu0 0.0
    %501 = vmatprep.subr.mxu0 0.0
    %502 = vmatpush1.msra.mxu0 0.0
    %503 = vmatprep.subr.mxu0 0.0
    %504 = vmatpush1.msra.mxu0 0.0
    %505 = vmatprep.subr.mxu0 0.0
    %506 = vmatpush1.msra.mxu0 0.0
    %507 = vmatprep.subr.mxu0 0.0
    %508 = vmatpush1.msra.mxu0 %v470
    %509 = vmatprep.subr.mxu0 0.0
    %510 = vmatpush1.msra.mxu0 %v469
    %511 = vmatprep.subr.mxu0 0.0
    %512 = vmatpush1.msra.mxu0 %v468
    %513 = vmatprep.subr.mxu0 0.0
    %514 = vmatpush1.msra.mxu0 %v467
    %515 = vmatprep.subr.mxu0 0.0
    %516 = vmatpush2.msra.mxu0 0.0
    %517 = vmatprep.subr.mxu0 0.0
    %518 = vmatpush2.msra.mxu0 0.0
    %519 = vmatprep.subr.mxu0 0.0
    %520 = vmatpush2.msra.mxu0 0.0
    %521 = vmatprep.subr.mxu0 0.0
    %522 = vmatpush2.msra.mxu0 0.0
    %523 = vmatprep.subr.mxu0 0.0
    %524 = vmatpush2.msra.mxu0 0.0
    %525 = vmatprep.subr.mxu0 0.0
    %526 = vmatpush2.msra.mxu0 0.0
    %527 = vmatprep.subr.mxu0 0.0
    %528 = vmatpush2.msra.mxu0 0.0
    %529 = vmatprep.subr.mxu0 0.0
    %530 = vmatpush2.msra.mxu0 0.0
    %531 = vmatprep.subr.mxu0 0.0
    %532 = vmatpush2.msra.mxu0 0.0
    %533 = vmatprep.subr.mxu0 0.0
    %534 = vmatpush2.msra.mxu0 0.0
    %535 = vmatprep.subr.mxu0 0.0
    %536 = vmatpush2.msra.mxu0 0.0
    %537 = vmatprep.subr.mxu0 0.0
    %538 = vmatpush2.msra.mxu0 0.0
    %539 = vmatprep.subr.mxu0 0.0
    %540 = vmatpush2.msra.mxu0 0.0
    %541 = vmatprep.subr.mxu0 0.0
    %542 = vmatpush2.msra.mxu0 0.0
    %543 = vmatprep.subr.mxu0 0.0
    %544 = vmatpush2.msra.mxu0 0.0
    %545 = vmatprep.subr.mxu0 0.0
    %546 = vmatpush2.msra.mxu0 0.0
    %547 = vmatprep.mubr.f32.mxu0 0.0
    %548 = vmatmul.mubr.f32.gmra.mxu0 %v472
    %v549 = vpop.f32.mrf.mxu0
    %v550 = vadd.f32 0.0, %v549
    %v551 = vpop.f32.mrf.mxu0
    %552 = vmatprep.mubr.f32.mxu0 0.0
    %553 = vmatmul.mubr.f32.gmra.mxu0 %v475
    %v554 = vpop.f32.mrf.mxu0
    %v555 = vadd.f32 0.0, %v554
    %v556 = vpop.f32.mrf.mxu0
    %557 = vmatprep.mubr.f32.mxu0 0.0
    %558 = vmatmul.mubr.f32.gmra.mxu0 %v478
    %v559 = vpop.f32.mrf.mxu0
    %v560 = vadd.f32 0.0, %v559
    %v561 = vpop.f32.mrf.mxu0
    %562 = vmatprep.mubr.f32.mxu0 0.0
    %563 = vmatmul.mubr.f32.gmra.mxu0 %v481
    %v564 = vpop.f32.mrf.mxu0
    %v565 = vadd.f32 0.0, %v564
    %v566 = vpop.f32.mrf.mxu0
    %567 = vdwg.mxu0
    %v568 = vld [vmem:[#allocation5 + $0x150] sm:$0x3f]
    %v569 = vld [vmem:[#allocation5 + $0x158] sm:$0x1]
    %v570 = vrot.slane %v550, 7
    %v571 = vrot.slane %v555, 7
    %v572 = vrot.slane %v560, 7
    %v573 = vrot.slane %v565, 7
    %v574 = vlaneseq
    %v575 = vshrl.u32 %v574, 7
    %vm576 = vcmp.lt.s32.totalorder %v575, 1
    %v577 = vsel %vm576, %v572, %v573
    %v578 = vsel %vm576, %v571, %v572
    %v579 = vsel %vm576, %v570, %v571
    %v580 = vsel %vm576, %v573, %v570
    %582 = vset.pattern.permute.xlu0 0
    %583 = vperm.xlu0 %582, %v350
    %v584 = vpop.permute.xlu0 %583
    %587 = vset.pattern.permute.xlu0 0
    %588 = vperm.xlu0 %587, %v351
    %v589 = vpop.permute.xlu0 %588
    %592 = vset.pattern.permute.xlu0 0
    %593 = vperm.xlu0 %592, %v352
    %v594 = vpop.permute.xlu0 %593
    %597 = vset.pattern.permute.xlu0 0
    %598 = vperm.xlu0 %597, %v353
    %v599 = vpop.permute.xlu0 %598
    %v601 = vmul.f32 %v580, %v584
    %v602 = vmul.f32 %v579, %v589
    %v603 = vmul.f32 %v578, %v594
    %v604 = vmul.f32 %v577, %v599
    %v605 = vrot.slane %v550, 1
    %v606 = vrot.slane %v555, 1
    %v607 = vrot.slane %v560, 1
    %v608 = vrot.slane %v565, 1
    %vm609 = vcmp.lt.s32.totalorder %v575, 7
    %v610 = vsel %vm609, %v607, %v608
    %v611 = vsel %vm609, %v606, %v607
    %v612 = vsel %vm609, %v605, %v606
    %v613 = vsel %vm609, %v608, %v605
    %614 = vset.pattern.permute.xlu0 1
    %615 = vperm.xlu0 %614, %v350
    %v616 = vpop.permute.xlu0 %615
    %618 = vset.pattern.permute.xlu0 1
    %619 = vperm.xlu0 %618, %v351
    %v620 = vpop.permute.xlu0 %619
    %622 = vset.pattern.permute.xlu0 1
    %623 = vperm.xlu0 %622, %v352
    %v624 = vpop.permute.xlu0 %623
    %626 = vset.pattern.permute.xlu0 1
    %627 = vperm.xlu0 %626, %v353
    %v628 = vpop.permute.xlu0 %627
    %v630 = vmul.f32 %v612, %v616
    %v631 = vmul.f32 %v611, %v620
    %v632 = vmul.f32 %v610, %v624
    %v633 = vmul.f32 %v613, %v628
    %638 = vrot.lane.b32.xlu0 %v550, 2
    %v639 = vpop.permute.xlu0 %638
    %640 = vrot.lane.b32.xlu0 %v555, 2
    %v641 = vpop.permute.xlu0 %640
    %642 = vrot.lane.b32.xlu0 %v560, 2
    %v643 = vpop.permute.xlu0 %642
    %644 = vrot.lane.b32.xlu0 %v565, 2
    %v645 = vpop.permute.xlu0 %644
    %654 = vrot.lane.b32.xlu0 %v630, 4
    %v655 = vpop.permute.xlu0 %654
    %656 = vrot.lane.b32.xlu0 %v631, 4
    %v657 = vpop.permute.xlu0 %656
    %658 = vrot.lane.b32.xlu0 %v632, 4
    %v659 = vpop.permute.xlu0 %658
    %660 = vrot.lane.b32.xlu0 %v633, 4
    %v661 = vpop.permute.xlu0 %660
    %v666 = vsel %vm358, %v601, %v639
    %v667 = vsel %vm358, %v602, %v641
    %v668 = vsel %vm358, %v603, %v643
    %v669 = vsel %vm358, %v604, %v645
    %vm670 = vcmask 31744
    %v671 = vsel %vm670, %v666, %v655
    %v672 = vsel %vm670, %v667, %v657
    %v673 = vsel %vm670, %v668, %v659
    %v674 = vsel %vm670, %v669, %v661
    %v675 = vlaneseq
    %v676 = vshrl.u32 %v675, 7
    %v677 = vsub.s32 0, %v676
    %v678 = vrot.slane %v569, %v677
    %vm679 = vcmask 48128
    %v681 = vsel %vm679, %v671, 0
    %v684 = vsel %vm679, %v672, 0
    %v687 = vsel %vm679, %v673, 0
    %v690 = vsel %vm679, %v674, 0
    %vm692 = vcmask 1045504
    %v694 = vsel %vm692, %v568, 0
    %696 = vmatprep.subr.mxu0 0.0
    %697 = vmatpush1.msra.mxu0 0.0
    %698 = vmatprep.subr.mxu0 0.0
    %699 = vmatpush1.msra.mxu0 0.0
    %700 = vmatprep.subr.mxu0 0.0
    %701 = vmatpush1.msra.mxu0 0.0
    %702 = vmatprep.subr.mxu0 0.0
    %703 = vmatpush1.msra.mxu0 0.0
    %704 = vmatprep.subr.mxu0 0.0
    %705 = vmatpush1.msra.mxu0 0.0
    %706 = vmatprep.subr.mxu0 0.0
    %707 = vmatpush1.msra.mxu0 0.0
    %708 = vmatprep.subr.mxu0 0.0
    %709 = vmatpush1.msra.mxu0 0.0
    %710 = vmatprep.subr.mxu0 0.0
    %711 = vmatpush1.msra.mxu0 0.0
    %712 = vmatprep.subr.mxu0 0.0
    %713 = vmatpush1.msra.mxu0 0.0
    %714 = vmatprep.subr.mxu0 0.0
    %715 = vmatpush1.msra.mxu0 0.0
    %716 = vmatprep.subr.mxu0 0.0
    %717 = vmatpush1.msra.mxu0 0.0
    %718 = vmatprep.subr.mxu0 0.0
    %719 = vmatpush1.msra.mxu0 0.0
    %720 = vmatprep.subr.mxu0 0.0
    %721 = vmatpush1.msra.mxu0 0.0
    %722 = vmatprep.subr.mxu0 0.0
    %723 = vmatpush1.msra.mxu0 0.0
    %724 = vmatprep.subr.mxu0 0.0
    %725 = vmatpush1.msra.mxu0 0.0
    %726 = vmatprep.subr.mxu0 0.0
    %727 = vmatpush1.msra.mxu0 %v694
    %728 = vmatprep.subr.mxu0 0.0
    %729 = vmatpush2.msra.mxu0 0.0
    %730 = vmatprep.subr.mxu0 0.0
    %731 = vmatpush2.msra.mxu0 0.0
    %732 = vmatprep.subr.mxu0 0.0
    %733 = vmatpush2.msra.mxu0 0.0
    %734 = vmatprep.subr.mxu0 0.0
    %735 = vmatpush2.msra.mxu0 0.0
    %736 = vmatprep.subr.mxu0 0.0
    %737 = vmatpush2.msra.mxu0 0.0
    %738 = vmatprep.subr.mxu0 0.0
    %739 = vmatpush2.msra.mxu0 0.0
    %740 = vmatprep.subr.mxu0 0.0
    %741 = vmatpush2.msra.mxu0 0.0
    %742 = vmatprep.subr.mxu0 0.0
    %743 = vmatpush2.msra.mxu0 0.0
    %744 = vmatprep.subr.mxu0 0.0
    %745 = vmatpush2.msra.mxu0 0.0
    %746 = vmatprep.subr.mxu0 0.0
    %747 = vmatpush2.msra.mxu0 0.0
    %748 = vmatprep.subr.mxu0 0.0
    %749 = vmatpush2.msra.mxu0 0.0
    %750 = vmatprep.subr.mxu0 0.0
    %751 = vmatpush2.msra.mxu0 0.0
    %752 = vmatprep.subr.mxu0 0.0
    %753 = vmatpush2.msra.mxu0 0.0
    %754 = vmatprep.subr.mxu0 0.0
    %755 = vmatpush2.msra.mxu0 0.0
    %756 = vmatprep.subr.mxu0 0.0
    %757 = vmatpush2.msra.mxu0 0.0
    %758 = vmatprep.subr.mxu0 0.0
    %759 = vmatpush2.msra.mxu0 0.0
    %760 = vmatprep.mubr.f32.mxu0 0.0
    %761 = vmatmul.mubr.f32.gmra.mxu0 %v681
    %v762 = vpop.f32.mrf.mxu0
    %v763 = vadd.f32 %v678, %v762
    %v764 = vpop.f32.mrf.mxu0
    %765 = vmatprep.mubr.f32.mxu0 0.0
    %766 = vmatmul.mubr.f32.gmra.mxu0 %v684
    %v767 = vpop.f32.mrf.mxu0
    %v768 = vadd.f32 %v678, %v767
    %v769 = vpop.f32.mrf.mxu0
    %770 = vmatprep.mubr.f32.mxu0 0.0
    %771 = vmatmul.mubr.f32.gmra.mxu0 %v687
    %v772 = vpop.f32.mrf.mxu0
    %v773 = vadd.f32 %v678, %v772
    %v774 = vpop.f32.mrf.mxu0
    %775 = vmatprep.mubr.f32.mxu0 0.0
    %776 = vmatmul.mubr.f32.gmra.mxu0 %v690
    %v777 = vpop.f32.mrf.mxu0
    %v778 = vadd.f32 %v678, %v777
    %v779 = vpop.f32.mrf.mxu0
    %780 = vdwg.mxu0
    %v781 = vld [vmem:[#allocation5 + $0x160] sm:$0xff]
    %v782 = vld [vmem:[#allocation5 + $0x168] sm:$0xff]
    %v783 = vld [vmem:[#allocation5 + $0x170] sm:$0xff]
    %v784 = vld [vmem:[#allocation5 + $0x178] sm:$0xff]
    %v785 = vld [vmem:[#allocation5 + $0x180] sm:$0xff]
    %v786 = vld [vmem:[#allocation5 + $0x188] sm:$0xff]
    %v787 = vld [vmem:[#allocation5 + $0x190] sm:$0x1]
    %v788 = vrot.slane %v763, 7
    %v789 = vrot.slane %v768, 7
    %v790 = vrot.slane %v773, 7
    %v791 = vrot.slane %v778, 7
    %v792 = vsel %vm576, %v790, %v791
    %v793 = vsel %vm576, %v789, %v790
    %v794 = vsel %vm576, %v788, %v789
    %v795 = vsel %vm576, %v791, %v788
    %v796 = vmul.f32 %v795, %v584
    %v797 = vmul.f32 %v794, %v589
    %v798 = vmul.f32 %v793, %v594
    %v799 = vmul.f32 %v792, %v599
    %v800 = vrot.slane %v763, 1
    %v801 = vrot.slane %v768, 1
    %v802 = vrot.slane %v773, 1
    %v803 = vrot.slane %v778, 1
    %v804 = vsel %vm609, %v802, %v803
    %v805 = vsel %vm609, %v801, %v802
    %v806 = vsel %vm609, %v800, %v801
    %v807 = vsel %vm609, %v803, %v800
    %v808 = vmul.f32 %v806, %v616
    %v809 = vmul.f32 %v805, %v620
    %v810 = vmul.f32 %v804, %v624
    %v811 = vmul.f32 %v807, %v628
    %816 = vrot.lane.b32.xlu0 %v763, 16
    %v817 = vpop.permute.xlu0 %816
    %818 = vrot.lane.b32.xlu0 %v768, 16
    %v819 = vpop.permute.xlu0 %818
    %820 = vrot.lane.b32.xlu0 %v773, 16
    %v821 = vpop.permute.xlu0 %820
    %822 = vrot.lane.b32.xlu0 %v778, 16
    %v823 = vpop.permute.xlu0 %822
    %832 = vrot.lane.b32.xlu0 %v808, 32
    %v833 = vpop.permute.xlu0 %832
    %834 = vrot.lane.b32.xlu0 %v809, 32
    %v835 = vpop.permute.xlu0 %834
    %836 = vrot.lane.b32.xlu0 %v810, 32
    %v837 = vpop.permute.xlu0 %836
    %838 = vrot.lane.b32.xlu0 %v811, 32
    %v839 = vpop.permute.xlu0 %838
    %v844 = vsel %vm50, %v796, %v817
    %v845 = vsel %vm50, %v797, %v819
    %v846 = vsel %vm50, %v798, %v821
    %v847 = vsel %vm50, %v799, %v823
    %v848 = vsel %vm273, %v844, %v833
    %v849 = vsel %vm273, %v845, %v835
    %v850 = vsel %vm273, %v846, %v837
    %v851 = vsel %vm273, %v847, %v839
    %v852 = vlaneseq
    %v853 = vshrl.u32 %v852, 7
    %v854 = vsub.s32 0, %v853
    %v855 = vrot.slane %v787, %v854
    %vm856 = vcmask 392192
    %v858 = vsel %vm856, %v848, 0
    %v861 = vsel %vm856, %v849, 0
    %v864 = vsel %vm856, %v850, 0
    %v867 = vsel %vm856, %v851, 0
    %869 = vmatprep.subr.mxu0 0.0
    %870 = vmatpush1.msra.mxu0 0.0
    %871 = vmatprep.subr.mxu0 0.0
    %872 = vmatpush1.msra.mxu0 0.0
    %873 = vmatprep.subr.mxu0 0.0
    %874 = vmatpush1.msra.mxu0 0.0
    %875 = vmatprep.subr.mxu0 0.0
    %876 = vmatpush1.msra.mxu0 0.0
    %877 = vmatprep.subr.mxu0 0.0
    %878 = vmatpush1.msra.mxu0 0.0
    %879 = vmatprep.subr.mxu0 0.0
    %880 = vmatpush1.msra.mxu0 0.0
    %881 = vmatprep.subr.mxu0 0.0
    %882 = vmatpush1.msra.mxu0 0.0
    %883 = vmatprep.subr.mxu0 0.0
    %884 = vmatpush1.msra.mxu0 0.0
    %885 = vmatprep.subr.mxu0 0.0
    %886 = vmatpush1.msra.mxu0 0.0
    %887 = vmatprep.subr.mxu0 0.0
    %888 = vmatpush1.msra.mxu0 0.0
    %889 = vmatprep.subr.mxu0 0.0
    %890 = vmatpush1.msra.mxu0 %v786
    %891 = vmatprep.subr.mxu0 0.0
    %892 = vmatpush1.msra.mxu0 %v785
    %893 = vmatprep.subr.mxu0 0.0
    %894 = vmatpush1.msra.mxu0 %v784
    %895 = vmatprep.subr.mxu0 0.0
    %896 = vmatpush1.msra.mxu0 %v783
    %897 = vmatprep.subr.mxu0 0.0
    %898 = vmatpush1.msra.mxu0 %v782
    %899 = vmatprep.subr.mxu0 0.0
    %900 = vmatpush1.msra.mxu0 %v781
    %901 = vmatprep.subr.mxu0 0.0
    %902 = vmatpush2.msra.mxu0 0.0
    %903 = vmatprep.subr.mxu0 0.0
    %904 = vmatpush2.msra.mxu0 0.0
    %905 = vmatprep.subr.mxu0 0.0
    %906 = vmatpush2.msra.mxu0 0.0
    %907 = vmatprep.subr.mxu0 0.0
    %908 = vmatpush2.msra.mxu0 0.0
    %909 = vmatprep.subr.mxu0 0.0
    %910 = vmatpush2.msra.mxu0 0.0
    %911 = vmatprep.subr.mxu0 0.0
    %912 = vmatpush2.msra.mxu0 0.0
    %913 = vmatprep.subr.mxu0 0.0
    %914 = vmatpush2.msra.mxu0 0.0
    %915 = vmatprep.subr.mxu0 0.0
    %916 = vmatpush2.msra.mxu0 0.0
    %917 = vmatprep.subr.mxu0 0.0
    %918 = vmatpush2.msra.mxu0 0.0
    %919 = vmatprep.subr.mxu0 0.0
    %920 = vmatpush2.msra.mxu0 0.0
    %921 = vmatprep.subr.mxu0 0.0
    %922 = vmatpush2.msra.mxu0 0.0
    %923 = vmatprep.subr.mxu0 0.0
    %924 = vmatpush2.msra.mxu0 0.0
    %925 = vmatprep.subr.mxu0 0.0
    %926 = vmatpush2.msra.mxu0 0.0
    %927 = vmatprep.subr.mxu0 0.0
    %928 = vmatpush2.msra.mxu0 0.0
    %929 = vmatprep.subr.mxu0 0.0
    %930 = vmatpush2.msra.mxu0 0.0
    %931 = vmatprep.subr.mxu0 0.0
    %932 = vmatpush2.msra.mxu0 0.0
    %933 = vmatprep.mubr.f32.mxu0 0.0
    %934 = vmatmul.mubr.f32.gmra.mxu0 %v858
    %v935 = vpop.f32.mrf.mxu0
    %v936 = vadd.f32 %v855, %v935
    %v937 = vpop.f32.mrf.mxu0
    %938 = vmatprep.mubr.f32.mxu0 0.0
    %939 = vmatmul.mubr.f32.gmra.mxu0 %v861
    %v940 = vpop.f32.mrf.mxu0
    %v941 = vadd.f32 %v855, %v940
    %v942 = vpop.f32.mrf.mxu0
    %943 = vmatprep.mubr.f32.mxu0 0.0
    %944 = vmatmul.mubr.f32.gmra.mxu0 %v864
    %v945 = vpop.f32.mrf.mxu0
    %v946 = vadd.f32 %v855, %v945
    %v947 = vpop.f32.mrf.mxu0
    %948 = vmatprep.mubr.f32.mxu0 0.0
    %949 = vmatmul.mubr.f32.gmra.mxu0 %v867
    %v950 = vpop.f32.mrf.mxu0
    %v951 = vadd.f32 %v855, %v950
    %v952 = vpop.f32.mrf.mxu0
    %953 = vdwg.mxu0
    %v954 = vmax.f32 %v936, 0.0
    %v955 = vmax.f32 %v941, 0.0
    %v956 = vmax.f32 %v946, 0.0
    %v957 = vmax.f32 %v951, 0.0
    %v958 = vld [vmem:[#allocation5 + $0x198] sm:$0xff]
    %v959 = vld [vmem:[#allocation5 + $0x1a0] sm:$0xff]
    %v960 = vld [vmem:[#allocation5 + $0x1a8] sm:$0xff]
    %v961 = vld [vmem:[#allocation5 + $0x1b0] sm:$0xff]
    %v962 = vld [vmem:[#allocation5 + $0x1b8] sm:$0xff]
    %v963 = vld [vmem:[#allocation5 + $0x1c0] sm:$0xff]
    %v964 = vld [vmem:[#allocation5 + $0x1c8] sm:$0x1]
    %v965 = vrot.slane %v954, 7
    %v966 = vrot.slane %v955, 7
    %v967 = vrot.slane %v956, 7
    %v968 = vrot.slane %v957, 7
    %v969 = vsel %vm576, %v967, %v968
    %v970 = vsel %vm576, %v966, %v967
    %v971 = vsel %vm576, %v965, %v966
    %v972 = vsel %vm576, %v968, %v965
    %v973 = vmul.f32 %v972, %v584
    %v974 = vmul.f32 %v971, %v589
    %v975 = vmul.f32 %v970, %v594
    %v976 = vmul.f32 %v969, %v599
    %v977 = vrot.slane %v954, 1
    %v978 = vrot.slane %v955, 1
    %v979 = vrot.slane %v956, 1
    %v980 = vrot.slane %v957, 1
    %v981 = vsel %vm609, %v979, %v980
    %v982 = vsel %vm609, %v978, %v979
    %v983 = vsel %vm609, %v977, %v978
    %v984 = vsel %vm609, %v980, %v977
    %v985 = vmul.f32 %v983, %v616
    %v986 = vmul.f32 %v982, %v620
    %v987 = vmul.f32 %v981, %v624
    %v988 = vmul.f32 %v984, %v628
    %993 = vrot.lane.b32.xlu0 %v954, 16
    %v994 = vpop.permute.xlu0 %993
    %995 = vrot.lane.b32.xlu0 %v955, 16
    %v996 = vpop.permute.xlu0 %995
    %997 = vrot.lane.b32.xlu0 %v956, 16
    %v998 = vpop.permute.xlu0 %997
    %999 = vrot.lane.b32.xlu0 %v957, 16
    %v1000 = vpop.permute.xlu0 %999
    %1009 = vrot.lane.b32.xlu0 %v985, 32
    %v1010 = vpop.permute.xlu0 %1009
    %1011 = vrot.lane.b32.xlu0 %v986, 32
    %v1012 = vpop.permute.xlu0 %1011
    %1013 = vrot.lane.b32.xlu0 %v987, 32
    %v1014 = vpop.permute.xlu0 %1013
    %1015 = vrot.lane.b32.xlu0 %v988, 32
    %v1016 = vpop.permute.xlu0 %1015
    %v1021 = vsel %vm50, %v973, %v994
    %v1022 = vsel %vm50, %v974, %v996
    %v1023 = vsel %vm50, %v975, %v998
    %v1024 = vsel %vm50, %v976, %v1000
    %v1025 = vsel %vm273, %v1021, %v1010
    %v1026 = vsel %vm273, %v1022, %v1012
    %v1027 = vsel %vm273, %v1023, %v1014
    %v1028 = vsel %vm273, %v1024, %v1016
    %v1029 = vlaneseq
    %v1030 = vshrl.u32 %v1029, 7
    %v1031 = vsub.s32 0, %v1030
    %v1032 = vrot.slane %v964, %v1031
    %v1034 = vsel %vm856, %v1025, 0
    %v1037 = vsel %vm856, %v1026, 0
    %v1040 = vsel %vm856, %v1027, 0
    %v1043 = vsel %vm856, %v1028, 0
    %1045 = vmatprep.subr.mxu0 0.0
    %1046 = vmatpush1.msra.mxu0 0.0
    %1047 = vmatprep.subr.mxu0 0.0
    %1048 = vmatpush1.msra.mxu0 0.0
    %1049 = vmatprep.subr.mxu0 0.0
    %1050 = vmatpush1.msra.mxu0 0.0
    %1051 = vmatprep.subr.mxu0 0.0
    %1052 = vmatpush1.msra.mxu0 0.0
    %1053 = vmatprep.subr.mxu0 0.0
    %1054 = vmatpush1.msra.mxu0 0.0
    %1055 = vmatprep.subr.mxu0 0.0
    %1056 = vmatpush1.msra.mxu0 0.0
    %1057 = vmatprep.subr.mxu0 0.0
    %1058 = vmatpush1.msra.mxu0 0.0
    %1059 = vmatprep.subr.mxu0 0.0
    %1060 = vmatpush1.msra.mxu0 0.0
    %1061 = vmatprep.subr.mxu0 0.0
    %1062 = vmatpush1.msra.mxu0 0.0
    %1063 = vmatprep.subr.mxu0 0.0
    %1064 = vmatpush1.msra.mxu0 0.0
    %1065 = vmatprep.subr.mxu0 0.0
    %1066 = vmatpush1.msra.mxu0 %v963
    %1067 = vmatprep.subr.mxu0 0.0
    %1068 = vmatpush1.msra.mxu0 %v962
    %1069 = vmatprep.subr.mxu0 0.0
    %1070 = vmatpush1.msra.mxu0 %v961
    %1071 = vmatprep.subr.mxu0 0.0
    %1072 = vmatpush1.msra.mxu0 %v960
    %1073 = vmatprep.subr.mxu0 0.0
    %1074 = vmatpush1.msra.mxu0 %v959
    %1075 = vmatprep.subr.mxu0 0.0
    %1076 = vmatpush1.msra.mxu0 %v958
    %1077 = vmatprep.subr.mxu0 0.0
    %1078 = vmatpush2.msra.mxu0 0.0
    %1079 = vmatprep.subr.mxu0 0.0
    %1080 = vmatpush2.msra.mxu0 0.0
    %1081 = vmatprep.subr.mxu0 0.0
    %1082 = vmatpush2.msra.mxu0 0.0
    %1083 = vmatprep.subr.mxu0 0.0
    %1084 = vmatpush2.msra.mxu0 0.0
    %1085 = vmatprep.subr.mxu0 0.0
    %1086 = vmatpush2.msra.mxu0 0.0
    %1087 = vmatprep.subr.mxu0 0.0
    %1088 = vmatpush2.msra.mxu0 0.0
    %1089 = vmatprep.subr.mxu0 0.0
    %1090 = vmatpush2.msra.mxu0 0.0
    %1091 = vmatprep.subr.mxu0 0.0
    %1092 = vmatpush2.msra.mxu0 0.0
    %1093 = vmatprep.subr.mxu0 0.0
    %1094 = vmatpush2.msra.mxu0 0.0
    %1095 = vmatprep.subr.mxu0 0.0
    %1096 = vmatpush2.msra.mxu0 0.0
    %1097 = vmatprep.subr.mxu0 0.0
    %1098 = vmatpush2.msra.mxu0 0.0
    %1099 = vmatprep.subr.mxu0 0.0
    %1100 = vmatpush2.msra.mxu0 0.0
    %1101 = vmatprep.subr.mxu0 0.0
    %1102 = vmatpush2.msra.mxu0 0.0
    %1103 = vmatprep.subr.mxu0 0.0
    %1104 = vmatpush2.msra.mxu0 0.0
    %1105 = vmatprep.subr.mxu0 0.0
    %1106 = vmatpush2.msra.mxu0 0.0
    %1107 = vmatprep.subr.mxu0 0.0
    %1108 = vmatpush2.msra.mxu0 0.0
    %1109 = vmatprep.mubr.f32.mxu0 0.0
    %1110 = vmatmul.mubr.f32.gmra.mxu0 %v1034
    %v1111 = vpop.f32.mrf.mxu0
    %v1112 = vadd.f32 %v1032, %v1111
    %v1113 = vpop.f32.mrf.mxu0
    %1114 = vmatprep.mubr.f32.mxu0 0.0
    %1115 = vmatmul.mubr.f32.gmra.mxu0 %v1037
    %v1116 = vpop.f32.mrf.mxu0
    %v1117 = vadd.f32 %v1032, %v1116
    %v1118 = vpop.f32.mrf.mxu0
    %1119 = vmatprep.mubr.f32.mxu0 0.0
    %1120 = vmatmul.mubr.f32.gmra.mxu0 %v1040
    %v1121 = vpop.f32.mrf.mxu0
    %v1122 = vadd.f32 %v1032, %v1121
    %v1123 = vpop.f32.mrf.mxu0
    %1124 = vmatprep.mubr.f32.mxu0 0.0
    %1125 = vmatmul.mubr.f32.gmra.mxu0 %v1043
    %v1126 = vpop.f32.mrf.mxu0
    %v1127 = vadd.f32 %v1032, %v1126
    %v1128 = vpop.f32.mrf.mxu0
    %1129 = vdwg.mxu0
    %v1130 = vmul.f32 %v1112, %v1112
    %v1131 = vmul.f32 %v1117, %v1117
    %v1132 = vmul.f32 %v1122, %v1122
    %v1133 = vmul.f32 %v1127, %v1127
    %1138 = vrot.lane.b32.xlu0 %v1130, 120
    %v1139 = vpop.permute.xlu0 %1138
    %1140 = vrot.lane.b32.xlu0 %v1131, 120
    %v1141 = vpop.permute.xlu0 %1140
    %1142 = vrot.lane.b32.xlu0 %v1132, 120
    %v1143 = vpop.permute.xlu0 %1142
    %1144 = vrot.lane.b32.xlu0 %v1133, 120
    %v1145 = vpop.permute.xlu0 %1144
    %v1150 = vadd.f32 %v1130, %v1139
    %v1151 = vadd.f32 %v1131, %v1141
    %v1152 = vadd.f32 %v1132, %v1143
    %v1153 = vadd.f32 %v1133, %v1145
    %v1154 = vrsqrt.pop %v1150
    %v1155 = vmul.f32 %v1150, %v1154
    %vm1156 = vcmp.eq.f32.partialorder %v1150, inf
    %v1157 = vsel %vm1156, %v1150, %v1155
    %vm1158 = vcmp.eq.f32.partialorder %v1150, 0.0
    %v1159 = vand.u32 %v1150, 2147483648
    %v1160 = vsel %vm1158, %v1159, %v1157
    %v1161 = vrsqrt.pop %v1151
    %v1162 = vmul.f32 %v1151, %v1161
    %vm1163 = vcmp.eq.f32.partialorder %v1151, inf
    %v1164 = vsel %vm1163, %v1151, %v1162
    %vm1165 = vcmp.eq.f32.partialorder %v1151, 0.0
    %v1166 = vand.u32 %v1151, 2147483648
    %v1167 = vsel %vm1165, %v1166, %v1164
    %v1168 = vrsqrt.pop %v1152
    %v1169 = vmul.f32 %v1152, %v1168
    %vm1170 = vcmp.eq.f32.partialorder %v1152, inf
    %v1171 = vsel %vm1170, %v1152, %v1169
    %vm1172 = vcmp.eq.f32.partialorder %v1152, 0.0
    %v1173 = vand.u32 %v1152, 2147483648
    %v1174 = vsel %vm1172, %v1173, %v1171
    %v1175 = vrsqrt.pop %v1153
    %v1176 = vmul.f32 %v1153, %v1175
    %vm1177 = vcmp.eq.f32.partialorder %v1153, inf
    %v1178 = vsel %vm1177, %v1153, %v1176
    %vm1179 = vcmp.eq.f32.partialorder %v1153, 0.0
    %v1180 = vand.u32 %v1153, 2147483648
    %v1181 = vsel %vm1179, %v1180, %v1178
    %v1182 = vld [vmem:[#allocation5 + $0xe0] sm:$0x3]
    %v1184 = vsel %vm273, %v1182, 0
    %1186 = vmatprep.subr.mxu0 0.0
    %1187 = vmatpush1.msra.mxu0 0.0
    %1188 = vmatprep.subr.mxu0 0.0
    %1189 = vmatpush1.msra.mxu0 0.0
    %1190 = vmatprep.subr.mxu0 0.0
    %1191 = vmatpush1.msra.mxu0 0.0
    %1192 = vmatprep.subr.mxu0 0.0
    %1193 = vmatpush1.msra.mxu0 0.0
    %1194 = vmatprep.subr.mxu0 0.0
    %1195 = vmatpush1.msra.mxu0 0.0
    %1196 = vmatprep.subr.mxu0 0.0
    %1197 = vmatpush1.msra.mxu0 0.0
    %1198 = vmatprep.subr.mxu0 0.0
    %1199 = vmatpush1.msra.mxu0 0.0
    %1200 = vmatprep.subr.mxu0 0.0
    %1201 = vmatpush1.msra.mxu0 0.0
    %1202 = vmatprep.subr.mxu0 0.0
    %1203 = vmatpush1.msra.mxu0 0.0
    %1204 = vmatprep.subr.mxu0 0.0
    %1205 = vmatpush1.msra.mxu0 0.0
    %1206 = vmatprep.subr.mxu0 0.0
    %1207 = vmatpush1.msra.mxu0 0.0
    %1208 = vmatprep.subr.mxu0 0.0
    %1209 = vmatpush1.msra.mxu0 0.0
    %1210 = vmatprep.subr.mxu0 0.0
    %1211 = vmatpush1.msra.mxu0 %v1181
    %1212 = vmatprep.subr.mxu0 0.0
    %1213 = vmatpush1.msra.mxu0 %v1174
    %1214 = vmatprep.subr.mxu0 0.0
    %1215 = vmatpush1.msra.mxu0 %v1167
    %1216 = vmatprep.subr.mxu0 0.0
    %1217 = vmatpush1.msra.mxu0 %v1160
    %1218 = vmatprep.subr.mxu0 0.0
    %1219 = vmatpush2.msra.mxu0 0.0
    %1220 = vmatprep.subr.mxu0 0.0
    %1221 = vmatpush2.msra.mxu0 0.0
    %1222 = vmatprep.subr.mxu0 0.0
    %1223 = vmatpush2.msra.mxu0 0.0
    %1224 = vmatprep.subr.mxu0 0.0
    %1225 = vmatpush2.msra.mxu0 0.0
    %1226 = vmatprep.subr.mxu0 0.0
    %1227 = vmatpush2.msra.mxu0 0.0
    %1228 = vmatprep.subr.mxu0 0.0
    %1229 = vmatpush2.msra.mxu0 0.0
    %1230 = vmatprep.subr.mxu0 0.0
    %1231 = vmatpush2.msra.mxu0 0.0
    %1232 = vmatprep.subr.mxu0 0.0
    %1233 = vmatpush2.msra.mxu0 0.0
    %1234 = vmatprep.subr.mxu0 0.0
    %1235 = vmatpush2.msra.mxu0 0.0
    %1236 = vmatprep.subr.mxu0 0.0
    %1237 = vmatpush2.msra.mxu0 0.0
    %1238 = vmatprep.subr.mxu0 0.0
    %1239 = vmatpush2.msra.mxu0 0.0
    %1240 = vmatprep.subr.mxu0 0.0
    %1241 = vmatpush2.msra.mxu0 0.0
    %1242 = vmatprep.subr.mxu0 0.0
    %1243 = vmatpush2.msra.mxu0 0.0
    %1244 = vmatprep.subr.mxu0 0.0
    %1245 = vmatpush2.msra.mxu0 0.0
    %1246 = vmatprep.subr.mxu0 0.0
    %1247 = vmatpush2.msra.mxu0 0.0
    %1248 = vmatprep.subr.mxu0 0.0
    %1249 = vmatpush2.msra.mxu0 0.0
    %1250 = vmatprep.mubr.f32.mxu0 0.0
    %1251 = vmatmul.mubr.f32.gmra.mxu0 %v1184
    %v1252 = vpop.f32.mrf.mxu0
    %v1253 = vadd.f32 0.0, %v1252
    %v1254 = vpop.f32.mrf.mxu0
    %1255 = vdwg.mxu0
    %v1256 = vmul.f32 %v1253, 0.0625
    %v1257 = vld [vmem:[#allocation5 + $0x278] sm:$0xff]
    %v1258 = vld [vmem:[#allocation5 + $0x280] sm:$0x1]
    %v1259 = vlaneseq
    %v1260 = vshrl.u32 %v1259, 7
    %v1261 = vsub.s32 0, %v1260
    %v1262 = vrot.slane %v1258, %v1261
    %vm1263 = vcmask 64512
    %v1265 = vsel %vm1263, %v1256, 0
    %1267 = vmatprep.subr.mxu0 0.0
    %1268 = vmatpush1.msra.mxu0 0.0
    %1269 = vmatprep.subr.mxu0 0.0
    %1270 = vmatpush1.msra.mxu0 0.0
    %1271 = vmatprep.subr.mxu0 0.0
    %1272 = vmatpush1.msra.mxu0 0.0
    %1273 = vmatprep.subr.mxu0 0.0
    %1274 = vmatpush1.msra.mxu0 0.0
    %1275 = vmatprep.subr.mxu0 0.0
    %1276 = vmatpush1.msra.mxu0 0.0
    %1277 = vmatprep.subr.mxu0 0.0
    %1278 = vmatpush1.msra.mxu0 0.0
    %1279 = vmatprep.subr.mxu0 0.0
    %1280 = vmatpush1.msra.mxu0 0.0
    %1281 = vmatprep.subr.mxu0 0.0
    %1282 = vmatpush1.msra.mxu0 0.0
    %1283 = vmatprep.subr.mxu0 0.0
    %1284 = vmatpush1.msra.mxu0 0.0
    %1285 = vmatprep.subr.mxu0 0.0
    %1286 = vmatpush1.msra.mxu0 0.0
    %1287 = vmatprep.subr.mxu0 0.0
    %1288 = vmatpush1.msra.mxu0 0.0
    %1289 = vmatprep.subr.mxu0 0.0
    %1290 = vmatpush1.msra.mxu0 0.0
    %1291 = vmatprep.subr.mxu0 0.0
    %1292 = vmatpush1.msra.mxu0 0.0
    %1293 = vmatprep.subr.mxu0 0.0
    %1294 = vmatpush1.msra.mxu0 0.0
    %1295 = vmatprep.subr.mxu0 0.0
    %1296 = vmatpush1.msra.mxu0 0.0
    %1297 = vmatprep.subr.mxu0 0.0
    %1298 = vmatpush1.msra.mxu0 %v1257
    %1299 = vmatprep.subr.mxu0 0.0
    %1300 = vmatpush2.msra.mxu0 0.0
    %1301 = vmatprep.subr.mxu0 0.0
    %1302 = vmatpush2.msra.mxu0 0.0
    %1303 = vmatprep.subr.mxu0 0.0
    %1304 = vmatpush2.msra.mxu0 0.0
    %1305 = vmatprep.subr.mxu0 0.0
    %1306 = vmatpush2.msra.mxu0 0.0
    %1307 = vmatprep.subr.mxu0 0.0
    %1308 = vmatpush2.msra.mxu0 0.0
    %1309 = vmatprep.subr.mxu0 0.0
    %1310 = vmatpush2.msra.mxu0 0.0
    %1311 = vmatprep.subr.mxu0 0.0
    %1312 = vmatpush2.msra.mxu0 0.0
    %1313 = vmatprep.subr.mxu0 0.0
    %1314 = vmatpush2.msra.mxu0 0.0
    %1315 = vmatprep.subr.mxu0 0.0
    %1316 = vmatpush2.msra.mxu0 0.0
    %1317 = vmatprep.subr.mxu0 0.0
    %1318 = vmatpush2.msra.mxu0 0.0
    %1319 = vmatprep.subr.mxu0 0.0
    %1320 = vmatpush2.msra.mxu0 0.0
    %1321 = vmatprep.subr.mxu0 0.0
    %1322 = vmatpush2.msra.mxu0 0.0
    %1323 = vmatprep.subr.mxu0 0.0
    %1324 = vmatpush2.msra.mxu0 0.0
    %1325 = vmatprep.subr.mxu0 0.0
    %1326 = vmatpush2.msra.mxu0 0.0
    %1327 = vmatprep.subr.mxu0 0.0
    %1328 = vmatpush2.msra.mxu0 0.0
    %1329 = vmatprep.subr.mxu0 0.0
    %1330 = vmatpush2.msra.mxu0 0.0
    %1331 = vmatprep.mubr.f32.mxu0 0.0
    %1332 = vmatmul.mubr.f32.gmra.mxu0 %v1265
    %v1333 = vpop.f32.mrf.mxu0
    %v1334 = vadd.f32 %v1262, %v1333
    %v1335 = vpop.f32.mrf.mxu0
    %1336 = vdwg.mxu0
    %vm1337 = vcmask 58368
    %v1338 = vsel %vm1337, %v1334, 0.0
    %v1339 = vrot.slane %v1338, 4
    %v1340 = vadd.f32 %v1338, %v1339
    %v1341 = vrot.slane %v1340, 2
    %v1342 = vadd.f32 %v1340, %v1341
    %v1343 = vrot.slane %v1342, 1
    %v1344 = vadd.f32 %v1342, %v1343
    %v1345 = vrcp.pop 2.0
    %v1346 = vmul.f32 %v1344, %v1345
    %v1347 = vsub.f32 %v1334, %v1346
    %v1348 = vmul.f32 %v1347, %v1347
    %v1349 = vsel %vm1337, %v1348, 0.0
    %v1350 = vrot.slane %v1349, 4
    %v1351 = vadd.f32 %v1349, %v1350
    %v1352 = vrot.slane %v1351, 2
    %v1353 = vadd.f32 %v1351, %v1352
    %v1354 = vrot.slane %v1353, 1
    %v1355 = vadd.f32 %v1353, %v1354
    %v1356 = vmul.f32 %v1355, %v1345
    %v1357 = vld [vmem:[#allocation5 + $0x288] sm:$0x1]
    %v1358 = vlaneseq
    %v1359 = vshrl.u32 %v1358, 7
    %v1360 = vsub.s32 0, %v1359
    %v1361 = vrot.slane %v1357, %v1360
    %v1362 = vmul.f32 %v1361, %v1347
    %v1363 = vadd.f32 %v1356, 1e-05
    %v1364 = vrsqrt.pop %v1363
    %v1365 = vmul.f32 %v1362, %v1364
    %v1366 = vld [vmem:[#allocation5 + $0x290] sm:$0x1]
    %v1367 = vlaneseq
    %v1368 = vshrl.u32 %v1367, 7
    %v1369 = vsub.s32 0, %v1368
    %v1370 = vrot.slane %v1366, %v1369
    %v1371 = vadd.f32 %v1365, %v1370
    %v1372 = vmax.f32 %v1371, 0.0
    %v1373 = vld [vmem:[#allocation5 + $0x298] sm:$0xff]
    %v1374 = vld [vmem:[#allocation5 + $0x2a0] sm:$0x1]
    %v1375 = vlaneseq
    %v1376 = vshrl.u32 %v1375, 7
    %v1377 = vsub.s32 0, %v1376
    %v1378 = vrot.slane %v1374, %v1377
    %v1380 = vsel %vm1263, %v1372, 0
    %1382 = vmatprep.subr.mxu0 0.0
    %1383 = vmatpush1.msra.mxu0 0.0
    %1384 = vmatprep.subr.mxu0 0.0
    %1385 = vmatpush1.msra.mxu0 0.0
    %1386 = vmatprep.subr.mxu0 0.0
    %1387 = vmatpush1.msra.mxu0 0.0
    %1388 = vmatprep.subr.mxu0 0.0
    %1389 = vmatpush1.msra.mxu0 0.0
    %1390 = vmatprep.subr.mxu0 0.0
    %1391 = vmatpush1.msra.mxu0 0.0
    %1392 = vmatprep.subr.mxu0 0.0
    %1393 = vmatpush1.msra.mxu0 0.0
    %1394 = vmatprep.subr.mxu0 0.0
    %1395 = vmatpush1.msra.mxu0 0.0
    %1396 = vmatprep.subr.mxu0 0.0
    %1397 = vmatpush1.msra.mxu0 0.0
    %1398 = vmatprep.subr.mxu0 0.0
    %1399 = vmatpush1.msra.mxu0 0.0
    %1400 = vmatprep.subr.mxu0 0.0
    %1401 = vmatpush1.msra.mxu0 0.0
    %1402 = vmatprep.subr.mxu0 0.0
    %1403 = vmatpush1.msra.mxu0 0.0
    %1404 = vmatprep.subr.mxu0 0.0
    %1405 = vmatpush1.msra.mxu0 0.0
    %1406 = vmatprep.subr.mxu0 0.0
    %1407 = vmatpush1.msra.mxu0 0.0
    %1408 = vmatprep.subr.mxu0 0.0
    %1409 = vmatpush1.msra.mxu0 0.0
    %1410 = vmatprep.subr.mxu0 0.0
    %1411 = vmatpush1.msra.mxu0 0.0
    %1412 = vmatprep.subr.mxu0 0.0
    %1413 = vmatpush1.msra.mxu0 %v1373
    %1414 = vmatprep.subr.mxu0 0.0
    %1415 = vmatpush2.msra.mxu0 0.0
    %1416 = vmatprep.subr.mxu0 0.0
    %1417 = vmatpush2.msra.mxu0 0.0
    %1418 = vmatprep.subr.mxu0 0.0
    %1419 = vmatpush2.msra.mxu0 0.0
    %1420 = vmatprep.subr.mxu0 0.0
    %1421 = vmatpush2.msra.mxu0 0.0
    %1422 = vmatprep.subr.mxu0 0.0
    %1423 = vmatpush2.msra.mxu0 0.0
    %1424 = vmatprep.subr.mxu0 0.0
    %1425 = vmatpush2.msra.mxu0 0.0
    %1426 = vmatprep.subr.mxu0 0.0
    %1427 = vmatpush2.msra.mxu0 0.0
    %1428 = vmatprep.subr.mxu0 0.0
    %1429 = vmatpush2.msra.mxu0 0.0
    %1430 = vmatprep.subr.mxu0 0.0
    %1431 = vmatpush2.msra.mxu0 0.0
    %1432 = vmatprep.subr.mxu0 0.0
    %1433 = vmatpush2.msra.mxu0 0.0
    %1434 = vmatprep.subr.mxu0 0.0
    %1435 = vmatpush2.msra.mxu0 0.0
    %1436 = vmatprep.subr.mxu0 0.0
    %1437 = vmatpush2.msra.mxu0 0.0
    %1438 = vmatprep.subr.mxu0 0.0
    %1439 = vmatpush2.msra.mxu0 0.0
    %1440 = vmatprep.subr.mxu0 0.0
    %1441 = vmatpush2.msra.mxu0 0.0
    %1442 = vmatprep.subr.mxu0 0.0
    %1443 = vmatpush2.msra.mxu0 0.0
    %1444 = vmatprep.subr.mxu0 0.0
    %1445 = vmatpush2.msra.mxu0 0.0
    %1446 = vmatprep.mubr.f32.mxu0 0.0
    %1447 = vmatmul.mubr.f32.gmra.mxu0 %v1380
    %v1448 = vpop.f32.mrf.mxu0
    %v1449 = vadd.f32 %v1378, %v1448
    %v1450 = vpop.f32.mrf.mxu0
    %1451 = vdwg.mxu0
    %v1452 = vxor.u32 %v1449, 2147483648
    %v1453 = vmul.f32 %v1452, 1.442695
    %v1454 = vpow.pop %v1453
    %v1455 = vadd.f32 %v1454, 1.0
    %v1456 = vrcp.pop %v1455
    %v1457 = vmul.f32 1.0, %v1456
    %v1458 = vmul.f32 %v1457, %v1256
    %v1460 = vsel %vm371, %v1458, 0
    %1462 = vmatprep.subr.mxu0 0.0
    %1463 = vmatpush1.msra.mxu0 0.0
    %1464 = vmatprep.subr.mxu0 0.0
    %1465 = vmatpush1.msra.mxu0 0.0
    %1466 = vmatprep.subr.mxu0 0.0
    %1467 = vmatpush1.msra.mxu0 0.0
    %1468 = vmatprep.subr.mxu0 0.0
    %1469 = vmatpush1.msra.mxu0 0.0
    %1470 = vmatprep.subr.mxu0 0.0
    %1471 = vmatpush1.msra.mxu0 0.0
    %1472 = vmatprep.subr.mxu0 0.0
    %1473 = vmatpush1.msra.mxu0 0.0
    %1474 = vmatprep.subr.mxu0 0.0
    %1475 = vmatpush1.msra.mxu0 0.0
    %1476 = vmatprep.subr.mxu0 0.0
    %1477 = vmatpush1.msra.mxu0 0.0
    %1478 = vmatprep.subr.mxu0 0.0
    %1479 = vmatpush1.msra.mxu0 0.0
    %1480 = vmatprep.subr.mxu0 0.0
    %1481 = vmatpush1.msra.mxu0 0.0
    %1482 = vmatprep.subr.mxu0 0.0
    %1483 = vmatpush1.msra.mxu0 0.0
    %1484 = vmatprep.subr.mxu0 0.0
    %1485 = vmatpush1.msra.mxu0 0.0
    %1486 = vmatprep.subr.mxu0 0.0
    %1487 = vmatpush1.msra.mxu0 0.0
    %1488 = vmatprep.subr.mxu0 0.0
    %1489 = vmatpush1.msra.mxu0 0.0
    %1490 = vmatprep.subr.mxu0 0.0
    %1491 = vmatpush1.msra.mxu0 0.0
    %1492 = vmatprep.subr.mxu0 0.0
    %1493 = vmatpush1.msra.mxu0 %v1460
    %1494 = vmatprep.subr.mxu0 0.0
    %1495 = vmatpush2.msra.mxu0 0.0
    %1496 = vmatprep.subr.mxu0 0.0
    %1497 = vmatpush2.msra.mxu0 0.0
    %1498 = vmatprep.subr.mxu0 0.0
    %1499 = vmatpush2.msra.mxu0 0.0
    %1500 = vmatprep.subr.mxu0 0.0
    %1501 = vmatpush2.msra.mxu0 0.0
    %1502 = vmatprep.subr.mxu0 0.0
    %1503 = vmatpush2.msra.mxu0 0.0
    %1504 = vmatprep.subr.mxu0 0.0
    %1505 = vmatpush2.msra.mxu0 0.0
    %1506 = vmatprep.subr.mxu0 0.0
    %1507 = vmatpush2.msra.mxu0 0.0
    %1508 = vmatprep.subr.mxu0 0.0
    %1509 = vmatpush2.msra.mxu0 0.0
    %1510 = vmatprep.subr.mxu0 0.0
    %1511 = vmatpush2.msra.mxu0 0.0
    %1512 = vmatprep.subr.mxu0 0.0
    %1513 = vmatpush2.msra.mxu0 0.0
    %1514 = vmatprep.subr.mxu0 0.0
    %1515 = vmatpush2.msra.mxu0 0.0
    %1516 = vmatprep.subr.mxu0 0.0
    %1517 = vmatpush2.msra.mxu0 0.0
    %1518 = vmatprep.subr.mxu0 0.0
    %1519 = vmatpush2.msra.mxu0 0.0
    %1520 = vmatprep.subr.mxu0 0.0
    %1521 = vmatpush2.msra.mxu0 0.0
    %1522 = vmatprep.subr.mxu0 0.0
    %1523 = vmatpush2.msra.mxu0 0.0
    %1524 = vmatprep.subr.mxu0 0.0
    %1525 = vmatpush2.msra.mxu0 0.0
    %1526 = vmatprep.mubr.f32.mxu0 0.0
    %1527 = vmatmul.mubr.f32.gmra.mxu0 %v360
    %v1528 = vpop.f32.mrf.mxu0
    %v1529 = vadd.f32 0.0, %v1528
    %v1530 = vpop.f32.mrf.mxu0
    %1531 = vmatprep.mubr.f32.mxu0 0.0
    %1532 = vmatmul.mubr.f32.gmra.mxu0 %v363
    %v1533 = vpop.f32.mrf.mxu0
    %v1534 = vadd.f32 0.0, %v1533
    %v1535 = vpop.f32.mrf.mxu0
    %1536 = vmatprep.mubr.f32.mxu0 0.0
    %1537 = vmatmul.mubr.f32.gmra.mxu0 %v366
    %v1538 = vpop.f32.mrf.mxu0
    %v1539 = vadd.f32 0.0, %v1538
    %v1540 = vpop.f32.mrf.mxu0
    %1541 = vmatprep.mubr.f32.mxu0 0.0
    %1542 = vmatmul.mubr.f32.gmra.mxu0 %v369
    %v1543 = vpop.f32.mrf.mxu0
    %v1544 = vadd.f32 0.0, %v1543
    %v1545 = vpop.f32.mrf.mxu0
    %1546 = vdwg.mxu0
    %v1547 = vsub.f32 %v1112, %v1529
    %v1548 = vsub.f32 %v1117, %v1534
    %v1549 = vsub.f32 %v1122, %v1539
    %v1550 = vsub.f32 %v1127, %v1544
    %v1551 = vmul.f32 %v1547, %v1547
    %v1552 = vmul.f32 %v1548, %v1548
    %v1553 = vmul.f32 %v1549, %v1549
    %v1554 = vmul.f32 %v1550, %v1550
    %v1555 = vadd.f32 %v1551, %v1139
    %v1556 = vadd.f32 %v1552, %v1141
    %v1557 = vadd.f32 %v1553, %v1143
    %v1558 = vadd.f32 %v1554, %v1145
    %v1559 = vadd.f32 %v1555, 1e-24
    %v1560 = vadd.f32 %v1556, 1e-24
    %v1561 = vadd.f32 %v1557, 1e-24
    %v1562 = vadd.f32 %v1558, 1e-24
    %v1563 = vrsqrt.pop %v1559
    %v1564 = vrsqrt.pop %v1560
    %v1565 = vrsqrt.pop %v1561
    %v1566 = vrsqrt.pop %v1562
    %v1567 = vstv %s42
    %v1568 = vmul.f32 %v1567, %v1563
    %v1569 = vmul.f32 %v1567, %v1564
    %v1570 = vmul.f32 %v1567, %v1565
    %v1571 = vmul.f32 %v1567, %v1566
    %v1572 = vsub.f32 1.0, %v1568
    %v1573 = vsub.f32 1.0, %v1569
    %v1574 = vsub.f32 1.0, %v1570
    %v1575 = vsub.f32 1.0, %v1571
    %v1576 = vmax.f32 %v1572, 0.0
    %v1577 = vmax.f32 %v1573, 0.0
    %v1578 = vmax.f32 %v1574, 0.0
    %v1579 = vmax.f32 %v1575, 0.0
    %v1580 = vmul.f32 %v1576, %v1547
    %v1581 = vmul.f32 %v1577, %v1548
    %v1582 = vmul.f32 %v1578, %v1549
    %v1583 = vmul.f32 %v1579, %v1550
    %1588 = vrot.lane.b32.xlu0 %v1112, 120
    %v1589 = vpop.permute.xlu0 %1588
    %1590 = vrot.lane.b32.xlu0 %v1117, 120
    %v1591 = vpop.permute.xlu0 %1590
    %1592 = vrot.lane.b32.xlu0 %v1122, 120
    %v1593 = vpop.permute.xlu0 %1592
    %1594 = vrot.lane.b32.xlu0 %v1127, 120
    %v1595 = vpop.permute.xlu0 %1594
    %v1600 = vmul.f32 %v1576, %v1589
    %v1601 = vmul.f32 %v1577, %v1591
    %v1602 = vmul.f32 %v1578, %v1593
    %v1603 = vmul.f32 %v1579, %v1595
    %1608 = vrot.lane.b32.xlu0 %v1600, 8
    %v1609 = vpop.permute.xlu0 %1608
    %1610 = vrot.lane.b32.xlu0 %v1601, 8
    %v1611 = vpop.permute.xlu0 %1610
    %1612 = vrot.lane.b32.xlu0 %v1602, 8
    %v1613 = vpop.permute.xlu0 %1612
    %1614 = vrot.lane.b32.xlu0 %v1603, 8
    %v1615 = vpop.permute.xlu0 %1614
    %v1620 = vsel %vm1263, %v1580, %v1609
    %v1621 = vsel %vm1263, %v1581, %v1611
    %v1622 = vsel %vm1263, %v1582, %v1613
    %v1623 = vsel %vm1263, %v1583, %v1615
    %v1624 = vld [vmem:[#allocation5 + $0x1d0] sm:$0xff]
    %v1625 = vld [vmem:[#allocation5 + $0x1d8] sm:$0xff]
    %v1626 = vld [vmem:[#allocation5 + $0x1e0] sm:$0xff]
    %v1627 = vld [vmem:[#allocation5 + $0x1e8] sm:$0xff]
    %v1628 = vld [vmem:[#allocation5 + $0x1f0] sm:$0xff]
    %v1629 = vld [vmem:[#allocation5 + $0x1f8] sm:$0xff]
    %v1630 = vld [vmem:[#allocation5 + $0x200] sm:$0x1]
    %v1631 = vrot.slane %v1620, 7
    %v1632 = vrot.slane %v1621, 7
    %v1633 = vrot.slane %v1622, 7
    %v1634 = vrot.slane %v1623, 7
    %v1635 = vsel %vm576, %v1633, %v1634
    %v1636 = vsel %vm576, %v1632, %v1633
    %v1637 = vsel %vm576, %v1631, %v1632
    %v1638 = vsel %vm576, %v1634, %v1631
    %v1639 = vmul.f32 %v1638, %v584
    %v1640 = vmul.f32 %v1637, %v589
    %v1641 = vmul.f32 %v1636, %v594
    %v1642 = vmul.f32 %v1635, %v599
    %v1643 = vrot.slane %v1620, 1
    %v1644 = vrot.slane %v1621, 1
    %v1645 = vrot.slane %v1622, 1
    %v1646 = vrot.slane %v1623, 1
    %v1647 = vsel %vm609, %v1645, %v1646
    %v1648 = vsel %vm609, %v1644, %v1645
    %v1649 = vsel %vm609, %v1643, %v1644
    %v1650 = vsel %vm609, %v1646, %v1643
    %v1651 = vmul.f32 %v1649, %v616
    %v1652 = vmul.f32 %v1648, %v620
    %v1653 = vmul.f32 %v1647, %v624
    %v1654 = vmul.f32 %v1650, %v628
    %1659 = vrot.lane.b32.xlu0 %v1620, 16
    %v1660 = vpop.permute.xlu0 %1659
    %1661 = vrot.lane.b32.xlu0 %v1621, 16
    %v1662 = vpop.permute.xlu0 %1661
    %1663 = vrot.lane.b32.xlu0 %v1622, 16
    %v1664 = vpop.permute.xlu0 %1663
    %1665 = vrot.lane.b32.xlu0 %v1623, 16
    %v1666 = vpop.permute.xlu0 %1665
    %1675 = vrot.lane.b32.xlu0 %v1651, 32
    %v1676 = vpop.permute.xlu0 %1675
    %1677 = vrot.lane.b32.xlu0 %v1652, 32
    %v1678 = vpop.permute.xlu0 %1677
    %1679 = vrot.lane.b32.xlu0 %v1653, 32
    %v1680 = vpop.permute.xlu0 %1679
    %1681 = vrot.lane.b32.xlu0 %v1654, 32
    %v1682 = vpop.permute.xlu0 %1681
    %v1687 = vsel %vm50, %v1639, %v1660
    %v1688 = vsel %vm50, %v1640, %v1662
    %v1689 = vsel %vm50, %v1641, %v1664
    %v1690 = vsel %vm50, %v1642, %v1666
    %v1691 = vsel %vm273, %v1687, %v1676
    %v1692 = vsel %vm273, %v1688, %v1678
    %v1693 = vsel %vm273, %v1689, %v1680
    %v1694 = vsel %vm273, %v1690, %v1682
    %v1695 = vlaneseq
    %v1696 = vshrl.u32 %v1695, 7
    %v1697 = vsub.s32 0, %v1696
    %v1698 = vrot.slane %v1630, %v1697
    %v1700 = vsel %vm856, %v1691, 0
    %v1703 = vsel %vm856, %v1692, 0
    %v1706 = vsel %vm856, %v1693, 0
    %v1709 = vsel %vm856, %v1694, 0
    %1711 = vmatprep.subr.mxu0 0.0
    %1712 = vmatpush1.msra.mxu0 0.0
    %1713 = vmatprep.subr.mxu0 0.0
    %1714 = vmatpush1.msra.mxu0 0.0
    %1715 = vmatprep.subr.mxu0 0.0
    %1716 = vmatpush1.msra.mxu0 0.0
    %1717 = vmatprep.subr.mxu0 0.0
    %1718 = vmatpush1.msra.mxu0 0.0
    %1719 = vmatprep.subr.mxu0 0.0
    %1720 = vmatpush1.msra.mxu0 0.0
    %1721 = vmatprep.subr.mxu0 0.0
    %1722 = vmatpush1.msra.mxu0 0.0
    %1723 = vmatprep.subr.mxu0 0.0
    %1724 = vmatpush1.msra.mxu0 0.0
    %1725 = vmatprep.subr.mxu0 0.0
    %1726 = vmatpush1.msra.mxu0 0.0
    %1727 = vmatprep.subr.mxu0 0.0
    %1728 = vmatpush1.msra.mxu0 0.0
    %1729 = vmatprep.subr.mxu0 0.0
    %1730 = vmatpush1.msra.mxu0 0.0
    %1731 = vmatprep.subr.mxu0 0.0
    %1732 = vmatpush1.msra.mxu0 %v1629
    %1733 = vmatprep.subr.mxu0 0.0
    %1734 = vmatpush1.msra.mxu0 %v1628
    %1735 = vmatprep.subr.mxu0 0.0
    %1736 = vmatpush1.msra.mxu0 %v1627
    %1737 = vmatprep.subr.mxu0 0.0
    %1738 = vmatpush1.msra.mxu0 %v1626
    %1739 = vmatprep.subr.mxu0 0.0
    %1740 = vmatpush1.msra.mxu0 %v1625
    %1741 = vmatprep.subr.mxu0 0.0
    %1742 = vmatpush1.msra.mxu0 %v1624
    %1743 = vmatprep.subr.mxu0 0.0
    %1744 = vmatpush2.msra.mxu0 0.0
    %1745 = vmatprep.subr.mxu0 0.0
    %1746 = vmatpush2.msra.mxu0 0.0
    %1747 = vmatprep.subr.mxu0 0.0
    %1748 = vmatpush2.msra.mxu0 0.0
    %1749 = vmatprep.subr.mxu0 0.0
    %1750 = vmatpush2.msra.mxu0 0.0
    %1751 = vmatprep.subr.mxu0 0.0
    %1752 = vmatpush2.msra.mxu0 0.0
    %1753 = vmatprep.subr.mxu0 0.0
    %1754 = vmatpush2.msra.mxu0 0.0
    %1755 = vmatprep.subr.mxu0 0.0
    %1756 = vmatpush2.msra.mxu0 0.0
    %1757 = vmatprep.subr.mxu0 0.0
    %1758 = vmatpush2.msra.mxu0 0.0
    %1759 = vmatprep.subr.mxu0 0.0
    %1760 = vmatpush2.msra.mxu0 0.0
    %1761 = vmatprep.subr.mxu0 0.0
    %1762 = vmatpush2.msra.mxu0 0.0
    %1763 = vmatprep.subr.mxu0 0.0
    %1764 = vmatpush2.msra.mxu0 0.0
    %1765 = vmatprep.subr.mxu0 0.0
    %1766 = vmatpush2.msra.mxu0 0.0
    %1767 = vmatprep.subr.mxu0 0.0
    %1768 = vmatpush2.msra.mxu0 0.0
    %1769 = vmatprep.subr.mxu0 0.0
    %1770 = vmatpush2.msra.mxu0 0.0
    %1771 = vmatprep.subr.mxu0 0.0
    %1772 = vmatpush2.msra.mxu0 0.0
    %1773 = vmatprep.subr.mxu0 0.0
    %1774 = vmatpush2.msra.mxu0 0.0
    %1775 = vmatprep.mubr.f32.mxu0 0.0
    %1776 = vmatmul.mubr.f32.gmra.mxu0 %v1700
    %v1777 = vpop.f32.mrf.mxu0
    %v1778 = vadd.f32 %v1698, %v1777
    %v1779 = vpop.f32.mrf.mxu0
    %1780 = vmatprep.mubr.f32.mxu0 0.0
    %1781 = vmatmul.mubr.f32.gmra.mxu0 %v1703
    %v1782 = vpop.f32.mrf.mxu0
    %v1783 = vadd.f32 %v1698, %v1782
    %v1784 = vpop.f32.mrf.mxu0
    %1785 = vmatprep.mubr.f32.mxu0 0.0
    %1786 = vmatmul.mubr.f32.gmra.mxu0 %v1706
    %v1787 = vpop.f32.mrf.mxu0
    %v1788 = vadd.f32 %v1698, %v1787
    %v1789 = vpop.f32.mrf.mxu0
    %1790 = vmatprep.mubr.f32.mxu0 0.0
    %1791 = vmatmul.mubr.f32.gmra.mxu0 %v1709
    %v1792 = vpop.f32.mrf.mxu0
    %v1793 = vadd.f32 %v1698, %v1792
    %v1794 = vpop.f32.mrf.mxu0
    %1795 = vdwg.mxu0
    %v1796 = vmax.f32 %v1778, 0.0
    %v1797 = vmax.f32 %v1783, 0.0
    %v1798 = vmax.f32 %v1788, 0.0
    %v1799 = vmax.f32 %v1793, 0.0
    %v1800 = vld [vmem:[#allocation5 + $0x208] sm:$0xff]
    %v1801 = vld [vmem:[#allocation5 + $0x210] sm:$0xff]
    %v1802 = vld [vmem:[#allocation5 + $0x218] sm:$0xff]
    %v1803 = vld [vmem:[#allocation5 + $0x220] sm:$0xff]
    %v1804 = vld [vmem:[#allocation5 + $0x228] sm:$0xff]
    %v1805 = vld [vmem:[#allocation5 + $0x230] sm:$0xff]
    %v1806 = vld [vmem:[#allocation5 + $0x238] sm:$0x1]
    %v1807 = vrot.slane %v1796, 7
    %v1808 = vrot.slane %v1797, 7
    %v1809 = vrot.slane %v1798, 7
    %v1810 = vrot.slane %v1799, 7
    %v1811 = vsel %vm576, %v1809, %v1810
    %v1812 = vsel %vm576, %v1808, %v1809
    %v1813 = vsel %vm576, %v1807, %v1808
    %v1814 = vsel %vm576, %v1810, %v1807
    %v1815 = vmul.f32 %v1814, %v584
    %v1816 = vmul.f32 %v1813, %v589
    %v1817 = vmul.f32 %v1812, %v594
    %v1818 = vmul.f32 %v1811, %v599
    %v1819 = vrot.slane %v1796, 1
    %v1820 = vrot.slane %v1797, 1
    %v1821 = vrot.slane %v1798, 1
    %v1822 = vrot.slane %v1799, 1
    %v1823 = vsel %vm609, %v1821, %v1822
    %v1824 = vsel %vm609, %v1820, %v1821
    %v1825 = vsel %vm609, %v1819, %v1820
    %v1826 = vsel %vm609, %v1822, %v1819
    %v1827 = vmul.f32 %v1825, %v616
    %v1828 = vmul.f32 %v1824, %v620
    %v1829 = vmul.f32 %v1823, %v624
    %v1830 = vmul.f32 %v1826, %v628
    %1835 = vrot.lane.b32.xlu0 %v1796, 16
    %v1836 = vpop.permute.xlu0 %1835
    %1837 = vrot.lane.b32.xlu0 %v1797, 16
    %v1838 = vpop.permute.xlu0 %1837
    %1839 = vrot.lane.b32.xlu0 %v1798, 16
    %v1840 = vpop.permute.xlu0 %1839
    %1841 = vrot.lane.b32.xlu0 %v1799, 16
    %v1842 = vpop.permute.xlu0 %1841
    %1851 = vrot.lane.b32.xlu0 %v1827, 32
    %v1852 = vpop.permute.xlu0 %1851
    %1853 = vrot.lane.b32.xlu0 %v1828, 32
    %v1854 = vpop.permute.xlu0 %1853
    %1855 = vrot.lane.b32.xlu0 %v1829, 32
    %v1856 = vpop.permute.xlu0 %1855
    %1857 = vrot.lane.b32.xlu0 %v1830, 32
    %v1858 = vpop.permute.xlu0 %1857
    %v1863 = vsel %vm50, %v1815, %v1836
    %v1864 = vsel %vm50, %v1816, %v1838
    %v1865 = vsel %vm50, %v1817, %v1840
    %v1866 = vsel %vm50, %v1818, %v1842
    %v1867 = vsel %vm273, %v1863, %v1852
    %v1868 = vsel %vm273, %v1864, %v1854
    %v1869 = vsel %vm273, %v1865, %v1856
    %v1870 = vsel %vm273, %v1866, %v1858
    %v1871 = vlaneseq
    %v1872 = vshrl.u32 %v1871, 7
    %v1873 = vsub.s32 0, %v1872
    %v1874 = vrot.slane %v1806, %v1873
    %v1876 = vsel %vm856, %v1867, 0
    %v1879 = vsel %vm856, %v1868, 0
    %v1882 = vsel %vm856, %v1869, 0
    %v1885 = vsel %vm856, %v1870, 0
    %1887 = vmatprep.subr.mxu0 0.0
    %1888 = vmatpush1.msra.mxu0 0.0
    %1889 = vmatprep.subr.mxu0 0.0
    %1890 = vmatpush1.msra.mxu0 0.0
    %1891 = vmatprep.subr.mxu0 0.0
    %1892 = vmatpush1.msra.mxu0 0.0
    %1893 = vmatprep.subr.mxu0 0.0
    %1894 = vmatpush1.msra.mxu0 0.0
    %1895 = vmatprep.subr.mxu0 0.0
    %1896 = vmatpush1.msra.mxu0 0.0
    %1897 = vmatprep.subr.mxu0 0.0
    %1898 = vmatpush1.msra.mxu0 0.0
    %1899 = vmatprep.subr.mxu0 0.0
    %1900 = vmatpush1.msra.mxu0 0.0
    %1901 = vmatprep.subr.mxu0 0.0
    %1902 = vmatpush1.msra.mxu0 0.0
    %1903 = vmatprep.subr.mxu0 0.0
    %1904 = vmatpush1.msra.mxu0 0.0
    %1905 = vmatprep.subr.mxu0 0.0
    %1906 = vmatpush1.msra.mxu0 0.0
    %1907 = vmatprep.subr.mxu0 0.0
    %1908 = vmatpush1.msra.mxu0 %v1805
    %1909 = vmatprep.subr.mxu0 0.0
    %1910 = vmatpush1.msra.mxu0 %v1804
    %1911 = vmatprep.subr.mxu0 0.0
    %1912 = vmatpush1.msra.mxu0 %v1803
    %1913 = vmatprep.subr.mxu0 0.0
    %1914 = vmatpush1.msra.mxu0 %v1802
    %1915 = vmatprep.subr.mxu0 0.0
    %1916 = vmatpush1.msra.mxu0 %v1801
    %1917 = vmatprep.subr.mxu0 0.0
    %1918 = vmatpush1.msra.mxu0 %v1800
    %1919 = vmatprep.subr.mxu0 0.0
    %1920 = vmatpush2.msra.mxu0 0.0
    %1921 = vmatprep.subr.mxu0 0.0
    %1922 = vmatpush2.msra.mxu0 0.0
    %1923 = vmatprep.subr.mxu0 0.0
    %1924 = vmatpush2.msra.mxu0 0.0
    %1925 = vmatprep.subr.mxu0 0.0
    %1926 = vmatpush2.msra.mxu0 0.0
    %1927 = vmatprep.subr.mxu0 0.0
    %1928 = vmatpush2.msra.mxu0 0.0
    %1929 = vmatprep.subr.mxu0 0.0
    %1930 = vmatpush2.msra.mxu0 0.0
    %1931 = vmatprep.subr.mxu0 0.0
    %1932 = vmatpush2.msra.mxu0 0.0
    %1933 = vmatprep.subr.mxu0 0.0
    %1934 = vmatpush2.msra.mxu0 0.0
    %1935 = vmatprep.subr.mxu0 0.0
    %1936 = vmatpush2.msra.mxu0 0.0
    %1937 = vmatprep.subr.mxu0 0.0
    %1938 = vmatpush2.msra.mxu0 0.0
    %1939 = vmatprep.subr.mxu0 0.0
    %1940 = vmatpush2.msra.mxu0 0.0
    %1941 = vmatprep.subr.mxu0 0.0
    %1942 = vmatpush2.msra.mxu0 0.0
    %1943 = vmatprep.subr.mxu0 0.0
    %1944 = vmatpush2.msra.mxu0 0.0
    %1945 = vmatprep.subr.mxu0 0.0
    %1946 = vmatpush2.msra.mxu0 0.0
    %1947 = vmatprep.subr.mxu0 0.0
    %1948 = vmatpush2.msra.mxu0 0.0
    %1949 = vmatprep.subr.mxu0 0.0
    %1950 = vmatpush2.msra.mxu0 0.0
    %1951 = vmatprep.mubr.f32.mxu0 0.0
    %1952 = vmatmul.mubr.f32.gmra.mxu0 %v1876
    %v1953 = vpop.f32.mrf.mxu0
    %v1954 = vadd.f32 %v1874, %v1953
    %v1955 = vpop.f32.mrf.mxu0
    %1956 = vmatprep.mubr.f32.mxu0 0.0
    %1957 = vmatmul.mubr.f32.gmra.mxu0 %v1879
    %v1958 = vpop.f32.mrf.mxu0
    %v1959 = vadd.f32 %v1874, %v1958
    %v1960 = vpop.f32.mrf.mxu0
    %1961 = vmatprep.mubr.f32.mxu0 0.0
    %1962 = vmatmul.mubr.f32.gmra.mxu0 %v1882
    %v1963 = vpop.f32.mrf.mxu0
    %v1964 = vadd.f32 %v1874, %v1963
    %v1965 = vpop.f32.mrf.mxu0
    %1966 = vmatprep.mubr.f32.mxu0 0.0
    %1967 = vmatmul.mubr.f32.gmra.mxu0 %v1885
    %v1968 = vpop.f32.mrf.mxu0
    %v1969 = vadd.f32 %v1874, %v1968
    %v1970 = vpop.f32.mrf.mxu0
    %1971 = vdwg.mxu0
    %v1972 = vld [vmem:[#allocation5 + $0x240] sm:$0xff]
    %v1973 = vld [vmem:[#allocation5 + $0x248] sm:$0xff]
    %v1974 = vld [vmem:[#allocation5 + $0x250] sm:$0xff]
    %v1975 = vld [vmem:[#allocation5 + $0x258] sm:$0xff]
    %v1976 = vld [vmem:[#allocation5 + $0x260] sm:$0xff]
    %v1977 = vld [vmem:[#allocation5 + $0x268] sm:$0xff]
    %v1978 = vld [vmem:[#allocation5 + $0x270] sm:$0x1]
    %v1979 = vrot.slane %v1954, 7
    %v1980 = vrot.slane %v1959, 7
    %v1981 = vrot.slane %v1964, 7
    %v1982 = vrot.slane %v1969, 7
    %v1983 = vsel %vm576, %v1981, %v1982
    %v1984 = vsel %vm576, %v1980, %v1981
    %v1985 = vsel %vm576, %v1979, %v1980
    %v1986 = vsel %vm576, %v1982, %v1979
    %v1987 = vmul.f32 %v1986, %v584
    %v1988 = vmul.f32 %v1985, %v589
    %v1989 = vmul.f32 %v1984, %v594
    %v1990 = vmul.f32 %v1983, %v599
    %v1991 = vrot.slane %v1954, 1
    %v1992 = vrot.slane %v1959, 1
    %v1993 = vrot.slane %v1964, 1
    %v1994 = vrot.slane %v1969, 1
    %v1995 = vsel %vm609, %v1993, %v1994
    %v1996 = vsel %vm609, %v1992, %v1993
    %v1997 = vsel %vm609, %v1991, %v1992
    %v1998 = vsel %vm609, %v1994, %v1991
    %v1999 = vmul.f32 %v1997, %v616
    %v2000 = vmul.f32 %v1996, %v620
    %v2001 = vmul.f32 %v1995, %v624
    %v2002 = vmul.f32 %v1998, %v628
    %2007 = vrot.lane.b32.xlu0 %v1954, 16
    %v2008 = vpop.permute.xlu0 %2007
    %2009 = vrot.lane.b32.xlu0 %v1959, 16
    %v2010 = vpop.permute.xlu0 %2009
    %2011 = vrot.lane.b32.xlu0 %v1964, 16
    %v2012 = vpop.permute.xlu0 %2011
    %2013 = vrot.lane.b32.xlu0 %v1969, 16
    %v2014 = vpop.permute.xlu0 %2013
    %2023 = vrot.lane.b32.xlu0 %v1999, 32
    %v2024 = vpop.permute.xlu0 %2023
    %2025 = vrot.lane.b32.xlu0 %v2000, 32
    %v2026 = vpop.permute.xlu0 %2025
    %2027 = vrot.lane.b32.xlu0 %v2001, 32
    %v2028 = vpop.permute.xlu0 %2027
    %2029 = vrot.lane.b32.xlu0 %v2002, 32
    %v2030 = vpop.permute.xlu0 %2029
    %v2035 = vsel %vm50, %v1987, %v2008
    %v2036 = vsel %vm50, %v1988, %v2010
    %v2037 = vsel %vm50, %v1989, %v2012
    %v2038 = vsel %vm50, %v1990, %v2014
    %v2039 = vsel %vm273, %v2035, %v2024
    %v2040 = vsel %vm273, %v2036, %v2026
    %v2041 = vsel %vm273, %v2037, %v2028
    %v2042 = vsel %vm273, %v2038, %v2030
    %v2043 = vlaneseq
    %v2044 = vshrl.u32 %v2043, 7
    %v2045 = vsub.s32 0, %v2044
    %v2046 = vrot.slane %v1978, %v2045
    %v2048 = vsel %vm856, %v2039, 0
    %v2051 = vsel %vm856, %v2040, 0
    %v2054 = vsel %vm856, %v2041, 0
    %v2057 = vsel %vm856, %v2042, 0
    %2059 = vmatprep.subr.mxu0 0.0
    %2060 = vmatpush1.msra.mxu0 0.0
    %2061 = vmatprep.subr.mxu0 0.0
    %2062 = vmatpush1.msra.mxu0 0.0
    %2063 = vmatprep.subr.mxu0 0.0
    %2064 = vmatpush1.msra.mxu0 0.0
    %2065 = vmatprep.subr.mxu0 0.0
    %2066 = vmatpush1.msra.mxu0 0.0
    %2067 = vmatprep.subr.mxu0 0.0
    %2068 = vmatpush1.msra.mxu0 0.0
    %2069 = vmatprep.subr.mxu0 0.0
    %2070 = vmatpush1.msra.mxu0 0.0
    %2071 = vmatprep.subr.mxu0 0.0
    %2072 = vmatpush1.msra.mxu0 0.0
    %2073 = vmatprep.subr.mxu0 0.0
    %2074 = vmatpush1.msra.mxu0 0.0
    %2075 = vmatprep.subr.mxu0 0.0
    %2076 = vmatpush1.msra.mxu0 0.0
    %2077 = vmatprep.subr.mxu0 0.0
    %2078 = vmatpush1.msra.mxu0 0.0
    %2079 = vmatprep.subr.mxu0 0.0
    %2080 = vmatpush1.msra.mxu0 %v1977
    %2081 = vmatprep.subr.mxu0 0.0
    %2082 = vmatpush1.msra.mxu0 %v1976
    %2083 = vmatprep.subr.mxu0 0.0
    %2084 = vmatpush1.msra.mxu0 %v1975
    %2085 = vmatprep.subr.mxu0 0.0
    %2086 = vmatpush1.msra.mxu0 %v1974
    %2087 = vmatprep.subr.mxu0 0.0
    %2088 = vmatpush1.msra.mxu0 %v1973
    %2089 = vmatprep.subr.mxu0 0.0
    %2090 = vmatpush1.msra.mxu0 %v1972
    %2091 = vmatprep.subr.mxu0 0.0
    %2092 = vmatpush2.msra.mxu0 0.0
    %2093 = vmatprep.subr.mxu0 0.0
    %2094 = vmatpush2.msra.mxu0 0.0
    %2095 = vmatprep.subr.mxu0 0.0
    %2096 = vmatpush2.msra.mxu0 0.0
    %2097 = vmatprep.subr.mxu0 0.0
    %2098 = vmatpush2.msra.mxu0 0.0
    %2099 = vmatprep.subr.mxu0 0.0
    %2100 = vmatpush2.msra.mxu0 0.0
    %2101 = vmatprep.subr.mxu0 0.0
    %2102 = vmatpush2.msra.mxu0 0.0
    %2103 = vmatprep.subr.mxu0 0.0
    %2104 = vmatpush2.msra.mxu0 0.0
    %2105 = vmatprep.subr.mxu0 0.0
    %2106 = vmatpush2.msra.mxu0 0.0
    %2107 = vmatprep.subr.mxu0 0.0
    %2108 = vmatpush2.msra.mxu0 0.0
    %2109 = vmatprep.subr.mxu0 0.0
    %2110 = vmatpush2.msra.mxu0 0.0
    %2111 = vmatprep.subr.mxu0 0.0
    %2112 = vmatpush2.msra.mxu0 0.0
    %2113 = vmatprep.subr.mxu0 0.0
    %2114 = vmatpush2.msra.mxu0 0.0
    %2115 = vmatprep.subr.mxu0 0.0
    %2116 = vmatpush2.msra.mxu0 0.0
    %2117 = vmatprep.subr.mxu0 0.0
    %2118 = vmatpush2.msra.mxu0 0.0
    %2119 = vmatprep.subr.mxu0 0.0
    %2120 = vmatpush2.msra.mxu0 0.0
    %2121 = vmatprep.subr.mxu0 0.0
    %2122 = vmatpush2.msra.mxu0 0.0
    %2123 = vmatprep.mubr.f32.mxu0 0.0
    %2124 = vmatmul.mubr.f32.gmra.mxu0 %v2048
    %v2125 = vpop.f32.mrf.mxu0
    %v2126 = vadd.f32 %v2046, %v2125
    %v2127 = vpop.f32.mrf.mxu0
    %2128 = vmatprep.mubr.f32.mxu0 0.0
    %2129 = vmatmul.mubr.f32.gmra.mxu0 %v2051
    %v2130 = vpop.f32.mrf.mxu0
    %v2131 = vadd.f32 %v2046, %v2130
    %v2132 = vpop.f32.mrf.mxu0
    %2133 = vmatprep.mubr.f32.mxu0 0.0
    %2134 = vmatmul.mubr.f32.gmra.mxu0 %v2054
    %v2135 = vpop.f32.mrf.mxu0
    %v2136 = vadd.f32 %v2046, %v2135
    %v2137 = vpop.f32.mrf.mxu0
    %2138 = vmatprep.mubr.f32.mxu0 0.0
    %2139 = vmatmul.mubr.f32.gmra.mxu0 %v2057
    %v2140 = vpop.f32.mrf.mxu0
    %v2141 = vadd.f32 %v2046, %v2140
    %v2142 = vpop.f32.mrf.mxu0
    %2143 = vdwg.mxu0
    %v2144 = vld [vmem:[#allocation5 + $0xe8] sm:$0x3]
    %v2146 = vsel %vm358, %v2126, 0
    %v2149 = vsel %vm358, %v2131, 0
    %v2152 = vsel %vm358, %v2136, 0
    %v2155 = vsel %vm358, %v2141, 0
    %v2158 = vsel %vm371, %v2144, 0
    %2160 = vmatprep.subr.mxu0 0.0
    %2161 = vmatpush1.msra.mxu0 0.0
    %2162 = vmatprep.subr.mxu0 0.0
    %2163 = vmatpush1.msra.mxu0 0.0
    %2164 = vmatprep.subr.mxu0 0.0
    %2165 = vmatpush1.msra.mxu0 0.0
    %2166 = vmatprep.subr.mxu0 0.0
    %2167 = vmatpush1.msra.mxu0 0.0
    %2168 = vmatprep.subr.mxu0 0.0
    %2169 = vmatpush1.msra.mxu0 0.0
    %2170 = vmatprep.subr.mxu0 0.0
    %2171 = vmatpush1.msra.mxu0 0.0
    %2172 = vmatprep.subr.mxu0 0.0
    %2173 = vmatpush1.msra.mxu0 0.0
    %2174 = vmatprep.subr.mxu0 0.0
    %2175 = vmatpush1.msra.mxu0 0.0
    %2176 = vmatprep.subr.mxu0 0.0
    %2177 = vmatpush1.msra.mxu0 0.0
    %2178 = vmatprep.subr.mxu0 0.0
    %2179 = vmatpush1.msra.mxu0 0.0
    %2180 = vmatprep.subr.mxu0 0.0
    %2181 = vmatpush1.msra.mxu0 0.0
    %2182 = vmatprep.subr.mxu0 0.0
    %2183 = vmatpush1.msra.mxu0 0.0
    %2184 = vmatprep.subr.mxu0 0.0
    %2185 = vmatpush1.msra.mxu0 0.0
    %2186 = vmatprep.subr.mxu0 0.0
    %2187 = vmatpush1.msra.mxu0 0.0
    %2188 = vmatprep.subr.mxu0 0.0
    %2189 = vmatpush1.msra.mxu0 0.0
    %2190 = vmatprep.subr.mxu0 0.0
    %2191 = vmatpush1.msra.mxu0 %v2158
    %2192 = vmatprep.subr.mxu0 0.0
    %2193 = vmatpush2.msra.mxu0 0.0
    %2194 = vmatprep.subr.mxu0 0.0
    %2195 = vmatpush2.msra.mxu0 0.0
    %2196 = vmatprep.subr.mxu0 0.0
    %2197 = vmatpush2.msra.mxu0 0.0
    %2198 = vmatprep.subr.mxu0 0.0
    %2199 = vmatpush2.msra.mxu0 0.0
    %2200 = vmatprep.subr.mxu0 0.0
    %2201 = vmatpush2.msra.mxu0 0.0
    %2202 = vmatprep.subr.mxu0 0.0
    %2203 = vmatpush2.msra.mxu0 0.0
    %2204 = vmatprep.subr.mxu0 0.0
    %2205 = vmatpush2.msra.mxu0 0.0
    %2206 = vmatprep.subr.mxu0 0.0
    %2207 = vmatpush2.msra.mxu0 0.0
    %2208 = vmatprep.subr.mxu0 0.0
    %2209 = vmatpush2.msra.mxu0 0.0
    %2210 = vmatprep.subr.mxu0 0.0
    %2211 = vmatpush2.msra.mxu0 0.0
    %2212 = vmatprep.subr.mxu0 0.0
    %2213 = vmatpush2.msra.mxu0 0.0
    %2214 = vmatprep.subr.mxu0 0.0
    %2215 = vmatpush2.msra.mxu0 0.0
    %2216 = vmatprep.subr.mxu0 0.0
    %2217 = vmatpush2.msra.mxu0 0.0
    %2218 = vmatprep.subr.mxu0 0.0
    %2219 = vmatpush2.msra.mxu0 0.0
    %2220 = vmatprep.subr.mxu0 0.0
    %2221 = vmatpush2.msra.mxu0 0.0
    %2222 = vmatprep.subr.mxu0 0.0
    %2223 = vmatpush2.msra.mxu0 0.0
    %2224 = vmatprep.mubr.f32.mxu0 0.0
    %2225 = vmatmul.mubr.f32.gmra.mxu0 %v2146
    %v2226 = vpop.f32.mrf.mxu0
    %v2227 = vadd.f32 0.0, %v2226
    %v2228 = vpop.f32.mrf.mxu0
    %2229 = vmatprep.mubr.f32.mxu0 0.0
    %2230 = vmatmul.mubr.f32.gmra.mxu0 %v2149
    %v2231 = vpop.f32.mrf.mxu0
    %v2232 = vadd.f32 0.0, %v2231
    %v2233 = vpop.f32.mrf.mxu0
    %2234 = vmatprep.mubr.f32.mxu0 0.0
    %2235 = vmatmul.mubr.f32.gmra.mxu0 %v2152
    %v2236 = vpop.f32.mrf.mxu0
    %v2237 = vadd.f32 0.0, %v2236
    %v2238 = vpop.f32.mrf.mxu0
    %2239 = vmatprep.mubr.f32.mxu0 0.0
    %2240 = vmatmul.mubr.f32.gmra.mxu0 %v2155
    %v2241 = vpop.f32.mrf.mxu0
    %v2242 = vadd.f32 0.0, %v2241
    %v2243 = vpop.f32.mrf.mxu0
    %2244 = vdwg.mxu0
    %v2245 = vmul.f32 %v2227, %v459
    %v2246 = vmul.f32 %v2232, %v460
    %v2247 = vmul.f32 %v2237, %v461
    %v2248 = vmul.f32 %v2242, %v462
    %2249 = vmatprep.subr.mxu0 0.0
    %2250 = vmatpush1.msra.mxu0 0.0
    %2251 = vmatprep.subr.mxu0 0.0
    %2252 = vmatpush1.msra.mxu0 0.0
    %2253 = vmatprep.subr.mxu0 0.0
    %2254 = vmatpush1.msra.mxu0 0.0
    %2255 = vmatprep.subr.mxu0 0.0
    %2256 = vmatpush1.msra.mxu0 0.0
    %2257 = vmatprep.subr.mxu0 0.0
    %2258 = vmatpush1.msra.mxu0 0.0
    %2259 = vmatprep.subr.mxu0 0.0
    %2260 = vmatpush1.msra.mxu0 0.0
    %2261 = vmatprep.subr.mxu0 0.0
    %2262 = vmatpush1.msra.mxu0 0.0
    %2263 = vmatprep.subr.mxu0 0.0
    %2264 = vmatpush1.msra.mxu0 0.0
    %2265 = vmatprep.subr.mxu0 0.0
    %2266 = vmatpush1.msra.mxu0 0.0
    %2267 = vmatprep.subr.mxu0 0.0
    %2268 = vmatpush1.msra.mxu0 0.0
    %2269 = vmatprep.subr.mxu0 0.0
    %2270 = vmatpush1.msra.mxu0 0.0
    %2271 = vmatprep.subr.mxu0 0.0
    %2272 = vmatpush1.msra.mxu0 0.0
    %2273 = vmatprep.subr.mxu0 0.0
    %2274 = vmatpush1.msra.mxu0 %v2248
    %2275 = vmatprep.subr.mxu0 0.0
    %2276 = vmatpush1.msra.mxu0 %v2247
    %2277 = vmatprep.subr.mxu0 0.0
    %2278 = vmatpush1.msra.mxu0 %v2246
    %2279 = vmatprep.subr.mxu0 0.0
    %2280 = vmatpush1.msra.mxu0 %v2245
    %2281 = vmatprep.subr.mxu0 0.0
    %2282 = vmatpush2.msra.mxu0 0.0
    %2283 = vmatprep.subr.mxu0 0.0
    %2284 = vmatpush2.msra.mxu0 0.0
    %2285 = vmatprep.subr.mxu0 0.0
    %2286 = vmatpush2.msra.mxu0 0.0
    %2287 = vmatprep.subr.mxu0 0.0
    %2288 = vmatpush2.msra.mxu0 0.0
    %2289 = vmatprep.subr.mxu0 0.0
    %2290 = vmatpush2.msra.mxu0 0.0
    %2291 = vmatprep.subr.mxu0 0.0
    %2292 = vmatpush2.msra.mxu0 0.0
    %2293 = vmatprep.subr.mxu0 0.0
    %2294 = vmatpush2.msra.mxu0 0.0
    %2295 = vmatprep.subr.mxu0 0.0
    %2296 = vmatpush2.msra.mxu0 0.0
    %2297 = vmatprep.subr.mxu0 0.0
    %2298 = vmatpush2.msra.mxu0 0.0
    %2299 = vmatprep.subr.mxu0 0.0
    %2300 = vmatpush2.msra.mxu0 0.0
    %2301 = vmatprep.subr.mxu0 0.0
    %2302 = vmatpush2.msra.mxu0 0.0
    %2303 = vmatprep.subr.mxu0 0.0
    %2304 = vmatpush2.msra.mxu0 0.0
    %2305 = vmatprep.subr.mxu0 0.0
    %2306 = vmatpush2.msra.mxu0 0.0
    %2307 = vmatprep.subr.mxu0 0.0
    %2308 = vmatpush2.msra.mxu0 0.0
    %2309 = vmatprep.subr.mxu0 0.0
    %2310 = vmatpush2.msra.mxu0 0.0
    %2311 = vmatprep.subr.mxu0 0.0
    %2312 = vmatpush2.msra.mxu0 0.0
    %2313 = vmatprep.mubr.f32.mxu0 0.0
    %2314 = vmatmul.mubr.f32.gmra.mxu0 %v1184
    %v2315 = vpop.f32.mrf.mxu0
    %v2316 = vadd.f32 0.0, %v2315
    %v2317 = vpop.f32.mrf.mxu0
    %2318 = vdwg.mxu0
    %v2319 = vadd.f32 %v242, %v2316
    %v2320 = vld [vmem:[#allocation5 + $0x70] sm:$0xff]
    %v2321 = vld [vmem:[#allocation5 + $0x78] sm:$0xff]
    %v2322 = vld [vmem:[#allocation5 + $0x80] sm:$0xff]
    %v2323 = vld [vmem:[#allocation5 + $0x88] sm:$0xff]
    %v2325 = vsel %vm273, %v2319, 0
    %2327 = vmatprep.subr.mxu0 0.0
    %2328 = vmatpush1.msra.mxu0 0.0
    %2329 = vmatprep.subr.mxu0 0.0
    %2330 = vmatpush1.msra.mxu0 0.0
    %2331 = vmatprep.subr.mxu0 0.0
    %2332 = vmatpush1.msra.mxu0 0.0
    %2333 = vmatprep.subr.mxu0 0.0
    %2334 = vmatpush1.msra.mxu0 0.0
    %2335 = vmatprep.subr.mxu0 0.0
    %2336 = vmatpush1.msra.mxu0 0.0
    %2337 = vmatprep.subr.mxu0 0.0
    %2338 = vmatpush1.msra.mxu0 0.0
    %2339 = vmatprep.subr.mxu0 0.0
    %2340 = vmatpush1.msra.mxu0 0.0
    %2341 = vmatprep.subr.mxu0 0.0
    %2342 = vmatpush1.msra.mxu0 0.0
    %2343 = vmatprep.subr.mxu0 0.0
    %2344 = vmatpush1.msra.mxu0 0.0
    %2345 = vmatprep.subr.mxu0 0.0
    %2346 = vmatpush1.msra.mxu0 0.0
    %2347 = vmatprep.subr.mxu0 0.0
    %2348 = vmatpush1.msra.mxu0 0.0
    %2349 = vmatprep.subr.mxu0 0.0
    %2350 = vmatpush1.msra.mxu0 0.0
    %2351 = vmatprep.subr.mxu0 0.0
    %2352 = vmatpush1.msra.mxu0 %v2323
    %2353 = vmatprep.subr.mxu0 0.0
    %2354 = vmatpush1.msra.mxu0 %v2322
    %2355 = vmatprep.subr.mxu0 0.0
    %2356 = vmatpush1.msra.mxu0 %v2321
    %2357 = vmatprep.subr.mxu0 0.0
    %2358 = vmatpush1.msra.mxu0 %v2320
    %2359 = vmatprep.subr.mxu0 0.0
    %2360 = vmatpush2.msra.mxu0 0.0
    %2361 = vmatprep.subr.mxu0 0.0
    %2362 = vmatpush2.msra.mxu0 0.0
    %2363 = vmatprep.subr.mxu0 0.0
    %2364 = vmatpush2.msra.mxu0 0.0
    %2365 = vmatprep.subr.mxu0 0.0
    %2366 = vmatpush2.msra.mxu0 0.0
    %2367 = vmatprep.subr.mxu0 0.0
    %2368 = vmatpush2.msra.mxu0 0.0
    %2369 = vmatprep.subr.mxu0 0.0
    %2370 = vmatpush2.msra.mxu0 0.0
    %2371 = vmatprep.subr.mxu0 0.0
    %2372 = vmatpush2.msra.mxu0 0.0
    %2373 = vmatprep.subr.mxu0 0.0
    %2374 = vmatpush2.msra.mxu0 0.0
    %2375 = vmatprep.subr.mxu0 0.0
    %2376 = vmatpush2.msra.mxu0 0.0
    %2377 = vmatprep.subr.mxu0 0.0
    %2378 = vmatpush2.msra.mxu0 0.0
    %2379 = vmatprep.subr.mxu0 0.0
    %2380 = vmatpush2.msra.mxu0 0.0
    %2381 = vmatprep.subr.mxu0 0.0
    %2382 = vmatpush2.msra.mxu0 0.0
    %2383 = vmatprep.subr.mxu0 0.0
    %2384 = vmatpush2.msra.mxu0 0.0
    %2385 = vmatprep.subr.mxu0 0.0
    %2386 = vmatpush2.msra.mxu0 0.0
    %2387 = vmatprep.subr.mxu0 0.0
    %2388 = vmatpush2.msra.mxu0 0.0
    %2389 = vmatprep.subr.mxu0 0.0
    %2390 = vmatpush2.msra.mxu0 0.0
    %2391 = vmatprep.mubr.f32.mxu0 0.0
    %2392 = vmatmul.mubr.f32.gmra.mxu0 %v2325
    %v2393 = vpop.f32.mrf.mxu0
    %v2394 = vadd.f32 0.0, %v2393
    %v2395 = vpop.f32.mrf.mxu0
    %2396 = vdwg.mxu0
    %2398 = vrot.lane.b32.xlu0 %v2394, 32
    %v2399 = vpop.permute.xlu0 %2398
    %v2401 = vsub.f32 %v44, %v2399
    %v2402 = vld [vmem:[#allocation5 + $0xb0] sm:$0xff]
    %v2403 = vld [vmem:[#allocation5 + $0xb8] sm:$0xff]
    %2405 = vrot.lane.b32.xlu0 %v2401, 96
    %v2406 = vpop.permute.xlu0 %2405
    %v2407 = vsel %vm50, %v2406, 0
    %2409 = vmatprep.subr.mxu0 0.0
    %2410 = vmatpush1.msra.mxu0 0.0
    %2411 = vmatprep.subr.mxu0 0.0
    %2412 = vmatpush1.msra.mxu0 0.0
    %2413 = vmatprep.subr.mxu0 0.0
    %2414 = vmatpush1.msra.mxu0 0.0
    %2415 = vmatprep.subr.mxu0 0.0
    %2416 = vmatpush1.msra.mxu0 0.0
    %2417 = vmatprep.subr.mxu0 0.0
    %2418 = vmatpush1.msra.mxu0 0.0
    %2419 = vmatprep.subr.mxu0 0.0
    %2420 = vmatpush1.msra.mxu0 0.0
    %2421 = vmatprep.subr.mxu0 0.0
    %2422 = vmatpush1.msra.mxu0 0.0
    %2423 = vmatprep.subr.mxu0 0.0
    %2424 = vmatpush1.msra.mxu0 0.0
    %2425 = vmatprep.subr.mxu0 0.0
    %2426 = vmatpush1.msra.mxu0 0.0
    %2427 = vmatprep.subr.mxu0 0.0
    %2428 = vmatpush1.msra.mxu0 0.0
    %2429 = vmatprep.subr.mxu0 0.0
    %2430 = vmatpush1.msra.mxu0 0.0
    %2431 = vmatprep.subr.mxu0 0.0
    %2432 = vmatpush1.msra.mxu0 0.0
    %2433 = vmatprep.subr.mxu0 0.0
    %2434 = vmatpush1.msra.mxu0 0.0
    %2435 = vmatprep.subr.mxu0 0.0
    %2436 = vmatpush1.msra.mxu0 0.0
    %2437 = vmatprep.subr.mxu0 0.0
    %2438 = vmatpush1.msra.mxu0 %v2403
    %2439 = vmatprep.subr.mxu0 0.0
    %2440 = vmatpush1.msra.mxu0 %v2402
    %2441 = vmatprep.subr.mxu0 0.0
    %2442 = vmatpush2.msra.mxu0 0.0
    %2443 = vmatprep.subr.mxu0 0.0
    %2444 = vmatpush2.msra.mxu0 0.0
    %2445 = vmatprep.subr.mxu0 0.0
    %2446 = vmatpush2.msra.mxu0 0.0
    %2447 = vmatprep.subr.mxu0 0.0
    %2448 = vmatpush2.msra.mxu0 0.0
    %2449 = vmatprep.subr.mxu0 0.0
    %2450 = vmatpush2.msra.mxu0 0.0
    %2451 = vmatprep.subr.mxu0 0.0
    %2452 = vmatpush2.msra.mxu0 0.0
    %2453 = vmatprep.subr.mxu0 0.0
    %2454 = vmatpush2.msra.mxu0 0.0
    %2455 = vmatprep.subr.mxu0 0.0
    %2456 = vmatpush2.msra.mxu0 0.0
    %2457 = vmatprep.subr.mxu0 0.0
    %2458 = vmatpush2.msra.mxu0 0.0
    %2459 = vmatprep.subr.mxu0 0.0
    %2460 = vmatpush2.msra.mxu0 0.0
    %2461 = vmatprep.subr.mxu0 0.0
    %2462 = vmatpush2.msra.mxu0 0.0
    %2463 = vmatprep.subr.mxu0 0.0
    %2464 = vmatpush2.msra.mxu0 0.0
    %2465 = vmatprep.subr.mxu0 0.0
    %2466 = vmatpush2.msra.mxu0 0.0
    %2467 = vmatprep.subr.mxu0 0.0
    %2468 = vmatpush2.msra.mxu0 0.0
    %2469 = vmatprep.subr.mxu0 0.0
    %2470 = vmatpush2.msra.mxu0 0.0
    %2471 = vmatprep.subr.mxu0 0.0
    %2472 = vmatpush2.msra.mxu0 0.0
    %2473 = vmatprep.mubr.f32.mxu0 0.0
    %2474 = vmatmul.mubr.f32.gmra.mxu0 %v2407
    %v2475 = vpop.f32.mrf.mxu0
    %v2476 = vadd.f32 0.0, %v2475
    %v2477 = vpop.f32.mrf.mxu0
    %2478 = vdwg.mxu0
    %v2479 = vld [vmem:[#allocation5 + $0x90] sm:$0xff]
    %v2480 = vld [vmem:[#allocation5 + $0x98] sm:$0xff]
    %v2481 = vld [vmem:[#allocation5 + $0xa0] sm:$0xff]
    %v2482 = vld [vmem:[#allocation5 + $0xa8] sm:$0xff]
    %v2484 = vsel %vm273, %v2476, 0
    %2486 = vmatprep.subr.mxu0 0.0
    %2487 = vmatpush1.msra.mxu0 0.0
    %2488 = vmatprep.subr.mxu0 0.0
    %2489 = vmatpush1.msra.mxu0 0.0
    %2490 = vmatprep.subr.mxu0 0.0
    %2491 = vmatpush1.msra.mxu0 0.0
    %2492 = vmatprep.subr.mxu0 0.0
    %2493 = vmatpush1.msra.mxu0 0.0
    %2494 = vmatprep.subr.mxu0 0.0
    %2495 = vmatpush1.msra.mxu0 0.0
    %2496 = vmatprep.subr.mxu0 0.0
    %2497 = vmatpush1.msra.mxu0 0.0
    %2498 = vmatprep.subr.mxu0 0.0
    %2499 = vmatpush1.msra.mxu0 0.0
    %2500 = vmatprep.subr.mxu0 0.0
    %2501 = vmatpush1.msra.mxu0 0.0
    %2502 = vmatprep.subr.mxu0 0.0
    %2503 = vmatpush1.msra.mxu0 0.0
    %2504 = vmatprep.subr.mxu0 0.0
    %2505 = vmatpush1.msra.mxu0 0.0
    %2506 = vmatprep.subr.mxu0 0.0
    %2507 = vmatpush1.msra.mxu0 0.0
    %2508 = vmatprep.subr.mxu0 0.0
    %2509 = vmatpush1.msra.mxu0 0.0
    %2510 = vmatprep.subr.mxu0 0.0
    %2511 = vmatpush1.msra.mxu0 %v2482
    %2512 = vmatprep.subr.mxu0 0.0
    %2513 = vmatpush1.msra.mxu0 %v2481
    %2514 = vmatprep.subr.mxu0 0.0
    %2515 = vmatpush1.msra.mxu0 %v2480
    %2516 = vmatprep.subr.mxu0 0.0
    %2517 = vmatpush1.msra.mxu0 %v2479
    %2518 = vmatprep.subr.mxu0 0.0
    %2519 = vmatpush2.msra.mxu0 0.0
    %2520 = vmatprep.subr.mxu0 0.0
    %2521 = vmatpush2.msra.mxu0 0.0
    %2522 = vmatprep.subr.mxu0 0.0
    %2523 = vmatpush2.msra.mxu0 0.0
    %2524 = vmatprep.subr.mxu0 0.0
    %2525 = vmatpush2.msra.mxu0 0.0
    %2526 = vmatprep.subr.mxu0 0.0
    %2527 = vmatpush2.msra.mxu0 0.0
    %2528 = vmatprep.subr.mxu0 0.0
    %2529 = vmatpush2.msra.mxu0 0.0
    %2530 = vmatprep.subr.mxu0 0.0
    %2531 = vmatpush2.msra.mxu0 0.0
    %2532 = vmatprep.subr.mxu0 0.0
    %2533 = vmatpush2.msra.mxu0 0.0
    %2534 = vmatprep.subr.mxu0 0.0
    %2535 = vmatpush2.msra.mxu0 0.0
    %2536 = vmatprep.subr.mxu0 0.0
    %2537 = vmatpush2.msra.mxu0 0.0
    %2538 = vmatprep.subr.mxu0 0.0
    %2539 = vmatpush2.msra.mxu0 0.0
    %2540 = vmatprep.subr.mxu0 0.0
    %2541 = vmatpush2.msra.mxu0 0.0
    %2542 = vmatprep.subr.mxu0 0.0
    %2543 = vmatpush2.msra.mxu0 0.0
    %2544 = vmatprep.subr.mxu0 0.0
    %2545 = vmatpush2.msra.mxu0 0.0
    %2546 = vmatprep.subr.mxu0 0.0
    %2547 = vmatpush2.msra.mxu0 0.0
    %2548 = vmatprep.subr.mxu0 0.0
    %2549 = vmatpush2.msra.mxu0 0.0
    %2550 = vmatprep.mubr.f32.mxu0 0.0
    %2551 = vmatmul.mubr.f32.gmra.mxu0 %v2484
    %v2552 = vpop.f32.mrf.mxu0
    %v2553 = vadd.f32 0.0, %v2552
    %v2554 = vpop.f32.mrf.mxu0
    %2555 = vdwg.mxu0
    %2557 = vrot.lane.b32.xlu0 %v2553, 32
    %v2558 = vpop.permute.xlu0 %2557
    %v2560 = vsub.f32 %v2401, %v2558
    %v2561 = vsub.f32 0.0, %v2319
    %v2562 = vsel %vm50, %v2319, %v2561
    %v2563 = vmul.f32 %v2562, %v2476
    %2565 = vrot.lane.b32.xlu0 %v2563, 112
    %v2566 = vpop.permute.xlu0 %2565
    %v2568 = vsub.f32 %v2563, %v2566
    %2569 = vrot.lane.b32.xlu0 %v2476, 112
    %v2570 = vpop.permute.xlu0 %2569
    %v2572 = vmul.f32 %v2562, %v2570
    %2573 = vrot.lane.b32.xlu0 %v2476, 16
    %v2574 = vpop.permute.xlu0 %2573
    %v2576 = vmul.f32 %v2562, %v2574
    %2578 = vrot.lane.b32.xlu0 %v2576, 112
    %v2579 = vpop.permute.xlu0 %2578
    %v2581 = vadd.f32 %v2572, %v2579
    %2583 = vrot.lane.b32.xlu0 %v2581, 16
    %v2584 = vpop.permute.xlu0 %2583
    %v2586 = vsel %vm50, %v2568, %v2584
    %v2587 = vmul.f32 %v240, %v2586
    %v2589 = vsel %vm371, %v2587, 0
    %2591 = vmatprep.subr.mxu0 0.0
    %2592 = vmatpush1.msra.mxu0 0.0
    %2593 = vmatprep.subr.mxu0 0.0
    %2594 = vmatpush1.msra.mxu0 0.0
    %2595 = vmatprep.subr.mxu0 0.0
    %2596 = vmatpush1.msra.mxu0 0.0
    %2597 = vmatprep.subr.mxu0 0.0
    %2598 = vmatpush1.msra.mxu0 0.0
    %2599 = vmatprep.subr.mxu0 0.0
    %2600 = vmatpush1.msra.mxu0 0.0
    %2601 = vmatprep.subr.mxu0 0.0
    %2602 = vmatpush1.msra.mxu0 0.0
    %2603 = vmatprep.subr.mxu0 0.0
    %2604 = vmatpush1.msra.mxu0 0.0
    %2605 = vmatprep.subr.mxu0 0.0
    %2606 = vmatpush1.msra.mxu0 0.0
    %2607 = vmatprep.subr.mxu0 0.0
    %2608 = vmatpush1.msra.mxu0 0.0
    %2609 = vmatprep.subr.mxu0 0.0
    %2610 = vmatpush1.msra.mxu0 0.0
    %2611 = vmatprep.subr.mxu0 0.0
    %2612 = vmatpush1.msra.mxu0 0.0
    %2613 = vmatprep.subr.mxu0 0.0
    %2614 = vmatpush1.msra.mxu0 0.0
    %2615 = vmatprep.subr.mxu0 0.0
    %2616 = vmatpush1.msra.mxu0 0.0
    %2617 = vmatprep.subr.mxu0 0.0
    %2618 = vmatpush1.msra.mxu0 0.0
    %2619 = vmatprep.subr.mxu0 0.0
    %2620 = vmatpush1.msra.mxu0 0.0
    %2621 = vmatprep.subr.mxu0 0.0
    %2622 = vmatpush1.msra.mxu0 %v2589
    %2623 = vmatprep.subr.mxu0 0.0
    %2624 = vmatpush2.msra.mxu0 0.0
    %2625 = vmatprep.subr.mxu0 0.0
    %2626 = vmatpush2.msra.mxu0 0.0
    %2627 = vmatprep.subr.mxu0 0.0
    %2628 = vmatpush2.msra.mxu0 0.0
    %2629 = vmatprep.subr.mxu0 0.0
    %2630 = vmatpush2.msra.mxu0 0.0
    %2631 = vmatprep.subr.mxu0 0.0
    %2632 = vmatpush2.msra.mxu0 0.0
    %2633 = vmatprep.subr.mxu0 0.0
    %2634 = vmatpush2.msra.mxu0 0.0
    %2635 = vmatprep.subr.mxu0 0.0
    %2636 = vmatpush2.msra.mxu0 0.0
    %2637 = vmatprep.subr.mxu0 0.0
    %2638 = vmatpush2.msra.mxu0 0.0
    %2639 = vmatprep.subr.mxu0 0.0
    %2640 = vmatpush2.msra.mxu0 0.0
    %2641 = vmatprep.subr.mxu0 0.0
    %2642 = vmatpush2.msra.mxu0 0.0
    %2643 = vmatprep.subr.mxu0 0.0
    %2644 = vmatpush2.msra.mxu0 0.0
    %2645 = vmatprep.subr.mxu0 0.0
    %2646 = vmatpush2.msra.mxu0 0.0
    %2647 = vmatprep.subr.mxu0 0.0
    %2648 = vmatpush2.msra.mxu0 0.0
    %2649 = vmatprep.subr.mxu0 0.0
    %2650 = vmatpush2.msra.mxu0 0.0
    %2651 = vmatprep.subr.mxu0 0.0
    %2652 = vmatpush2.msra.mxu0 0.0
    %2653 = vmatprep.subr.mxu0 0.0
    %2654 = vmatpush2.msra.mxu0 0.0
    %2655 = vmatprep.mubr.f32.mxu0 0.0
    %2656 = vmatmul.mubr.f32.gmra.mxu0 %v360
    %v2657 = vpop.f32.mrf.mxu0
    %v2658 = vadd.f32 0.0, %v2657
    %v2659 = vpop.f32.mrf.mxu0
    %2660 = vmatprep.mubr.f32.mxu0 0.0
    %2661 = vmatmul.mubr.f32.gmra.mxu0 %v363
    %v2662 = vpop.f32.mrf.mxu0
    %v2663 = vadd.f32 0.0, %v2662
    %v2664 = vpop.f32.mrf.mxu0
    %2665 = vmatprep.mubr.f32.mxu0 0.0
    %2666 = vmatmul.mubr.f32.gmra.mxu0 %v366
    %v2667 = vpop.f32.mrf.mxu0
    %v2668 = vadd.f32 0.0, %v2667
    %v2669 = vpop.f32.mrf.mxu0
    %2670 = vmatprep.mubr.f32.mxu0 0.0
    %2671 = vmatmul.mubr.f32.gmra.mxu0 %v369
    %v2672 = vpop.f32.mrf.mxu0
    %v2673 = vadd.f32 0.0, %v2672
    %v2674 = vpop.f32.mrf.mxu0
    %2675 = vdwg.mxu0
    %v2676 = vmul.f32 %v2658, %v459
    %v2677 = vmul.f32 %v2663, %v460
    %v2678 = vmul.f32 %v2668, %v461
    %v2679 = vmul.f32 %v2673, %v462
    %v2681 = vsel %vm273, %v2676, 0
    %v2684 = vsel %vm273, %v2677, 0
    %v2687 = vsel %vm273, %v2678, 0
    %v2690 = vsel %vm273, %v2679, 0
    %2692 = vmatprep.subr.mxu0 0.0
    %2693 = vmatpush1.msra.mxu0 0.0
    %2694 = vmatprep.subr.mxu0 0.0
    %2695 = vmatpush1.msra.mxu0 0.0
    %2696 = vmatprep.subr.mxu0 0.0
    %2697 = vmatpush1.msra.mxu0 0.0
    %2698 = vmatprep.subr.mxu0 0.0
    %2699 = vmatpush1.msra.mxu0 0.0
    %2700 = vmatprep.subr.mxu0 0.0
    %2701 = vmatpush1.msra.mxu0 0.0
    %2702 = vmatprep.subr.mxu0 0.0
    %2703 = vmatpush1.msra.mxu0 0.0
    %2704 = vmatprep.subr.mxu0 0.0
    %2705 = vmatpush1.msra.mxu0 0.0
    %2706 = vmatprep.subr.mxu0 0.0
    %2707 = vmatpush1.msra.mxu0 0.0
    %2708 = vmatprep.subr.mxu0 0.0
    %2709 = vmatpush1.msra.mxu0 0.0
    %2710 = vmatprep.subr.mxu0 0.0
    %2711 = vmatpush1.msra.mxu0 0.0
    %2712 = vmatprep.subr.mxu0 0.0
    %2713 = vmatpush1.msra.mxu0 0.0
    %2714 = vmatprep.subr.mxu0 0.0
    %2715 = vmatpush1.msra.mxu0 0.0
    %2716 = vmatprep.subr.mxu0 0.0
    %2717 = vmatpush1.msra.mxu0 %v470
    %2718 = vmatprep.subr.mxu0 0.0
    %2719 = vmatpush1.msra.mxu0 %v469
    %2720 = vmatprep.subr.mxu0 0.0
    %2721 = vmatpush1.msra.mxu0 %v468
    %2722 = vmatprep.subr.mxu0 0.0
    %2723 = vmatpush1.msra.mxu0 %v467
    %2724 = vmatprep.subr.mxu0 0.0
    %2725 = vmatpush2.msra.mxu0 0.0
    %2726 = vmatprep.subr.mxu0 0.0
    %2727 = vmatpush2.msra.mxu0 0.0
    %2728 = vmatprep.subr.mxu0 0.0
    %2729 = vmatpush2.msra.mxu0 0.0
    %2730 = vmatprep.subr.mxu0 0.0
    %2731 = vmatpush2.msra.mxu0 0.0
    %2732 = vmatprep.subr.mxu0 0.0
    %2733 = vmatpush2.msra.mxu0 0.0
    %2734 = vmatprep.subr.mxu0 0.0
    %2735 = vmatpush2.msra.mxu0 0.0
    %2736 = vmatprep.subr.mxu0 0.0
    %2737 = vmatpush2.msra.mxu0 0.0
    %2738 = vmatprep.subr.mxu0 0.0
    %2739 = vmatpush2.msra.mxu0 0.0
    %2740 = vmatprep.subr.mxu0 0.0
    %2741 = vmatpush2.msra.mxu0 0.0
    %2742 = vmatprep.subr.mxu0 0.0
    %2743 = vmatpush2.msra.mxu0 0.0
    %2744 = vmatprep.subr.mxu0 0.0
    %2745 = vmatpush2.msra.mxu0 0.0
    %2746 = vmatprep.subr.mxu0 0.0
    %2747 = vmatpush2.msra.mxu0 0.0
    %2748 = vmatprep.subr.mxu0 0.0
    %2749 = vmatpush2.msra.mxu0 0.0
    %2750 = vmatprep.subr.mxu0 0.0
    %2751 = vmatpush2.msra.mxu0 0.0
    %2752 = vmatprep.subr.mxu0 0.0
    %2753 = vmatpush2.msra.mxu0 0.0
    %2754 = vmatprep.subr.mxu0 0.0
    %2755 = vmatpush2.msra.mxu0 0.0
    %2756 = vmatprep.mubr.f32.mxu0 0.0
    %2757 = vmatmul.mubr.f32.gmra.mxu0 %v2681
    %v2758 = vpop.f32.mrf.mxu0
    %v2759 = vadd.f32 0.0, %v2758
    %v2760 = vpop.f32.mrf.mxu0
    %2761 = vmatprep.mubr.f32.mxu0 0.0
    %2762 = vmatmul.mubr.f32.gmra.mxu0 %v2684
    %v2763 = vpop.f32.mrf.mxu0
    %v2764 = vadd.f32 0.0, %v2763
    %v2765 = vpop.f32.mrf.mxu0
    %2766 = vmatprep.mubr.f32.mxu0 0.0
    %2767 = vmatmul.mubr.f32.gmra.mxu0 %v2687
    %v2768 = vpop.f32.mrf.mxu0
    %v2769 = vadd.f32 0.0, %v2768
    %v2770 = vpop.f32.mrf.mxu0
    %2771 = vmatprep.mubr.f32.mxu0 0.0
    %2772 = vmatmul.mubr.f32.gmra.mxu0 %v2690
    %v2773 = vpop.f32.mrf.mxu0
    %v2774 = vadd.f32 0.0, %v2773
    %v2775 = vpop.f32.mrf.mxu0
    %2776 = vdwg.mxu0
    %v2777 = vld [vmem:[#allocation5 + $0x2a8] sm:$0x3f]
    %v2778 = vld [vmem:[#allocation5 + $0x2b0] sm:$0x1]
    %v2779 = vrot.slane %v2759, 7
    %v2780 = vrot.slane %v2764, 7
    %v2781 = vrot.slane %v2769, 7
    %v2782 = vrot.slane %v2774, 7
    %v2783 = vsel %vm576, %v2781, %v2782
    %v2784 = vsel %vm576, %v2780, %v2781
    %v2785 = vsel %vm576, %v2779, %v2780
    %v2786 = vsel %vm576, %v2782, %v2779
    %v2787 = vmul.f32 %v2786, %v584
    %v2788 = vmul.f32 %v2785, %v589
    %v2789 = vmul.f32 %v2784, %v594
    %v2790 = vmul.f32 %v2783, %v599
    %v2791 = vrot.slane %v2759, 1
    %v2792 = vrot.slane %v2764, 1
    %v2793 = vrot.slane %v2769, 1
    %v2794 = vrot.slane %v2774, 1
    %v2795 = vsel %vm609, %v2793, %v2794
    %v2796 = vsel %vm609, %v2792, %v2793
    %v2797 = vsel %vm609, %v2791, %v2792
    %v2798 = vsel %vm609, %v2794, %v2791
    %v2799 = vmul.f32 %v2797, %v616
    %v2800 = vmul.f32 %v2796, %v620
    %v2801 = vmul.f32 %v2795, %v624
    %v2802 = vmul.f32 %v2798, %v628
    %2807 = vrot.lane.b32.xlu0 %v2759, 2
    %v2808 = vpop.permute.xlu0 %2807
    %2809 = vrot.lane.b32.xlu0 %v2764, 2
    %v2810 = vpop.permute.xlu0 %2809
    %2811 = vrot.lane.b32.xlu0 %v2769, 2
    %v2812 = vpop.permute.xlu0 %2811
    %2813 = vrot.lane.b32.xlu0 %v2774, 2
    %v2814 = vpop.permute.xlu0 %2813
    %2823 = vrot.lane.b32.xlu0 %v2799, 4
    %v2824 = vpop.permute.xlu0 %2823
    %2825 = vrot.lane.b32.xlu0 %v2800, 4
    %v2826 = vpop.permute.xlu0 %2825
    %2827 = vrot.lane.b32.xlu0 %v2801, 4
    %v2828 = vpop.permute.xlu0 %2827
    %2829 = vrot.lane.b32.xlu0 %v2802, 4
    %v2830 = vpop.permute.xlu0 %2829
    %v2835 = vsel %vm358, %v2787, %v2808
    %v2836 = vsel %vm358, %v2788, %v2810
    %v2837 = vsel %vm358, %v2789, %v2812
    %v2838 = vsel %vm358, %v2790, %v2814
    %v2839 = vsel %vm670, %v2835, %v2824
    %v2840 = vsel %vm670, %v2836, %v2826
    %v2841 = vsel %vm670, %v2837, %v2828
    %v2842 = vsel %vm670, %v2838, %v2830
    %v2843 = vlaneseq
    %v2844 = vshrl.u32 %v2843, 7
    %v2845 = vsub.s32 0, %v2844
    %v2846 = vrot.slane %v2778, %v2845
    %v2848 = vsel %vm679, %v2839, 0
    %v2851 = vsel %vm679, %v2840, 0
    %v2854 = vsel %vm679, %v2841, 0
    %v2857 = vsel %vm679, %v2842, 0
    %v2860 = vsel %vm692, %v2777, 0
    %2862 = vmatprep.subr.mxu0 0.0
    %2863 = vmatpush1.msra.mxu0 0.0
    %2864 = vmatprep.subr.mxu0 0.0
    %2865 = vmatpush1.msra.mxu0 0.0
    %2866 = vmatprep.subr.mxu0 0.0
    %2867 = vmatpush1.msra.mxu0 0.0
    %2868 = vmatprep.subr.mxu0 0.0
    %2869 = vmatpush1.msra.mxu0 0.0
    %2870 = vmatprep.subr.mxu0 0.0
    %2871 = vmatpush1.msra.mxu0 0.0
    %2872 = vmatprep.subr.mxu0 0.0
    %2873 = vmatpush1.msra.mxu0 0.0
    %2874 = vmatprep.subr.mxu0 0.0
    %2875 = vmatpush1.msra.mxu0 0.0
    %2876 = vmatprep.subr.mxu0 0.0
    %2877 = vmatpush1.msra.mxu0 0.0
    %2878 = vmatprep.subr.mxu0 0.0
    %2879 = vmatpush1.msra.mxu0 0.0
    %2880 = vmatprep.subr.mxu0 0.0
    %2881 = vmatpush1.msra.mxu0 0.0
    %2882 = vmatprep.subr.mxu0 0.0
    %2883 = vmatpush1.msra.mxu0 0.0
    %2884 = vmatprep.subr.mxu0 0.0
    %2885 = vmatpush1.msra.mxu0 0.0
    %2886 = vmatprep.subr.mxu0 0.0
    %2887 = vmatpush1.msra.mxu0 0.0
    %2888 = vmatprep.subr.mxu0 0.0
    %2889 = vmatpush1.msra.mxu0 0.0
    %2890 = vmatprep.subr.mxu0 0.0
    %2891 = vmatpush1.msra.mxu0 0.0
    %2892 = vmatprep.subr.mxu0 0.0
    %2893 = vmatpush1.msra.mxu0 %v2860
    %2894 = vmatprep.subr.mxu0 0.0
    %2895 = vmatpush2.msra.mxu0 0.0
    %2896 = vmatprep.subr.mxu0 0.0
    %2897 = vmatpush2.msra.mxu0 0.0
    %2898 = vmatprep.subr.mxu0 0.0
    %2899 = vmatpush2.msra.mxu0 0.0
    %2900 = vmatprep.subr.mxu0 0.0
    %2901 = vmatpush2.msra.mxu0 0.0
    %2902 = vmatprep.subr.mxu0 0.0
    %2903 = vmatpush2.msra.mxu0 0.0
    %2904 = vmatprep.subr.mxu0 0.0
    %2905 = vmatpush2.msra.mxu0 0.0
    %2906 = vmatprep.subr.mxu0 0.0
    %2907 = vmatpush2.msra.mxu0 0.0
    %2908 = vmatprep.subr.mxu0 0.0
    %2909 = vmatpush2.msra.mxu0 0.0
    %2910 = vmatprep.subr.mxu0 0.0
    %2911 = vmatpush2.msra.mxu0 0.0
    %2912 = vmatprep.subr.mxu0 0.0
    %2913 = vmatpush2.msra.mxu0 0.0
    %2914 = vmatprep.subr.mxu0 0.0
    %2915 = vmatpush2.msra.mxu0 0.0
    %2916 = vmatprep.subr.mxu0 0.0
    %2917 = vmatpush2.msra.mxu0 0.0
    %2918 = vmatprep.subr.mxu0 0.0
    %2919 = vmatpush2.msra.mxu0 0.0
    %2920 = vmatprep.subr.mxu0 0.0
    %2921 = vmatpush2.msra.mxu0 0.0
    %2922 = vmatprep.subr.mxu0 0.0
    %2923 = vmatpush2.msra.mxu0 0.0
    %2924 = vmatprep.subr.mxu0 0.0
    %2925 = vmatpush2.msra.mxu0 0.0
    %2926 = vmatprep.mubr.f32.mxu0 0.0
    %2927 = vmatmul.mubr.f32.gmra.mxu0 %v2848
    %v2928 = vpop.f32.mrf.mxu0
    %v2929 = vadd.f32 %v2846, %v2928
    %v2930 = vpop.f32.mrf.mxu0
    %2931 = vmatprep.mubr.f32.mxu0 0.0
    %2932 = vmatmul.mubr.f32.gmra.mxu0 %v2851
    %v2933 = vpop.f32.mrf.mxu0
    %v2934 = vadd.f32 %v2846, %v2933
    %v2935 = vpop.f32.mrf.mxu0
    %2936 = vmatprep.mubr.f32.mxu0 0.0
    %2937 = vmatmul.mubr.f32.gmra.mxu0 %v2854
    %v2938 = vpop.f32.mrf.mxu0
    %v2939 = vadd.f32 %v2846, %v2938
    %v2940 = vpop.f32.mrf.mxu0
    %2941 = vmatprep.mubr.f32.mxu0 0.0
    %2942 = vmatmul.mubr.f32.gmra.mxu0 %v2857
    %v2943 = vpop.f32.mrf.mxu0
    %v2944 = vadd.f32 %v2846, %v2943
    %v2945 = vpop.f32.mrf.mxu0
    %2946 = vdwg.mxu0
    %v2947 = vld [vmem:[#allocation5 + $0x2b8] sm:$0xff]
    %v2948 = vld [vmem:[#allocation5 + $0x2c0] sm:$0xff]
    %v2949 = vld [vmem:[#allocation5 + $0x2c8] sm:$0xff]
    %v2950 = vld [vmem:[#allocation5 + $0x2d0] sm:$0xff]
    %v2951 = vld [vmem:[#allocation5 + $0x2d8] sm:$0xff]
    %v2952 = vld [vmem:[#allocation5 + $0x2e0] sm:$0xff]
    %v2953 = vld [vmem:[#allocation5 + $0x2e8] sm:$0x1]
    %v2954 = vrot.slane %v2929, 7
    %v2955 = vrot.slane %v2934, 7
    %v2956 = vrot.slane %v2939, 7
    %v2957 = vrot.slane %v2944, 7
    %v2958 = vsel %vm576, %v2956, %v2957
    %v2959 = vsel %vm576, %v2955, %v2956
    %v2960 = vsel %vm576, %v2954, %v2955
    %v2961 = vsel %vm576, %v2957, %v2954
    %v2962 = vmul.f32 %v2961, %v584
    %v2963 = vmul.f32 %v2960, %v589
    %v2964 = vmul.f32 %v2959, %v594
    %v2965 = vmul.f32 %v2958, %v599
    %v2966 = vrot.slane %v2929, 1
    %v2967 = vrot.slane %v2934, 1
    %v2968 = vrot.slane %v2939, 1
    %v2969 = vrot.slane %v2944, 1
    %v2970 = vsel %vm609, %v2968, %v2969
    %v2971 = vsel %vm609, %v2967, %v2968
    %v2972 = vsel %vm609, %v2966, %v2967
    %v2973 = vsel %vm609, %v2969, %v2966
    %v2974 = vmul.f32 %v2972, %v616
    %v2975 = vmul.f32 %v2971, %v620
    %v2976 = vmul.f32 %v2970, %v624
    %v2977 = vmul.f32 %v2973, %v628
    %2982 = vrot.lane.b32.xlu0 %v2929, 16
    %v2983 = vpop.permute.xlu0 %2982
    %2984 = vrot.lane.b32.xlu0 %v2934, 16
    %v2985 = vpop.permute.xlu0 %2984
    %2986 = vrot.lane.b32.xlu0 %v2939, 16
    %v2987 = vpop.permute.xlu0 %2986
    %2988 = vrot.lane.b32.xlu0 %v2944, 16
    %v2989 = vpop.permute.xlu0 %2988
    %2998 = vrot.lane.b32.xlu0 %v2974, 32
    %v2999 = vpop.permute.xlu0 %2998
    %3000 = vrot.lane.b32.xlu0 %v2975, 32
    %v3001 = vpop.permute.xlu0 %3000
    %3002 = vrot.lane.b32.xlu0 %v2976, 32
    %v3003 = vpop.permute.xlu0 %3002
    %3004 = vrot.lane.b32.xlu0 %v2977, 32
    %v3005 = vpop.permute.xlu0 %3004
    %v3010 = vsel %vm50, %v2962, %v2983
    %v3011 = vsel %vm50, %v2963, %v2985
    %v3012 = vsel %vm50, %v2964, %v2987
    %v3013 = vsel %vm50, %v2965, %v2989
    %v3014 = vsel %vm273, %v3010, %v2999
    %v3015 = vsel %vm273, %v3011, %v3001
    %v3016 = vsel %vm273, %v3012, %v3003
    %v3017 = vsel %vm273, %v3013, %v3005
    %v3018 = vlaneseq
    %v3019 = vshrl.u32 %v3018, 7
    %v3020 = vsub.s32 0, %v3019
    %v3021 = vrot.slane %v2953, %v3020
    %v3023 = vsel %vm856, %v3014, 0
    %v3026 = vsel %vm856, %v3015, 0
    %v3029 = vsel %vm856, %v3016, 0
    %v3032 = vsel %vm856, %v3017, 0
    %3034 = vmatprep.subr.mxu0 0.0
    %3035 = vmatpush1.msra.mxu0 0.0
    %3036 = vmatprep.subr.mxu0 0.0
    %3037 = vmatpush1.msra.mxu0 0.0
    %3038 = vmatprep.subr.mxu0 0.0
    %3039 = vmatpush1.msra.mxu0 0.0
    %3040 = vmatprep.subr.mxu0 0.0
    %3041 = vmatpush1.msra.mxu0 0.0
    %3042 = vmatprep.subr.mxu0 0.0
    %3043 = vmatpush1.msra.mxu0 0.0
    %3044 = vmatprep.subr.mxu0 0.0
    %3045 = vmatpush1.msra.mxu0 0.0
    %3046 = vmatprep.subr.mxu0 0.0
    %3047 = vmatpush1.msra.mxu0 0.0
    %3048 = vmatprep.subr.mxu0 0.0
    %3049 = vmatpush1.msra.mxu0 0.0
    %3050 = vmatprep.subr.mxu0 0.0
    %3051 = vmatpush1.msra.mxu0 0.0
    %3052 = vmatprep.subr.mxu0 0.0
    %3053 = vmatpush1.msra.mxu0 0.0
    %3054 = vmatprep.subr.mxu0 0.0
    %3055 = vmatpush1.msra.mxu0 %v2952
    %3056 = vmatprep.subr.mxu0 0.0
    %3057 = vmatpush1.msra.mxu0 %v2951
    %3058 = vmatprep.subr.mxu0 0.0
    %3059 = vmatpush1.msra.mxu0 %v2950
    %3060 = vmatprep.subr.mxu0 0.0
    %3061 = vmatpush1.msra.mxu0 %v2949
    %3062 = vmatprep.subr.mxu0 0.0
    %3063 = vmatpush1.msra.mxu0 %v2948
    %3064 = vmatprep.subr.mxu0 0.0
    %3065 = vmatpush1.msra.mxu0 %v2947
    %3066 = vmatprep.subr.mxu0 0.0
    %3067 = vmatpush2.msra.mxu0 0.0
    %3068 = vmatprep.subr.mxu0 0.0
    %3069 = vmatpush2.msra.mxu0 0.0
    %3070 = vmatprep.subr.mxu0 0.0
    %3071 = vmatpush2.msra.mxu0 0.0
    %3072 = vmatprep.subr.mxu0 0.0
    %3073 = vmatpush2.msra.mxu0 0.0
    %3074 = vmatprep.subr.mxu0 0.0
    %3075 = vmatpush2.msra.mxu0 0.0
    %3076 = vmatprep.subr.mxu0 0.0
    %3077 = vmatpush2.msra.mxu0 0.0
    %3078 = vmatprep.subr.mxu0 0.0
    %3079 = vmatpush2.msra.mxu0 0.0
    %3080 = vmatprep.subr.mxu0 0.0
    %3081 = vmatpush2.msra.mxu0 0.0
    %3082 = vmatprep.subr.mxu0 0.0
    %3083 = vmatpush2.msra.mxu0 0.0
    %3084 = vmatprep.subr.mxu0 0.0
    %3085 = vmatpush2.msra.mxu0 0.0
    %3086 = vmatprep.subr.mxu0 0.0
    %3087 = vmatpush2.msra.mxu0 0.0
    %3088 = vmatprep.subr.mxu0 0.0
    %3089 = vmatpush2.msra.mxu0 0.0
    %3090 = vmatprep.subr.mxu0 0.0
    %3091 = vmatpush2.msra.mxu0 0.0
    %3092 = vmatprep.subr.mxu0 0.0
    %3093 = vmatpush2.msra.mxu0 0.0
    %3094 = vmatprep.subr.mxu0 0.0
    %3095 = vmatpush2.msra.mxu0 0.0
    %3096 = vmatprep.subr.mxu0 0.0
    %3097 = vmatpush2.msra.mxu0 0.0
    %3098 = vmatprep.mubr.f32.mxu0 0.0
    %3099 = vmatmul.mubr.f32.gmra.mxu0 %v3023
    %v3100 = vpop.f32.mrf.mxu0
    %v3101 = vadd.f32 %v3021, %v3100
    %v3102 = vpop.f32.mrf.mxu0
    %3103 = vmatprep.mubr.f32.mxu0 0.0
    %3104 = vmatmul.mubr.f32.gmra.mxu0 %v3026
    %v3105 = vpop.f32.mrf.mxu0
    %v3106 = vadd.f32 %v3021, %v3105
    %v3107 = vpop.f32.mrf.mxu0
    %3108 = vmatprep.mubr.f32.mxu0 0.0
    %3109 = vmatmul.mubr.f32.gmra.mxu0 %v3029
    %v3110 = vpop.f32.mrf.mxu0
    %v3111 = vadd.f32 %v3021, %v3110
    %v3112 = vpop.f32.mrf.mxu0
    %3113 = vmatprep.mubr.f32.mxu0 0.0
    %3114 = vmatmul.mubr.f32.gmra.mxu0 %v3032
    %v3115 = vpop.f32.mrf.mxu0
    %v3116 = vadd.f32 %v3021, %v3115
    %v3117 = vpop.f32.mrf.mxu0
    %3118 = vdwg.mxu0
    %v3119 = vmax.f32 %v3101, 0.0
    %v3120 = vmax.f32 %v3106, 0.0
    %v3121 = vmax.f32 %v3111, 0.0
    %v3122 = vmax.f32 %v3116, 0.0
    %v3123 = vld [vmem:[#allocation5 + $0x2f0] sm:$0xff]
    %v3124 = vld [vmem:[#allocation5 + $0x2f8] sm:$0xff]
    %v3125 = vld [vmem:[#allocation5 + $0x300] sm:$0xff]
    %v3126 = vld [vmem:[#allocation5 + $0x308] sm:$0xff]
    %v3127 = vld [vmem:[#allocation5 + $0x310] sm:$0xff]
    %v3128 = vld [vmem:[#allocation5 + $0x318] sm:$0xff]
    %v3129 = vld [vmem:[#allocation5 + $0x320] sm:$0x1]
    %v3130 = vrot.slane %v3119, 7
    %v3131 = vrot.slane %v3120, 7
    %v3132 = vrot.slane %v3121, 7
    %v3133 = vrot.slane %v3122, 7
    %v3134 = vsel %vm576, %v3132, %v3133
    %v3135 = vsel %vm576, %v3131, %v3132
    %v3136 = vsel %vm576, %v3130, %v3131
    %v3137 = vsel %vm576, %v3133, %v3130
    %v3138 = vmul.f32 %v3137, %v584
    %v3139 = vmul.f32 %v3136, %v589
    %v3140 = vmul.f32 %v3135, %v594
    %v3141 = vmul.f32 %v3134, %v599
    %v3142 = vrot.slane %v3119, 1
    %v3143 = vrot.slane %v3120, 1
    %v3144 = vrot.slane %v3121, 1
    %v3145 = vrot.slane %v3122, 1
    %v3146 = vsel %vm609, %v3144, %v3145
    %v3147 = vsel %vm609, %v3143, %v3144
    %v3148 = vsel %vm609, %v3142, %v3143
    %v3149 = vsel %vm609, %v3145, %v3142
    %v3150 = vmul.f32 %v3148, %v616
    %v3151 = vmul.f32 %v3147, %v620
    %v3152 = vmul.f32 %v3146, %v624
    %v3153 = vmul.f32 %v3149, %v628
    %3158 = vrot.lane.b32.xlu0 %v3119, 16
    %v3159 = vpop.permute.xlu0 %3158
    %3160 = vrot.lane.b32.xlu0 %v3120, 16
    %v3161 = vpop.permute.xlu0 %3160
    %3162 = vrot.lane.b32.xlu0 %v3121, 16
    %v3163 = vpop.permute.xlu0 %3162
    %3164 = vrot.lane.b32.xlu0 %v3122, 16
    %v3165 = vpop.permute.xlu0 %3164
    %3174 = vrot.lane.b32.xlu0 %v3150, 32
    %v3175 = vpop.permute.xlu0 %3174
    %3176 = vrot.lane.b32.xlu0 %v3151, 32
    %v3177 = vpop.permute.xlu0 %3176
    %3178 = vrot.lane.b32.xlu0 %v3152, 32
    %v3179 = vpop.permute.xlu0 %3178
    %3180 = vrot.lane.b32.xlu0 %v3153, 32
    %v3181 = vpop.permute.xlu0 %3180
    %v3186 = vsel %vm50, %v3138, %v3159
    %v3187 = vsel %vm50, %v3139, %v3161
    %v3188 = vsel %vm50, %v3140, %v3163
    %v3189 = vsel %vm50, %v3141, %v3165
    %v3190 = vsel %vm273, %v3186, %v3175
    %v3191 = vsel %vm273, %v3187, %v3177
    %v3192 = vsel %vm273, %v3188, %v3179
    %v3193 = vsel %vm273, %v3189, %v3181
    %v3194 = vlaneseq
    %v3195 = vshrl.u32 %v3194, 7
    %v3196 = vsub.s32 0, %v3195
    %v3197 = vrot.slane %v3129, %v3196
    %v3199 = vsel %vm856, %v3190, 0
    %v3202 = vsel %vm856, %v3191, 0
    %v3205 = vsel %vm856, %v3192, 0
    %v3208 = vsel %vm856, %v3193, 0
    %3210 = vmatprep.subr.mxu0 0.0
    %3211 = vmatpush1.msra.mxu0 0.0
    %3212 = vmatprep.subr.mxu0 0.0
    %3213 = vmatpush1.msra.mxu0 0.0
    %3214 = vmatprep.subr.mxu0 0.0
    %3215 = vmatpush1.msra.mxu0 0.0
    %3216 = vmatprep.subr.mxu0 0.0
    %3217 = vmatpush1.msra.mxu0 0.0
    %3218 = vmatprep.subr.mxu0 0.0
    %3219 = vmatpush1.msra.mxu0 0.0
    %3220 = vmatprep.subr.mxu0 0.0
    %3221 = vmatpush1.msra.mxu0 0.0
    %3222 = vmatprep.subr.mxu0 0.0
    %3223 = vmatpush1.msra.mxu0 0.0
    %3224 = vmatprep.subr.mxu0 0.0
    %3225 = vmatpush1.msra.mxu0 0.0
    %3226 = vmatprep.subr.mxu0 0.0
    %3227 = vmatpush1.msra.mxu0 0.0
    %3228 = vmatprep.subr.mxu0 0.0
    %3229 = vmatpush1.msra.mxu0 0.0
    %3230 = vmatprep.subr.mxu0 0.0
    %3231 = vmatpush1.msra.mxu0 %v3128
    %3232 = vmatprep.subr.mxu0 0.0
    %3233 = vmatpush1.msra.mxu0 %v3127
    %3234 = vmatprep.subr.mxu0 0.0
    %3235 = vmatpush1.msra.mxu0 %v3126
    %3236 = vmatprep.subr.mxu0 0.0
    %3237 = vmatpush1.msra.mxu0 %v3125
    %3238 = vmatprep.subr.mxu0 0.0
    %3239 = vmatpush1.msra.mxu0 %v3124
    %3240 = vmatprep.subr.mxu0 0.0
    %3241 = vmatpush1.msra.mxu0 %v3123
    %3242 = vmatprep.subr.mxu0 0.0
    %3243 = vmatpush2.msra.mxu0 0.0
    %3244 = vmatprep.subr.mxu0 0.0
    %3245 = vmatpush2.msra.mxu0 0.0
    %3246 = vmatprep.subr.mxu0 0.0
    %3247 = vmatpush2.msra.mxu0 0.0
    %3248 = vmatprep.subr.mxu0 0.0
    %3249 = vmatpush2.msra.mxu0 0.0
    %3250 = vmatprep.subr.mxu0 0.0
    %3251 = vmatpush2.msra.mxu0 0.0
    %3252 = vmatprep.subr.mxu0 0.0
    %3253 = vmatpush2.msra.mxu0 0.0
    %3254 = vmatprep.subr.mxu0 0.0
    %3255 = vmatpush2.msra.mxu0 0.0
    %3256 = vmatprep.subr.mxu0 0.0
    %3257 = vmatpush2.msra.mxu0 0.0
    %3258 = vmatprep.subr.mxu0 0.0
    %3259 = vmatpush2.msra.mxu0 0.0
    %3260 = vmatprep.subr.mxu0 0.0
    %3261 = vmatpush2.msra.mxu0 0.0
    %3262 = vmatprep.subr.mxu0 0.0
    %3263 = vmatpush2.msra.mxu0 0.0
    %3264 = vmatprep.subr.mxu0 0.0
    %3265 = vmatpush2.msra.mxu0 0.0
    %3266 = vmatprep.subr.mxu0 0.0
    %3267 = vmatpush2.msra.mxu0 0.0
    %3268 = vmatprep.subr.mxu0 0.0
    %3269 = vmatpush2.msra.mxu0 0.0
    %3270 = vmatprep.subr.mxu0 0.0
    %3271 = vmatpush2.msra.mxu0 0.0
    %3272 = vmatprep.subr.mxu0 0.0
    %3273 = vmatpush2.msra.mxu0 0.0
    %3274 = vmatprep.mubr.f32.mxu0 0.0
    %3275 = vmatmul.mubr.f32.gmra.mxu0 %v3199
    %v3276 = vpop.f32.mrf.mxu0
    %v3277 = vadd.f32 %v3197, %v3276
    %v3278 = vpop.f32.mrf.mxu0
    %3279 = vmatprep.mubr.f32.mxu0 0.0
    %3280 = vmatmul.mubr.f32.gmra.mxu0 %v3202
    %v3281 = vpop.f32.mrf.mxu0
    %v3282 = vadd.f32 %v3197, %v3281
    %v3283 = vpop.f32.mrf.mxu0
    %3284 = vmatprep.mubr.f32.mxu0 0.0
    %3285 = vmatmul.mubr.f32.gmra.mxu0 %v3205
    %v3286 = vpop.f32.mrf.mxu0
    %v3287 = vadd.f32 %v3197, %v3286
    %v3288 = vpop.f32.mrf.mxu0
    %3289 = vmatprep.mubr.f32.mxu0 0.0
    %3290 = vmatmul.mubr.f32.gmra.mxu0 %v3208
    %v3291 = vpop.f32.mrf.mxu0
    %v3292 = vadd.f32 %v3197, %v3291
    %v3293 = vpop.f32.mrf.mxu0
    %3294 = vdwg.mxu0
    %3295 = vmatprep.subr.mxu0 0.0
    %3296 = vmatpush1.msra.mxu0 0.0
    %3297 = vmatprep.subr.mxu0 0.0
    %3298 = vmatpush1.msra.mxu0 0.0
    %3299 = vmatprep.subr.mxu0 0.0
    %3300 = vmatpush1.msra.mxu0 0.0
    %3301 = vmatprep.subr.mxu0 0.0
    %3302 = vmatpush1.msra.mxu0 0.0
    %3303 = vmatprep.subr.mxu0 0.0
    %3304 = vmatpush1.msra.mxu0 0.0
    %3305 = vmatprep.subr.mxu0 0.0
    %3306 = vmatpush1.msra.mxu0 0.0
    %3307 = vmatprep.subr.mxu0 0.0
    %3308 = vmatpush1.msra.mxu0 0.0
    %3309 = vmatprep.subr.mxu0 0.0
    %3310 = vmatpush1.msra.mxu0 0.0
    %3311 = vmatprep.subr.mxu0 0.0
    %3312 = vmatpush1.msra.mxu0 0.0
    %3313 = vmatprep.subr.mxu0 0.0
    %3314 = vmatpush1.msra.mxu0 0.0
    %3315 = vmatprep.subr.mxu0 0.0
    %3316 = vmatpush1.msra.mxu0 0.0
    %3317 = vmatprep.subr.mxu0 0.0
    %3318 = vmatpush1.msra.mxu0 0.0
    %3319 = vmatprep.subr.mxu0 0.0
    %3320 = vmatpush1.msra.mxu0 %v3292
    %3321 = vmatprep.subr.mxu0 0.0
    %3322 = vmatpush1.msra.mxu0 %v3287
    %3323 = vmatprep.subr.mxu0 0.0
    %3324 = vmatpush1.msra.mxu0 %v3282
    %3325 = vmatprep.subr.mxu0 0.0
    %3326 = vmatpush1.msra.mxu0 %v3277
    %3327 = vmatprep.subr.mxu0 0.0
    %3328 = vmatpush2.msra.mxu0 0.0
    %3329 = vmatprep.subr.mxu0 0.0
    %3330 = vmatpush2.msra.mxu0 0.0
    %3331 = vmatprep.subr.mxu0 0.0
    %3332 = vmatpush2.msra.mxu0 0.0
    %3333 = vmatprep.subr.mxu0 0.0
    %3334 = vmatpush2.msra.mxu0 0.0
    %3335 = vmatprep.subr.mxu0 0.0
    %3336 = vmatpush2.msra.mxu0 0.0
    %3337 = vmatprep.subr.mxu0 0.0
    %3338 = vmatpush2.msra.mxu0 0.0
    %3339 = vmatprep.subr.mxu0 0.0
    %3340 = vmatpush2.msra.mxu0 0.0
    %3341 = vmatprep.subr.mxu0 0.0
    %3342 = vmatpush2.msra.mxu0 0.0
    %3343 = vmatprep.subr.mxu0 0.0
    %3344 = vmatpush2.msra.mxu0 0.0
    %3345 = vmatprep.subr.mxu0 0.0
    %3346 = vmatpush2.msra.mxu0 0.0
    %3347 = vmatprep.subr.mxu0 0.0
    %3348 = vmatpush2.msra.mxu0 0.0
    %3349 = vmatprep.subr.mxu0 0.0
    %3350 = vmatpush2.msra.mxu0 0.0
    %3351 = vmatprep.subr.mxu0 0.0
    %3352 = vmatpush2.msra.mxu0 0.0
    %3353 = vmatprep.subr.mxu0 0.0
    %3354 = vmatpush2.msra.mxu0 0.0
    %3355 = vmatprep.subr.mxu0 0.0
    %3356 = vmatpush2.msra.mxu0 0.0
    %3357 = vmatprep.subr.mxu0 0.0
    %3358 = vmatpush2.msra.mxu0 0.0
    %3359 = vmatprep.mubr.f32.mxu0 0.0
    %3360 = vmatmul.mubr.f32.gmra.mxu0 %v1184
    %v3361 = vpop.f32.mrf.mxu0
    %v3362 = vadd.f32 0.0, %v3361
    %v3363 = vpop.f32.mrf.mxu0
    %3364 = vdwg.mxu0
    %v3365 = vmul.f32 %v3362, 0.0625
    %v3366 = vld [vmem:[#allocation5 + $0x3d0] sm:$0xff]
    %v3367 = vld [vmem:[#allocation5 + $0x3d8] sm:$0x1]
    %v3368 = vlaneseq
    %v3369 = vshrl.u32 %v3368, 7
    %v3370 = vsub.s32 0, %v3369
    %v3371 = vrot.slane %v3367, %v3370
    %v3373 = vsel %vm1263, %v3365, 0
    %3375 = vmatprep.subr.mxu0 0.0
    %3376 = vmatpush1.msra.mxu0 0.0
    %3377 = vmatprep.subr.mxu0 0.0
    %3378 = vmatpush1.msra.mxu0 0.0
    %3379 = vmatprep.subr.mxu0 0.0
    %3380 = vmatpush1.msra.mxu0 0.0
    %3381 = vmatprep.subr.mxu0 0.0
    %3382 = vmatpush1.msra.mxu0 0.0
    %3383 = vmatprep.subr.mxu0 0.0
    %3384 = vmatpush1.msra.mxu0 0.0
    %3385 = vmatprep.subr.mxu0 0.0
    %3386 = vmatpush1.msra.mxu0 0.0
    %3387 = vmatprep.subr.mxu0 0.0
    %3388 = vmatpush1.msra.mxu0 0.0
    %3389 = vmatprep.subr.mxu0 0.0
    %3390 = vmatpush1.msra.mxu0 0.0
    %3391 = vmatprep.subr.mxu0 0.0
    %3392 = vmatpush1.msra.mxu0 0.0
    %3393 = vmatprep.subr.mxu0 0.0
    %3394 = vmatpush1.msra.mxu0 0.0
    %3395 = vmatprep.subr.mxu0 0.0
    %3396 = vmatpush1.msra.mxu0 0.0
    %3397 = vmatprep.subr.mxu0 0.0
    %3398 = vmatpush1.msra.mxu0 0.0
    %3399 = vmatprep.subr.mxu0 0.0
    %3400 = vmatpush1.msra.mxu0 0.0
    %3401 = vmatprep.subr.mxu0 0.0
    %3402 = vmatpush1.msra.mxu0 0.0
    %3403 = vmatprep.subr.mxu0 0.0
    %3404 = vmatpush1.msra.mxu0 0.0
    %3405 = vmatprep.subr.mxu0 0.0
    %3406 = vmatpush1.msra.mxu0 %v3366
    %3407 = vmatprep.subr.mxu0 0.0
    %3408 = vmatpush2.msra.mxu0 0.0
    %3409 = vmatprep.subr.mxu0 0.0
    %3410 = vmatpush2.msra.mxu0 0.0
    %3411 = vmatprep.subr.mxu0 0.0
    %3412 = vmatpush2.msra.mxu0 0.0
    %3413 = vmatprep.subr.mxu0 0.0
    %3414 = vmatpush2.msra.mxu0 0.0
    %3415 = vmatprep.subr.mxu0 0.0
    %3416 = vmatpush2.msra.mxu0 0.0
    %3417 = vmatprep.subr.mxu0 0.0
    %3418 = vmatpush2.msra.mxu0 0.0
    %3419 = vmatprep.subr.mxu0 0.0
    %3420 = vmatpush2.msra.mxu0 0.0
    %3421 = vmatprep.subr.mxu0 0.0
    %3422 = vmatpush2.msra.mxu0 0.0
    %3423 = vmatprep.subr.mxu0 0.0
    %3424 = vmatpush2.msra.mxu0 0.0
    %3425 = vmatprep.subr.mxu0 0.0
    %3426 = vmatpush2.msra.mxu0 0.0
    %3427 = vmatprep.subr.mxu0 0.0
    %3428 = vmatpush2.msra.mxu0 0.0
    %3429 = vmatprep.subr.mxu0 0.0
    %3430 = vmatpush2.msra.mxu0 0.0
    %3431 = vmatprep.subr.mxu0 0.0
    %3432 = vmatpush2.msra.mxu0 0.0
    %3433 = vmatprep.subr.mxu0 0.0
    %3434 = vmatpush2.msra.mxu0 0.0
    %3435 = vmatprep.subr.mxu0 0.0
    %3436 = vmatpush2.msra.mxu0 0.0
    %3437 = vmatprep.subr.mxu0 0.0
    %3438 = vmatpush2.msra.mxu0 0.0
    %3439 = vmatprep.mubr.f32.mxu0 0.0
    %3440 = vmatmul.mubr.f32.gmra.mxu0 %v3373
    %v3441 = vpop.f32.mrf.mxu0
    %v3442 = vadd.f32 %v3371, %v3441
    %v3443 = vpop.f32.mrf.mxu0
    %3444 = vdwg.mxu0
    %v3445 = vsel %vm1337, %v3442, 0.0
    %v3446 = vrot.slane %v3445, 4
    %v3447 = vadd.f32 %v3445, %v3446
    %v3448 = vrot.slane %v3447, 2
    %v3449 = vadd.f32 %v3447, %v3448
    %v3450 = vrot.slane %v3449, 1
    %v3451 = vadd.f32 %v3449, %v3450
    %v3452 = vmul.f32 %v3451, %v1345
    %v3453 = vsub.f32 %v3442, %v3452
    %v3454 = vmul.f32 %v3453, %v3453
    %v3455 = vsel %vm1337, %v3454, 0.0
    %v3456 = vrot.slane %v3455, 4
    %v3457 = vadd.f32 %v3455, %v3456
    %v3458 = vrot.slane %v3457, 2
    %v3459 = vadd.f32 %v3457, %v3458
    %v3460 = vrot.slane %v3459, 1
    %v3461 = vadd.f32 %v3459, %v3460
    %v3462 = vmul.f32 %v3461, %v1345
    %v3463 = vld [vmem:[#allocation5 + $0x3e0] sm:$0x1]
    %v3464 = vlaneseq
    %v3465 = vshrl.u32 %v3464, 7
    %v3466 = vsub.s32 0, %v3465
    %v3467 = vrot.slane %v3463, %v3466
    %v3468 = vmul.f32 %v3467, %v3453
    %v3469 = vadd.f32 %v3462, 1e-05
    %v3470 = vrsqrt.pop %v3469
    %v3471 = vmul.f32 %v3468, %v3470
    %v3472 = vld [vmem:[#allocation5 + $0x3e8] sm:$0x1]
    %v3473 = vlaneseq
    %v3474 = vshrl.u32 %v3473, 7
    %v3475 = vsub.s32 0, %v3474
    %v3476 = vrot.slane %v3472, %v3475
    %v3477 = vadd.f32 %v3471, %v3476
    %v3478 = vmax.f32 %v3477, 0.0
    %v3479 = vld [vmem:[#allocation5 + $0x3f0] sm:$0xff]
    %v3480 = vld [vmem:[#allocation5 + $0x3f8] sm:$0x1]
    %v3481 = vlaneseq
    %v3482 = vshrl.u32 %v3481, 7
    %v3483 = vsub.s32 0, %v3482
    %v3484 = vrot.slane %v3480, %v3483
    %v3486 = vsel %vm1263, %v3478, 0
    %3488 = vmatprep.subr.mxu0 0.0
    %3489 = vmatpush1.msra.mxu0 0.0
    %3490 = vmatprep.subr.mxu0 0.0
    %3491 = vmatpush1.msra.mxu0 0.0
    %3492 = vmatprep.subr.mxu0 0.0
    %3493 = vmatpush1.msra.mxu0 0.0
    %3494 = vmatprep.subr.mxu0 0.0
    %3495 = vmatpush1.msra.mxu0 0.0
    %3496 = vmatprep.subr.mxu0 0.0
    %3497 = vmatpush1.msra.mxu0 0.0
    %3498 = vmatprep.subr.mxu0 0.0
    %3499 = vmatpush1.msra.mxu0 0.0
    %3500 = vmatprep.subr.mxu0 0.0
    %3501 = vmatpush1.msra.mxu0 0.0
    %3502 = vmatprep.subr.mxu0 0.0
    %3503 = vmatpush1.msra.mxu0 0.0
    %3504 = vmatprep.subr.mxu0 0.0
    %3505 = vmatpush1.msra.mxu0 0.0
    %3506 = vmatprep.subr.mxu0 0.0
    %3507 = vmatpush1.msra.mxu0 0.0
    %3508 = vmatprep.subr.mxu0 0.0
    %3509 = vmatpush1.msra.mxu0 0.0
    %3510 = vmatprep.subr.mxu0 0.0
    %3511 = vmatpush1.msra.mxu0 0.0
    %3512 = vmatprep.subr.mxu0 0.0
    %3513 = vmatpush1.msra.mxu0 0.0
    %3514 = vmatprep.subr.mxu0 0.0
    %3515 = vmatpush1.msra.mxu0 0.0
    %3516 = vmatprep.subr.mxu0 0.0
    %3517 = vmatpush1.msra.mxu0 0.0
    %3518 = vmatprep.subr.mxu0 0.0
    %3519 = vmatpush1.msra.mxu0 %v3479
    %3520 = vmatprep.subr.mxu0 0.0
    %3521 = vmatpush2.msra.mxu0 0.0
    %3522 = vmatprep.subr.mxu0 0.0
    %3523 = vmatpush2.msra.mxu0 0.0
    %3524 = vmatprep.subr.mxu0 0.0
    %3525 = vmatpush2.msra.mxu0 0.0
    %3526 = vmatprep.subr.mxu0 0.0
    %3527 = vmatpush2.msra.mxu0 0.0
    %3528 = vmatprep.subr.mxu0 0.0
    %3529 = vmatpush2.msra.mxu0 0.0
    %3530 = vmatprep.subr.mxu0 0.0
    %3531 = vmatpush2.msra.mxu0 0.0
    %3532 = vmatprep.subr.mxu0 0.0
    %3533 = vmatpush2.msra.mxu0 0.0
    %3534 = vmatprep.subr.mxu0 0.0
    %3535 = vmatpush2.msra.mxu0 0.0
    %3536 = vmatprep.subr.mxu0 0.0
    %3537 = vmatpush2.msra.mxu0 0.0
    %3538 = vmatprep.subr.mxu0 0.0
    %3539 = vmatpush2.msra.mxu0 0.0
    %3540 = vmatprep.subr.mxu0 0.0
    %3541 = vmatpush2.msra.mxu0 0.0
    %3542 = vmatprep.subr.mxu0 0.0
    %3543 = vmatpush2.msra.mxu0 0.0
    %3544 = vmatprep.subr.mxu0 0.0
    %3545 = vmatpush2.msra.mxu0 0.0
    %3546 = vmatprep.subr.mxu0 0.0
    %3547 = vmatpush2.msra.mxu0 0.0
    %3548 = vmatprep.subr.mxu0 0.0
    %3549 = vmatpush2.msra.mxu0 0.0
    %3550 = vmatprep.subr.mxu0 0.0
    %3551 = vmatpush2.msra.mxu0 0.0
    %3552 = vmatprep.mubr.f32.mxu0 0.0
    %3553 = vmatmul.mubr.f32.gmra.mxu0 %v3486
    %v3554 = vpop.f32.mrf.mxu0
    %v3555 = vadd.f32 %v3484, %v3554
    %v3556 = vpop.f32.mrf.mxu0
    %3557 = vdwg.mxu0
    %v3558 = vxor.u32 %v3555, 2147483648
    %v3559 = vmul.f32 %v3558, 1.442695
    %v3560 = vpow.pop %v3559
    %v3561 = vadd.f32 %v3560, 1.0
    %v3562 = vrcp.pop %v3561
    %v3563 = vmul.f32 1.0, %v3562
    %v3564 = vmul.f32 %v3563, %v3365
    %v3566 = vsel %vm371, %v3564, 0
    %3568 = vmatprep.subr.mxu0 0.0
    %3569 = vmatpush1.msra.mxu0 0.0
    %3570 = vmatprep.subr.mxu0 0.0
    %3571 = vmatpush1.msra.mxu0 0.0
    %3572 = vmatprep.subr.mxu0 0.0
    %3573 = vmatpush1.msra.mxu0 0.0
    %3574 = vmatprep.subr.mxu0 0.0
    %3575 = vmatpush1.msra.mxu0 0.0
    %3576 = vmatprep.subr.mxu0 0.0
    %3577 = vmatpush1.msra.mxu0 0.0
    %3578 = vmatprep.subr.mxu0 0.0
    %3579 = vmatpush1.msra.mxu0 0.0
    %3580 = vmatprep.subr.mxu0 0.0
    %3581 = vmatpush1.msra.mxu0 0.0
    %3582 = vmatprep.subr.mxu0 0.0
    %3583 = vmatpush1.msra.mxu0 0.0
    %3584 = vmatprep.subr.mxu0 0.0
    %3585 = vmatpush1.msra.mxu0 0.0
    %3586 = vmatprep.subr.mxu0 0.0
    %3587 = vmatpush1.msra.mxu0 0.0
    %3588 = vmatprep.subr.mxu0 0.0
    %3589 = vmatpush1.msra.mxu0 0.0
    %3590 = vmatprep.subr.mxu0 0.0
    %3591 = vmatpush1.msra.mxu0 0.0
    %3592 = vmatprep.subr.mxu0 0.0
    %3593 = vmatpush1.msra.mxu0 0.0
    %3594 = vmatprep.subr.mxu0 0.0
    %3595 = vmatpush1.msra.mxu0 0.0
    %3596 = vmatprep.subr.mxu0 0.0
    %3597 = vmatpush1.msra.mxu0 0.0
    %3598 = vmatprep.subr.mxu0 0.0
    %3599 = vmatpush1.msra.mxu0 %v3566
    %3600 = vmatprep.subr.mxu0 0.0
    %3601 = vmatpush2.msra.mxu0 0.0
    %3602 = vmatprep.subr.mxu0 0.0
    %3603 = vmatpush2.msra.mxu0 0.0
    %3604 = vmatprep.subr.mxu0 0.0
    %3605 = vmatpush2.msra.mxu0 0.0
    %3606 = vmatprep.subr.mxu0 0.0
    %3607 = vmatpush2.msra.mxu0 0.0
    %3608 = vmatprep.subr.mxu0 0.0
    %3609 = vmatpush2.msra.mxu0 0.0
    %3610 = vmatprep.subr.mxu0 0.0
    %3611 = vmatpush2.msra.mxu0 0.0
    %3612 = vmatprep.subr.mxu0 0.0
    %3613 = vmatpush2.msra.mxu0 0.0
    %3614 = vmatprep.subr.mxu0 0.0
    %3615 = vmatpush2.msra.mxu0 0.0
    %3616 = vmatprep.subr.mxu0 0.0
    %3617 = vmatpush2.msra.mxu0 0.0
    %3618 = vmatprep.subr.mxu0 0.0
    %3619 = vmatpush2.msra.mxu0 0.0
    %3620 = vmatprep.subr.mxu0 0.0
    %3621 = vmatpush2.msra.mxu0 0.0
    %3622 = vmatprep.subr.mxu0 0.0
    %3623 = vmatpush2.msra.mxu0 0.0
    %3624 = vmatprep.subr.mxu0 0.0
    %3625 = vmatpush2.msra.mxu0 0.0
    %3626 = vmatprep.subr.mxu0 0.0
    %3627 = vmatpush2.msra.mxu0 0.0
    %3628 = vmatprep.subr.mxu0 0.0
    %3629 = vmatpush2.msra.mxu0 0.0
    %3630 = vmatprep.subr.mxu0 0.0
    %3631 = vmatpush2.msra.mxu0 0.0
    %3632 = vmatprep.mubr.f32.mxu0 0.0
    %3633 = vmatmul.mubr.f32.gmra.mxu0 %v360
    %v3634 = vpop.f32.mrf.mxu0
    %v3635 = vadd.f32 0.0, %v3634
    %v3636 = vpop.f32.mrf.mxu0
    %3637 = vmatprep.mubr.f32.mxu0 0.0
    %3638 = vmatmul.mubr.f32.gmra.mxu0 %v363
    %v3639 = vpop.f32.mrf.mxu0
    %v3640 = vadd.f32 0.0, %v3639
    %v3641 = vpop.f32.mrf.mxu0
    %3642 = vmatprep.mubr.f32.mxu0 0.0
    %3643 = vmatmul.mubr.f32.gmra.mxu0 %v366
    %v3644 = vpop.f32.mrf.mxu0
    %v3645 = vadd.f32 0.0, %v3644
    %v3646 = vpop.f32.mrf.mxu0
    %3647 = vmatprep.mubr.f32.mxu0 0.0
    %3648 = vmatmul.mubr.f32.gmra.mxu0 %v369
    %v3649 = vpop.f32.mrf.mxu0
    %v3650 = vadd.f32 0.0, %v3649
    %v3651 = vpop.f32.mrf.mxu0
    %3652 = vdwg.mxu0
    %v3653 = vsub.f32 %v3277, %v3635
    %v3654 = vsub.f32 %v3282, %v3640
    %v3655 = vsub.f32 %v3287, %v3645
    %v3656 = vsub.f32 %v3292, %v3650
    %v3657 = vmul.f32 %v3653, %v3653
    %v3658 = vmul.f32 %v3654, %v3654
    %v3659 = vmul.f32 %v3655, %v3655
    %v3660 = vmul.f32 %v3656, %v3656
    %v3661 = vmul.f32 %v3277, %v3277
    %v3662 = vmul.f32 %v3282, %v3282
    %v3663 = vmul.f32 %v3287, %v3287
    %v3664 = vmul.f32 %v3292, %v3292
    %3669 = vrot.lane.b32.xlu0 %v3661, 120
    %v3670 = vpop.permute.xlu0 %3669
    %3671 = vrot.lane.b32.xlu0 %v3662, 120
    %v3672 = vpop.permute.xlu0 %3671
    %3673 = vrot.lane.b32.xlu0 %v3663, 120
    %v3674 = vpop.permute.xlu0 %3673
    %3675 = vrot.lane.b32.xlu0 %v3664, 120
    %v3676 = vpop.permute.xlu0 %3675
    %v3681 = vadd.f32 %v3657, %v3670
    %v3682 = vadd.f32 %v3658, %v3672
    %v3683 = vadd.f32 %v3659, %v3674
    %v3684 = vadd.f32 %v3660, %v3676
    %v3685 = vadd.f32 %v3681, 1e-24
    %v3686 = vadd.f32 %v3682, 1e-24
    %v3687 = vadd.f32 %v3683, 1e-24
    %v3688 = vadd.f32 %v3684, 1e-24
    %v3689 = vrsqrt.pop %v3685
    %v3690 = vrsqrt.pop %v3686
    %v3691 = vrsqrt.pop %v3687
    %v3692 = vrsqrt.pop %v3688
    %v3693 = vstv %s43
    %v3694 = vmul.f32 %v3693, %v3689
    %v3695 = vmul.f32 %v3693, %v3690
    %v3696 = vmul.f32 %v3693, %v3691
    %v3697 = vmul.f32 %v3693, %v3692
    %v3698 = vsub.f32 1.0, %v3694
    %v3699 = vsub.f32 1.0, %v3695
    %v3700 = vsub.f32 1.0, %v3696
    %v3701 = vsub.f32 1.0, %v3697
    %v3702 = vmax.f32 %v3698, 0.0
    %v3703 = vmax.f32 %v3699, 0.0
    %v3704 = vmax.f32 %v3700, 0.0
    %v3705 = vmax.f32 %v3701, 0.0
    %v3706 = vmul.f32 %v3702, %v3653
    %v3707 = vmul.f32 %v3703, %v3654
    %v3708 = vmul.f32 %v3704, %v3655
    %v3709 = vmul.f32 %v3705, %v3656
    %3714 = vrot.lane.b32.xlu0 %v3277, 120
    %v3715 = vpop.permute.xlu0 %3714
    %3716 = vrot.lane.b32.xlu0 %v3282, 120
    %v3717 = vpop.permute.xlu0 %3716
    %3718 = vrot.lane.b32.xlu0 %v3287, 120
    %v3719 = vpop.permute.xlu0 %3718
    %3720 = vrot.lane.b32.xlu0 %v3292, 120
    %v3721 = vpop.permute.xlu0 %3720
    %v3726 = vmul.f32 %v3702, %v3715
    %v3727 = vmul.f32 %v3703, %v3717
    %v3728 = vmul.f32 %v3704, %v3719
    %v3729 = vmul.f32 %v3705, %v3721
    %3734 = vrot.lane.b32.xlu0 %v3726, 8
    %v3735 = vpop.permute.xlu0 %3734
    %3736 = vrot.lane.b32.xlu0 %v3727, 8
    %v3737 = vpop.permute.xlu0 %3736
    %3738 = vrot.lane.b32.xlu0 %v3728, 8
    %v3739 = vpop.permute.xlu0 %3738
    %3740 = vrot.lane.b32.xlu0 %v3729, 8
    %v3741 = vpop.permute.xlu0 %3740
    %v3746 = vsel %vm1263, %v3706, %v3735
    %v3747 = vsel %vm1263, %v3707, %v3737
    %v3748 = vsel %vm1263, %v3708, %v3739
    %v3749 = vsel %vm1263, %v3709, %v3741
    %v3750 = vld [vmem:[#allocation5 + $0x328] sm:$0xff]
    %v3751 = vld [vmem:[#allocation5 + $0x330] sm:$0xff]
    %v3752 = vld [vmem:[#allocation5 + $0x338] sm:$0xff]
    %v3753 = vld [vmem:[#allocation5 + $0x340] sm:$0xff]
    %v3754 = vld [vmem:[#allocation5 + $0x348] sm:$0xff]
    %v3755 = vld [vmem:[#allocation5 + $0x350] sm:$0xff]
    %v3756 = vld [vmem:[#allocation5 + $0x358] sm:$0x1]
    %v3757 = vrot.slane %v3746, 7
    %v3758 = vrot.slane %v3747, 7
    %v3759 = vrot.slane %v3748, 7
    %v3760 = vrot.slane %v3749, 7
    %v3761 = vsel %vm576, %v3759, %v3760
    %v3762 = vsel %vm576, %v3758, %v3759
    %v3763 = vsel %vm576, %v3757, %v3758
    %v3764 = vsel %vm576, %v3760, %v3757
    %v3765 = vmul.f32 %v3764, %v584
    %v3766 = vmul.f32 %v3763, %v589
    %v3767 = vmul.f32 %v3762, %v594
    %v3768 = vmul.f32 %v3761, %v599
    %v3769 = vrot.slane %v3746, 1
    %v3770 = vrot.slane %v3747, 1
    %v3771 = vrot.slane %v3748, 1
    %v3772 = vrot.slane %v3749, 1
    %v3773 = vsel %vm609, %v3771, %v3772
    %v3774 = vsel %vm609, %v3770, %v3771
    %v3775 = vsel %vm609, %v3769, %v3770
    %v3776 = vsel %vm609, %v3772, %v3769
    %v3777 = vmul.f32 %v3775, %v616
    %v3778 = vmul.f32 %v3774, %v620
    %v3779 = vmul.f32 %v3773, %v624
    %v3780 = vmul.f32 %v3776, %v628
    %3785 = vrot.lane.b32.xlu0 %v3746, 16
    %v3786 = vpop.permute.xlu0 %3785
    %3787 = vrot.lane.b32.xlu0 %v3747, 16
    %v3788 = vpop.permute.xlu0 %3787
    %3789 = vrot.lane.b32.xlu0 %v3748, 16
    %v3790 = vpop.permute.xlu0 %3789
    %3791 = vrot.lane.b32.xlu0 %v3749, 16
    %v3792 = vpop.permute.xlu0 %3791
    %3801 = vrot.lane.b32.xlu0 %v3777, 32
    %v3802 = vpop.permute.xlu0 %3801
    %3803 = vrot.lane.b32.xlu0 %v3778, 32
    %v3804 = vpop.permute.xlu0 %3803
    %3805 = vrot.lane.b32.xlu0 %v3779, 32
    %v3806 = vpop.permute.xlu0 %3805
    %3807 = vrot.lane.b32.xlu0 %v3780, 32
    %v3808 = vpop.permute.xlu0 %3807
    %v3813 = vsel %vm50, %v3765, %v3786
    %v3814 = vsel %vm50, %v3766, %v3788
    %v3815 = vsel %vm50, %v3767, %v3790
    %v3816 = vsel %vm50, %v3768, %v3792
    %v3817 = vsel %vm273, %v3813, %v3802
    %v3818 = vsel %vm273, %v3814, %v3804
    %v3819 = vsel %vm273, %v3815, %v3806
    %v3820 = vsel %vm273, %v3816, %v3808
    %v3821 = vlaneseq
    %v3822 = vshrl.u32 %v3821, 7
    %v3823 = vsub.s32 0, %v3822
    %v3824 = vrot.slane %v3756, %v3823
    %v3826 = vsel %vm856, %v3817, 0
    %v3829 = vsel %vm856, %v3818, 0
    %v3832 = vsel %vm856, %v3819, 0
    %v3835 = vsel %vm856, %v3820, 0
    %3837 = vmatprep.subr.mxu0 0.0
    %3838 = vmatpush1.msra.mxu0 0.0
    %3839 = vmatprep.subr.mxu0 0.0
    %3840 = vmatpush1.msra.mxu0 0.0
    %3841 = vmatprep.subr.mxu0 0.0
    %3842 = vmatpush1.msra.mxu0 0.0
    %3843 = vmatprep.subr.mxu0 0.0
    %3844 = vmatpush1.msra.mxu0 0.0
    %3845 = vmatprep.subr.mxu0 0.0
    %3846 = vmatpush1.msra.mxu0 0.0
    %3847 = vmatprep.subr.mxu0 0.0
    %3848 = vmatpush1.msra.mxu0 0.0
    %3849 = vmatprep.subr.mxu0 0.0
    %3850 = vmatpush1.msra.mxu0 0.0
    %3851 = vmatprep.subr.mxu0 0.0
    %3852 = vmatpush1.msra.mxu0 0.0
    %3853 = vmatprep.subr.mxu0 0.0
    %3854 = vmatpush1.msra.mxu0 0.0
    %3855 = vmatprep.subr.mxu0 0.0
    %3856 = vmatpush1.msra.mxu0 0.0
    %3857 = vmatprep.subr.mxu0 0.0
    %3858 = vmatpush1.msra.mxu0 %v3755
    %3859 = vmatprep.subr.mxu0 0.0
    %3860 = vmatpush1.msra.mxu0 %v3754
    %3861 = vmatprep.subr.mxu0 0.0
    %3862 = vmatpush1.msra.mxu0 %v3753
    %3863 = vmatprep.subr.mxu0 0.0
    %3864 = vmatpush1.msra.mxu0 %v3752
    %3865 = vmatprep.subr.mxu0 0.0
    %3866 = vmatpush1.msra.mxu0 %v3751
    %3867 = vmatprep.subr.mxu0 0.0
    %3868 = vmatpush1.msra.mxu0 %v3750
    %3869 = vmatprep.subr.mxu0 0.0
    %3870 = vmatpush2.msra.mxu0 0.0
    %3871 = vmatprep.subr.mxu0 0.0
    %3872 = vmatpush2.msra.mxu0 0.0
    %3873 = vmatprep.subr.mxu0 0.0
    %3874 = vmatpush2.msra.mxu0 0.0
    %3875 = vmatprep.subr.mxu0 0.0
    %3876 = vmatpush2.msra.mxu0 0.0
    %3877 = vmatprep.subr.mxu0 0.0
    %3878 = vmatpush2.msra.mxu0 0.0
    %3879 = vmatprep.subr.mxu0 0.0
    %3880 = vmatpush2.msra.mxu0 0.0
    %3881 = vmatprep.subr.mxu0 0.0
    %3882 = vmatpush2.msra.mxu0 0.0
    %3883 = vmatprep.subr.mxu0 0.0
    %3884 = vmatpush2.msra.mxu0 0.0
    %3885 = vmatprep.subr.mxu0 0.0
    %3886 = vmatpush2.msra.mxu0 0.0
    %3887 = vmatprep.subr.mxu0 0.0
    %3888 = vmatpush2.msra.mxu0 0.0
    %3889 = vmatprep.subr.mxu0 0.0
    %3890 = vmatpush2.msra.mxu0 0.0
    %3891 = vmatprep.subr.mxu0 0.0
    %3892 = vmatpush2.msra.mxu0 0.0
    %3893 = vmatprep.subr.mxu0 0.0
    %3894 = vmatpush2.msra.mxu0 0.0
    %3895 = vmatprep.subr.mxu0 0.0
    %3896 = vmatpush2.msra.mxu0 0.0
    %3897 = vmatprep.subr.mxu0 0.0
    %3898 = vmatpush2.msra.mxu0 0.0
    %3899 = vmatprep.subr.mxu0 0.0
    %3900 = vmatpush2.msra.mxu0 0.0
    %3901 = vmatprep.mubr.f32.mxu0 0.0
    %3902 = vmatmul.mubr.f32.gmra.mxu0 %v3826
    %v3903 = vpop.f32.mrf.mxu0
    %v3904 = vadd.f32 %v3824, %v3903
    %v3905 = vpop.f32.mrf.mxu0
    %3906 = vmatprep.mubr.f32.mxu0 0.0
    %3907 = vmatmul.mubr.f32.gmra.mxu0 %v3829
    %v3908 = vpop.f32.mrf.mxu0
    %v3909 = vadd.f32 %v3824, %v3908
    %v3910 = vpop.f32.mrf.mxu0
    %3911 = vmatprep.mubr.f32.mxu0 0.0
    %3912 = vmatmul.mubr.f32.gmra.mxu0 %v3832
    %v3913 = vpop.f32.mrf.mxu0
    %v3914 = vadd.f32 %v3824, %v3913
    %v3915 = vpop.f32.mrf.mxu0
    %3916 = vmatprep.mubr.f32.mxu0 0.0
    %3917 = vmatmul.mubr.f32.gmra.mxu0 %v3835
    %v3918 = vpop.f32.mrf.mxu0
    %v3919 = vadd.f32 %v3824, %v3918
    %v3920 = vpop.f32.mrf.mxu0
    %3921 = vdwg.mxu0
    %v3922 = vmax.f32 %v3904, 0.0
    %v3923 = vmax.f32 %v3909, 0.0
    %v3924 = vmax.f32 %v3914, 0.0
    %v3925 = vmax.f32 %v3919, 0.0
    %v3926 = vld [vmem:[#allocation5 + $0x360] sm:$0xff]
    %v3927 = vld [vmem:[#allocation5 + $0x368] sm:$0xff]
    %v3928 = vld [vmem:[#allocation5 + $0x370] sm:$0xff]
    %v3929 = vld [vmem:[#allocation5 + $0x378] sm:$0xff]
    %v3930 = vld [vmem:[#allocation5 + $0x380] sm:$0xff]
    %v3931 = vld [vmem:[#allocation5 + $0x388] sm:$0xff]
    %v3932 = vld [vmem:[#allocation5 + $0x390] sm:$0x1]
    %v3933 = vrot.slane %v3922, 7
    %v3934 = vrot.slane %v3923, 7
    %v3935 = vrot.slane %v3924, 7
    %v3936 = vrot.slane %v3925, 7
    %v3937 = vsel %vm576, %v3935, %v3936
    %v3938 = vsel %vm576, %v3934, %v3935
    %v3939 = vsel %vm576, %v3933, %v3934
    %v3940 = vsel %vm576, %v3936, %v3933
    %v3941 = vmul.f32 %v3940, %v584
    %v3942 = vmul.f32 %v3939, %v589
    %v3943 = vmul.f32 %v3938, %v594
    %v3944 = vmul.f32 %v3937, %v599
    %v3945 = vrot.slane %v3922, 1
    %v3946 = vrot.slane %v3923, 1
    %v3947 = vrot.slane %v3924, 1
    %v3948 = vrot.slane %v3925, 1
    %v3949 = vsel %vm609, %v3947, %v3948
    %v3950 = vsel %vm609, %v3946, %v3947
    %v3951 = vsel %vm609, %v3945, %v3946
    %v3952 = vsel %vm609, %v3948, %v3945
    %v3953 = vmul.f32 %v3951, %v616
    %v3954 = vmul.f32 %v3950, %v620
    %v3955 = vmul.f32 %v3949, %v624
    %v3956 = vmul.f32 %v3952, %v628
    %3961 = vrot.lane.b32.xlu0 %v3922, 16
    %v3962 = vpop.permute.xlu0 %3961
    %3963 = vrot.lane.b32.xlu0 %v3923, 16
    %v3964 = vpop.permute.xlu0 %3963
    %3965 = vrot.lane.b32.xlu0 %v3924, 16
    %v3966 = vpop.permute.xlu0 %3965
    %3967 = vrot.lane.b32.xlu0 %v3925, 16
    %v3968 = vpop.permute.xlu0 %3967
    %3977 = vrot.lane.b32.xlu0 %v3953, 32
    %v3978 = vpop.permute.xlu0 %3977
    %3979 = vrot.lane.b32.xlu0 %v3954, 32
    %v3980 = vpop.permute.xlu0 %3979
    %3981 = vrot.lane.b32.xlu0 %v3955, 32
    %v3982 = vpop.permute.xlu0 %3981
    %3983 = vrot.lane.b32.xlu0 %v3956, 32
    %v3984 = vpop.permute.xlu0 %3983
    %v3989 = vsel %vm50, %v3941, %v3962
    %v3990 = vsel %vm50, %v3942, %v3964
    %v3991 = vsel %vm50, %v3943, %v3966
    %v3992 = vsel %vm50, %v3944, %v3968
    %v3993 = vsel %vm273, %v3989, %v3978
    %v3994 = vsel %vm273, %v3990, %v3980
    %v3995 = vsel %vm273, %v3991, %v3982
    %v3996 = vsel %vm273, %v3992, %v3984
    %v3997 = vlaneseq
    %v3998 = vshrl.u32 %v3997, 7
    %v3999 = vsub.s32 0, %v3998
    %v4000 = vrot.slane %v3932, %v3999
    %v4002 = vsel %vm856, %v3993, 0
    %v4005 = vsel %vm856, %v3994, 0
    %v4008 = vsel %vm856, %v3995, 0
    %v4011 = vsel %vm856, %v3996, 0
    %4013 = vmatprep.subr.mxu0 0.0
    %4014 = vmatpush1.msra.mxu0 0.0
    %4015 = vmatprep.subr.mxu0 0.0
    %4016 = vmatpush1.msra.mxu0 0.0
    %4017 = vmatprep.subr.mxu0 0.0
    %4018 = vmatpush1.msra.mxu0 0.0
    %4019 = vmatprep.subr.mxu0 0.0
    %4020 = vmatpush1.msra.mxu0 0.0
    %4021 = vmatprep.subr.mxu0 0.0
    %4022 = vmatpush1.msra.mxu0 0.0
    %4023 = vmatprep.subr.mxu0 0.0
    %4024 = vmatpush1.msra.mxu0 0.0
    %4025 = vmatprep.subr.mxu0 0.0
    %4026 = vmatpush1.msra.mxu0 0.0
    %4027 = vmatprep.subr.mxu0 0.0
    %4028 = vmatpush1.msra.mxu0 0.0
    %4029 = vmatprep.subr.mxu0 0.0
    %4030 = vmatpush1.msra.mxu0 0.0
    %4031 = vmatprep.subr.mxu0 0.0
    %4032 = vmatpush1.msra.mxu0 0.0
    %4033 = vmatprep.subr.mxu0 0.0
    %4034 = vmatpush1.msra.mxu0 %v3931
    %4035 = vmatprep.subr.mxu0 0.0
    %4036 = vmatpush1.msra.mxu0 %v3930
    %4037 = vmatprep.subr.mxu0 0.0
    %4038 = vmatpush1.msra.mxu0 %v3929
    %4039 = vmatprep.subr.mxu0 0.0
    %4040 = vmatpush1.msra.mxu0 %v3928
    %4041 = vmatprep.subr.mxu0 0.0
    %4042 = vmatpush1.msra.mxu0 %v3927
    %4043 = vmatprep.subr.mxu0 0.0
    %4044 = vmatpush1.msra.mxu0 %v3926
    %4045 = vmatprep.subr.mxu0 0.0
    %4046 = vmatpush2.msra.mxu0 0.0
    %4047 = vmatprep.subr.mxu0 0.0
    %4048 = vmatpush2.msra.mxu0 0.0
    %4049 = vmatprep.subr.mxu0 0.0
    %4050 = vmatpush2.msra.mxu0 0.0
    %4051 = vmatprep.subr.mxu0 0.0
    %4052 = vmatpush2.msra.mxu0 0.0
    %4053 = vmatprep.subr.mxu0 0.0
    %4054 = vmatpush2.msra.mxu0 0.0
    %4055 = vmatprep.subr.mxu0 0.0
    %4056 = vmatpush2.msra.mxu0 0.0
    %4057 = vmatprep.subr.mxu0 0.0
    %4058 = vmatpush2.msra.mxu0 0.0
    %4059 = vmatprep.subr.mxu0 0.0
    %4060 = vmatpush2.msra.mxu0 0.0
    %4061 = vmatprep.subr.mxu0 0.0
    %4062 = vmatpush2.msra.mxu0 0.0
    %4063 = vmatprep.subr.mxu0 0.0
    %4064 = vmatpush2.msra.mxu0 0.0
    %4065 = vmatprep.subr.mxu0 0.0
    %4066 = vmatpush2.msra.mxu0 0.0
    %4067 = vmatprep.subr.mxu0 0.0
    %4068 = vmatpush2.msra.mxu0 0.0
    %4069 = vmatprep.subr.mxu0 0.0
    %4070 = vmatpush2.msra.mxu0 0.0
    %4071 = vmatprep.subr.mxu0 0.0
    %4072 = vmatpush2.msra.mxu0 0.0
    %4073 = vmatprep.subr.mxu0 0.0
    %4074 = vmatpush2.msra.mxu0 0.0
    %4075 = vmatprep.subr.mxu0 0.0
    %4076 = vmatpush2.msra.mxu0 0.0
    %4077 = vmatprep.mubr.f32.mxu0 0.0
    %4078 = vmatmul.mubr.f32.gmra.mxu0 %v4002
    %v4079 = vpop.f32.mrf.mxu0
    %v4080 = vadd.f32 %v4000, %v4079
    %v4081 = vpop.f32.mrf.mxu0
    %4082 = vmatprep.mubr.f32.mxu0 0.0
    %4083 = vmatmul.mubr.f32.gmra.mxu0 %v4005
    %v4084 = vpop.f32.mrf.mxu0
    %v4085 = vadd.f32 %v4000, %v4084
    %v4086 = vpop.f32.mrf.mxu0
    %4087 = vmatprep.mubr.f32.mxu0 0.0
    %4088 = vmatmul.mubr.f32.gmra.mxu0 %v4008
    %v4089 = vpop.f32.mrf.mxu0
    %v4090 = vadd.f32 %v4000, %v4089
    %v4091 = vpop.f32.mrf.mxu0
    %4092 = vmatprep.mubr.f32.mxu0 0.0
    %4093 = vmatmul.mubr.f32.gmra.mxu0 %v4011
    %v4094 = vpop.f32.mrf.mxu0
    %v4095 = vadd.f32 %v4000, %v4094
    %v4096 = vpop.f32.mrf.mxu0
    %4097 = vdwg.mxu0
    %v4098 = vld [vmem:[#allocation5 + $0x398] sm:$0xff]
    %v4099 = vld [vmem:[#allocation5 + $0x3a0] sm:$0xff]
    %v4100 = vld [vmem:[#allocation5 + $0x3a8] sm:$0xff]
    %v4101 = vld [vmem:[#allocation5 + $0x3b0] sm:$0xff]
    %v4102 = vld [vmem:[#allocation5 + $0x3b8] sm:$0xff]
    %v4103 = vld [vmem:[#allocation5 + $0x3c0] sm:$0xff]
    %v4104 = vld [vmem:[#allocation5 + $0x3c8] sm:$0x1]
    %v4105 = vrot.slane %v4080, 7
    %v4106 = vrot.slane %v4085, 7
    %v4107 = vrot.slane %v4090, 7
    %v4108 = vrot.slane %v4095, 7
    %v4109 = vsel %vm576, %v4107, %v4108
    %v4110 = vsel %vm576, %v4106, %v4107
    %v4111 = vsel %vm576, %v4105, %v4106
    %v4112 = vsel %vm576, %v4108, %v4105
    %v4113 = vmul.f32 %v4112, %v584
    %v4114 = vmul.f32 %v4111, %v589
    %v4115 = vmul.f32 %v4110, %v594
    %v4116 = vmul.f32 %v4109, %v599
    %v4117 = vrot.slane %v4080, 1
    %v4118 = vrot.slane %v4085, 1
    %v4119 = vrot.slane %v4090, 1
    %v4120 = vrot.slane %v4095, 1
    %v4121 = vsel %vm609, %v4119, %v4120
    %v4122 = vsel %vm609, %v4118, %v4119
    %v4123 = vsel %vm609, %v4117, %v4118
    %v4124 = vsel %vm609, %v4120, %v4117
    %v4125 = vmul.f32 %v4123, %v616
    %v4126 = vmul.f32 %v4122, %v620
    %v4127 = vmul.f32 %v4121, %v624
    %v4128 = vmul.f32 %v4124, %v628
    %4133 = vrot.lane.b32.xlu0 %v4080, 16
    %v4134 = vpop.permute.xlu0 %4133
    %4135 = vrot.lane.b32.xlu0 %v4085, 16
    %v4136 = vpop.permute.xlu0 %4135
    %4137 = vrot.lane.b32.xlu0 %v4090, 16
    %v4138 = vpop.permute.xlu0 %4137
    %4139 = vrot.lane.b32.xlu0 %v4095, 16
    %v4140 = vpop.permute.xlu0 %4139
    %4149 = vrot.lane.b32.xlu0 %v4125, 32
    %v4150 = vpop.permute.xlu0 %4149
    %4151 = vrot.lane.b32.xlu0 %v4126, 32
    %v4152 = vpop.permute.xlu0 %4151
    %4153 = vrot.lane.b32.xlu0 %v4127, 32
    %v4154 = vpop.permute.xlu0 %4153
    %4155 = vrot.lane.b32.xlu0 %v4128, 32
    %v4156 = vpop.permute.xlu0 %4155
    %v4161 = vsel %vm50, %v4113, %v4134
    %v4162 = vsel %vm50, %v4114, %v4136
    %v4163 = vsel %vm50, %v4115, %v4138
    %v4164 = vsel %vm50, %v4116, %v4140
    %v4165 = vsel %vm273, %v4161, %v4150
    %v4166 = vsel %vm273, %v4162, %v4152
    %v4167 = vsel %vm273, %v4163, %v4154
    %v4168 = vsel %vm273, %v4164, %v4156
    %v4169 = vlaneseq
    %v4170 = vshrl.u32 %v4169, 7
    %v4171 = vsub.s32 0, %v4170
    %v4172 = vrot.slane %v4104, %v4171
    %v4174 = vsel %vm856, %v4165, 0
    %v4177 = vsel %vm856, %v4166, 0
    %v4180 = vsel %vm856, %v4167, 0
    %v4183 = vsel %vm856, %v4168, 0
    %4185 = vmatprep.subr.mxu0 0.0
    %4186 = vmatpush1.msra.mxu0 0.0
    %4187 = vmatprep.subr.mxu0 0.0
    %4188 = vmatpush1.msra.mxu0 0.0
    %4189 = vmatprep.subr.mxu0 0.0
    %4190 = vmatpush1.msra.mxu0 0.0
    %4191 = vmatprep.subr.mxu0 0.0
    %4192 = vmatpush1.msra.mxu0 0.0
    %4193 = vmatprep.subr.mxu0 0.0
    %4194 = vmatpush1.msra.mxu0 0.0
    %4195 = vmatprep.subr.mxu0 0.0
    %4196 = vmatpush1.msra.mxu0 0.0
    %4197 = vmatprep.subr.mxu0 0.0
    %4198 = vmatpush1.msra.mxu0 0.0
    %4199 = vmatprep.subr.mxu0 0.0
    %4200 = vmatpush1.msra.mxu0 0.0
    %4201 = vmatprep.subr.mxu0 0.0
    %4202 = vmatpush1.msra.mxu0 0.0
    %4203 = vmatprep.subr.mxu0 0.0
    %4204 = vmatpush1.msra.mxu0 0.0
    %4205 = vmatprep.subr.mxu0 0.0
    %4206 = vmatpush1.msra.mxu0 %v4103
    %4207 = vmatprep.subr.mxu0 0.0
    %4208 = vmatpush1.msra.mxu0 %v4102
    %4209 = vmatprep.subr.mxu0 0.0
    %4210 = vmatpush1.msra.mxu0 %v4101
    %4211 = vmatprep.subr.mxu0 0.0
    %4212 = vmatpush1.msra.mxu0 %v4100
    %4213 = vmatprep.subr.mxu0 0.0
    %4214 = vmatpush1.msra.mxu0 %v4099
    %4215 = vmatprep.subr.mxu0 0.0
    %4216 = vmatpush1.msra.mxu0 %v4098
    %4217 = vmatprep.subr.mxu0 0.0
    %4218 = vmatpush2.msra.mxu0 0.0
    %4219 = vmatprep.subr.mxu0 0.0
    %4220 = vmatpush2.msra.mxu0 0.0
    %4221 = vmatprep.subr.mxu0 0.0
    %4222 = vmatpush2.msra.mxu0 0.0
    %4223 = vmatprep.subr.mxu0 0.0
    %4224 = vmatpush2.msra.mxu0 0.0
    %4225 = vmatprep.subr.mxu0 0.0
    %4226 = vmatpush2.msra.mxu0 0.0
    %4227 = vmatprep.subr.mxu0 0.0
    %4228 = vmatpush2.msra.mxu0 0.0
    %4229 = vmatprep.subr.mxu0 0.0
    %4230 = vmatpush2.msra.mxu0 0.0
    %4231 = vmatprep.subr.mxu0 0.0
    %4232 = vmatpush2.msra.mxu0 0.0
    %4233 = vmatprep.subr.mxu0 0.0
    %4234 = vmatpush2.msra.mxu0 0.0
    %4235 = vmatprep.subr.mxu0 0.0
    %4236 = vmatpush2.msra.mxu0 0.0
    %4237 = vmatprep.subr.mxu0 0.0
    %4238 = vmatpush2.msra.mxu0 0.0
    %4239 = vmatprep.subr.mxu0 0.0
    %4240 = vmatpush2.msra.mxu0 0.0
    %4241 = vmatprep.subr.mxu0 0.0
    %4242 = vmatpush2.msra.mxu0 0.0
    %4243 = vmatprep.subr.mxu0 0.0
    %4244 = vmatpush2.msra.mxu0 0.0
    %4245 = vmatprep.subr.mxu0 0.0
    %4246 = vmatpush2.msra.mxu0 0.0
    %4247 = vmatprep.subr.mxu0 0.0
    %4248 = vmatpush2.msra.mxu0 0.0
    %4249 = vmatprep.mubr.f32.mxu0 0.0
    %4250 = vmatmul.mubr.f32.gmra.mxu0 %v4174
    %v4251 = vpop.f32.mrf.mxu0
    %v4252 = vadd.f32 %v4172, %v4251
    %v4253 = vpop.f32.mrf.mxu0
    %4254 = vmatprep.mubr.f32.mxu0 0.0
    %4255 = vmatmul.mubr.f32.gmra.mxu0 %v4177
    %v4256 = vpop.f32.mrf.mxu0
    %v4257 = vadd.f32 %v4172, %v4256
    %v4258 = vpop.f32.mrf.mxu0
    %4259 = vmatprep.mubr.f32.mxu0 0.0
    %4260 = vmatmul.mubr.f32.gmra.mxu0 %v4180
    %v4261 = vpop.f32.mrf.mxu0
    %v4262 = vadd.f32 %v4172, %v4261
    %v4263 = vpop.f32.mrf.mxu0
    %4264 = vmatprep.mubr.f32.mxu0 0.0
    %4265 = vmatmul.mubr.f32.gmra.mxu0 %v4183
    %v4266 = vpop.f32.mrf.mxu0
    %v4267 = vadd.f32 %v4172, %v4266
    %v4268 = vpop.f32.mrf.mxu0
    %4269 = vdwg.mxu0
    %v4271 = vsel %vm358, %v4252, 0
    %v4274 = vsel %vm358, %v4257, 0
    %v4277 = vsel %vm358, %v4262, 0
    %v4280 = vsel %vm358, %v4267, 0
    %4282 = vmatprep.subr.mxu0 0.0
    %4283 = vmatpush1.msra.mxu0 0.0
    %4284 = vmatprep.subr.mxu0 0.0
    %4285 = vmatpush1.msra.mxu0 0.0
    %4286 = vmatprep.subr.mxu0 0.0
    %4287 = vmatpush1.msra.mxu0 0.0
    %4288 = vmatprep.subr.mxu0 0.0
    %4289 = vmatpush1.msra.mxu0 0.0
    %4290 = vmatprep.subr.mxu0 0.0
    %4291 = vmatpush1.msra.mxu0 0.0
    %4292 = vmatprep.subr.mxu0 0.0
    %4293 = vmatpush1.msra.mxu0 0.0
    %4294 = vmatprep.subr.mxu0 0.0
    %4295 = vmatpush1.msra.mxu0 0.0
    %4296 = vmatprep.subr.mxu0 0.0
    %4297 = vmatpush1.msra.mxu0 0.0
    %4298 = vmatprep.subr.mxu0 0.0
    %4299 = vmatpush1.msra.mxu0 0.0
    %4300 = vmatprep.subr.mxu0 0.0
    %4301 = vmatpush1.msra.mxu0 0.0
    %4302 = vmatprep.subr.mxu0 0.0
    %4303 = vmatpush1.msra.mxu0 0.0
    %4304 = vmatprep.subr.mxu0 0.0
    %4305 = vmatpush1.msra.mxu0 0.0
    %4306 = vmatprep.subr.mxu0 0.0
    %4307 = vmatpush1.msra.mxu0 0.0
    %4308 = vmatprep.subr.mxu0 0.0
    %4309 = vmatpush1.msra.mxu0 0.0
    %4310 = vmatprep.subr.mxu0 0.0
    %4311 = vmatpush1.msra.mxu0 0.0
    %4312 = vmatprep.subr.mxu0 0.0
    %4313 = vmatpush1.msra.mxu0 %v2158
    %4314 = vmatprep.subr.mxu0 0.0
    %4315 = vmatpush2.msra.mxu0 0.0
    %4316 = vmatprep.subr.mxu0 0.0
    %4317 = vmatpush2.msra.mxu0 0.0
    %4318 = vmatprep.subr.mxu0 0.0
    %4319 = vmatpush2.msra.mxu0 0.0
    %4320 = vmatprep.subr.mxu0 0.0
    %4321 = vmatpush2.msra.mxu0 0.0
    %4322 = vmatprep.subr.mxu0 0.0
    %4323 = vmatpush2.msra.mxu0 0.0
    %4324 = vmatprep.subr.mxu0 0.0
    %4325 = vmatpush2.msra.mxu0 0.0
    %4326 = vmatprep.subr.mxu0 0.0
    %4327 = vmatpush2.msra.mxu0 0.0
    %4328 = vmatprep.subr.mxu0 0.0
    %4329 = vmatpush2.msra.mxu0 0.0
    %4330 = vmatprep.subr.mxu0 0.0
    %4331 = vmatpush2.msra.mxu0 0.0
    %4332 = vmatprep.subr.mxu0 0.0
    %4333 = vmatpush2.msra.mxu0 0.0
    %4334 = vmatprep.subr.mxu0 0.0
    %4335 = vmatpush2.msra.mxu0 0.0
    %4336 = vmatprep.subr.mxu0 0.0
    %4337 = vmatpush2.msra.mxu0 0.0
    %4338 = vmatprep.subr.mxu0 0.0
    %4339 = vmatpush2.msra.mxu0 0.0
    %4340 = vmatprep.subr.mxu0 0.0
    %4341 = vmatpush2.msra.mxu0 0.0
    %4342 = vmatprep.subr.mxu0 0.0
    %4343 = vmatpush2.msra.mxu0 0.0
    %4344 = vmatprep.subr.mxu0 0.0
    %4345 = vmatpush2.msra.mxu0 0.0
    %4346 = vmatprep.mubr.f32.mxu0 0.0
    %4347 = vmatmul.mubr.f32.gmra.mxu0 %v4271
    %v4348 = vpop.f32.mrf.mxu0
    %v4349 = vadd.f32 0.0, %v4348
    %v4350 = vpop.f32.mrf.mxu0
    %4351 = vmatprep.mubr.f32.mxu0 0.0
    %4352 = vmatmul.mubr.f32.gmra.mxu0 %v4274
    %v4353 = vpop.f32.mrf.mxu0
    %v4354 = vadd.f32 0.0, %v4353
    %v4355 = vpop.f32.mrf.mxu0
    %4356 = vmatprep.mubr.f32.mxu0 0.0
    %4357 = vmatmul.mubr.f32.gmra.mxu0 %v4277
    %v4358 = vpop.f32.mrf.mxu0
    %v4359 = vadd.f32 0.0, %v4358
    %v4360 = vpop.f32.mrf.mxu0
    %4361 = vmatprep.mubr.f32.mxu0 0.0
    %4362 = vmatmul.mubr.f32.gmra.mxu0 %v4280
    %v4363 = vpop.f32.mrf.mxu0
    %v4364 = vadd.f32 0.0, %v4363
    %v4365 = vpop.f32.mrf.mxu0
    %4366 = vdwg.mxu0
    %v4367 = vmul.f32 %v4349, %v459
    %v4368 = vmul.f32 %v4354, %v460
    %v4369 = vmul.f32 %v4359, %v461
    %v4370 = vmul.f32 %v4364, %v462
    %4371 = vmatprep.subr.mxu0 0.0
    %4372 = vmatpush1.msra.mxu0 0.0
    %4373 = vmatprep.subr.mxu0 0.0
    %4374 = vmatpush1.msra.mxu0 0.0
    %4375 = vmatprep.subr.mxu0 0.0
    %4376 = vmatpush1.msra.mxu0 0.0
    %4377 = vmatprep.subr.mxu0 0.0
    %4378 = vmatpush1.msra.mxu0 0.0
    %4379 = vmatprep.subr.mxu0 0.0
    %4380 = vmatpush1.msra.mxu0 0.0
    %4381 = vmatprep.subr.mxu0 0.0
    %4382 = vmatpush1.msra.mxu0 0.0
    %4383 = vmatprep.subr.mxu0 0.0
    %4384 = vmatpush1.msra.mxu0 0.0
    %4385 = vmatprep.subr.mxu0 0.0
    %4386 = vmatpush1.msra.mxu0 0.0
    %4387 = vmatprep.subr.mxu0 0.0
    %4388 = vmatpush1.msra.mxu0 0.0
    %4389 = vmatprep.subr.mxu0 0.0
    %4390 = vmatpush1.msra.mxu0 0.0
    %4391 = vmatprep.subr.mxu0 0.0
    %4392 = vmatpush1.msra.mxu0 0.0
    %4393 = vmatprep.subr.mxu0 0.0
    %4394 = vmatpush1.msra.mxu0 0.0
    %4395 = vmatprep.subr.mxu0 0.0
    %4396 = vmatpush1.msra.mxu0 %v4370
    %4397 = vmatprep.subr.mxu0 0.0
    %4398 = vmatpush1.msra.mxu0 %v4369
    %4399 = vmatprep.subr.mxu0 0.0
    %4400 = vmatpush1.msra.mxu0 %v4368
    %4401 = vmatprep.subr.mxu0 0.0
    %4402 = vmatpush1.msra.mxu0 %v4367
    %4403 = vmatprep.subr.mxu0 0.0
    %4404 = vmatpush2.msra.mxu0 0.0
    %4405 = vmatprep.subr.mxu0 0.0
    %4406 = vmatpush2.msra.mxu0 0.0
    %4407 = vmatprep.subr.mxu0 0.0
    %4408 = vmatpush2.msra.mxu0 0.0
    %4409 = vmatprep.subr.mxu0 0.0
    %4410 = vmatpush2.msra.mxu0 0.0
    %4411 = vmatprep.subr.mxu0 0.0
    %4412 = vmatpush2.msra.mxu0 0.0
    %4413 = vmatprep.subr.mxu0 0.0
    %4414 = vmatpush2.msra.mxu0 0.0
    %4415 = vmatprep.subr.mxu0 0.0
    %4416 = vmatpush2.msra.mxu0 0.0
    %4417 = vmatprep.subr.mxu0 0.0
    %4418 = vmatpush2.msra.mxu0 0.0
    %4419 = vmatprep.subr.mxu0 0.0
    %4420 = vmatpush2.msra.mxu0 0.0
    %4421 = vmatprep.subr.mxu0 0.0
    %4422 = vmatpush2.msra.mxu0 0.0
    %4423 = vmatprep.subr.mxu0 0.0
    %4424 = vmatpush2.msra.mxu0 0.0
    %4425 = vmatprep.subr.mxu0 0.0
    %4426 = vmatpush2.msra.mxu0 0.0
    %4427 = vmatprep.subr.mxu0 0.0
    %4428 = vmatpush2.msra.mxu0 0.0
    %4429 = vmatprep.subr.mxu0 0.0
    %4430 = vmatpush2.msra.mxu0 0.0
    %4431 = vmatprep.subr.mxu0 0.0
    %4432 = vmatpush2.msra.mxu0 0.0
    %4433 = vmatprep.subr.mxu0 0.0
    %4434 = vmatpush2.msra.mxu0 0.0
    %4435 = vmatprep.mubr.f32.mxu0 0.0
    %4436 = vmatmul.mubr.f32.gmra.mxu0 %v1184
    %v4437 = vpop.f32.mrf.mxu0
    %v4438 = vadd.f32 0.0, %v4437
    %v4439 = vpop.f32.mrf.mxu0
    %4440 = vdwg.mxu0
    %v4441 = vadd.f32 %v2587, %v4438
    %v4442 = vmul.f32 %v4441, %v4441
    %4444 = vrot.lane.b32.xlu0 %v4442, 112
    %v4445 = vpop.permute.xlu0 %4444
    %v4447 = vadd.f32 %v4442, %v4445
    %v4448 = vadd.f32 %v4447, 1e-24
    %v4449 = vrsqrt.pop %v4448
    %vm4450 = vcmp.gt.f32.partialorder %v4447, 0.25
    %v4451 = vmul.f32 %v4449, 0.01
    %v4452 = vsel %vm4450, %v4451, 1.0
    %v4453 = vmul.f32 %v4441, %v4452
    %4455 = vrot.lane.b32.xlu0 %v4452, 16
    %v4456 = vpop.permute.xlu0 %4455
    %v4458 = vmul.f32 %v4441, %v4456
    %v4459 = vsel %vm50, %v4453, %v4458
    %v4460 = vmul.f32 %v4459, %v2319
    %4462 = vrot.lane.b32.xlu0 %v4460, 112
    %v4463 = vpop.permute.xlu0 %4462
    %v4465 = vsub.f32 %v4460, %v4463
    %4466 = vrot.lane.b32.xlu0 %v2319, 112
    %v4467 = vpop.permute.xlu0 %4466
    %v4469 = vmul.f32 %v4459, %v4467
    %4470 = vrot.lane.b32.xlu0 %v2319, 16
    %v4471 = vpop.permute.xlu0 %4470
    %v4473 = vmul.f32 %v4459, %v4471
    %4475 = vrot.lane.b32.xlu0 %v4473, 112
    %v4476 = vpop.permute.xlu0 %4475
    %v4478 = vadd.f32 %v4469, %v4476
    %4480 = vrot.lane.b32.xlu0 %v4478, 16
    %v4481 = vpop.permute.xlu0 %4480
    %v4483 = vsel %vm50, %v4465, %v4481
    %v4484 = vmul.f32 %v240, %v4483
    %v4486 = vsel %vm273, %v4484, 0
    %4488 = vmatprep.subr.mxu0 0.0
    %4489 = vmatpush1.msra.mxu0 0.0
    %4490 = vmatprep.subr.mxu0 0.0
    %4491 = vmatpush1.msra.mxu0 0.0
    %4492 = vmatprep.subr.mxu0 0.0
    %4493 = vmatpush1.msra.mxu0 0.0
    %4494 = vmatprep.subr.mxu0 0.0
    %4495 = vmatpush1.msra.mxu0 0.0
    %4496 = vmatprep.subr.mxu0 0.0
    %4497 = vmatpush1.msra.mxu0 0.0
    %4498 = vmatprep.subr.mxu0 0.0
    %4499 = vmatpush1.msra.mxu0 0.0
    %4500 = vmatprep.subr.mxu0 0.0
    %4501 = vmatpush1.msra.mxu0 0.0
    %4502 = vmatprep.subr.mxu0 0.0
    %4503 = vmatpush1.msra.mxu0 0.0
    %4504 = vmatprep.subr.mxu0 0.0
    %4505 = vmatpush1.msra.mxu0 0.0
    %4506 = vmatprep.subr.mxu0 0.0
    %4507 = vmatpush1.msra.mxu0 0.0
    %4508 = vmatprep.subr.mxu0 0.0
    %4509 = vmatpush1.msra.mxu0 0.0
    %4510 = vmatprep.subr.mxu0 0.0
    %4511 = vmatpush1.msra.mxu0 0.0
    %4512 = vmatprep.subr.mxu0 0.0
    %4513 = vmatpush1.msra.mxu0 %v2482
    %4514 = vmatprep.subr.mxu0 0.0
    %4515 = vmatpush1.msra.mxu0 %v2481
    %4516 = vmatprep.subr.mxu0 0.0
    %4517 = vmatpush1.msra.mxu0 %v2480
    %4518 = vmatprep.subr.mxu0 0.0
    %4519 = vmatpush1.msra.mxu0 %v2479
    %4520 = vmatprep.subr.mxu0 0.0
    %4521 = vmatpush2.msra.mxu0 0.0
    %4522 = vmatprep.subr.mxu0 0.0
    %4523 = vmatpush2.msra.mxu0 0.0
    %4524 = vmatprep.subr.mxu0 0.0
    %4525 = vmatpush2.msra.mxu0 0.0
    %4526 = vmatprep.subr.mxu0 0.0
    %4527 = vmatpush2.msra.mxu0 0.0
    %4528 = vmatprep.subr.mxu0 0.0
    %4529 = vmatpush2.msra.mxu0 0.0
    %4530 = vmatprep.subr.mxu0 0.0
    %4531 = vmatpush2.msra.mxu0 0.0
    %4532 = vmatprep.subr.mxu0 0.0
    %4533 = vmatpush2.msra.mxu0 0.0
    %4534 = vmatprep.subr.mxu0 0.0
    %4535 = vmatpush2.msra.mxu0 0.0
    %4536 = vmatprep.subr.mxu0 0.0
    %4537 = vmatpush2.msra.mxu0 0.0
    %4538 = vmatprep.subr.mxu0 0.0
    %4539 = vmatpush2.msra.mxu0 0.0
    %4540 = vmatprep.subr.mxu0 0.0
    %4541 = vmatpush2.msra.mxu0 0.0
    %4542 = vmatprep.subr.mxu0 0.0
    %4543 = vmatpush2.msra.mxu0 0.0
    %4544 = vmatprep.subr.mxu0 0.0
    %4545 = vmatpush2.msra.mxu0 0.0
    %4546 = vmatprep.subr.mxu0 0.0
    %4547 = vmatpush2.msra.mxu0 0.0
    %4548 = vmatprep.subr.mxu0 0.0
    %4549 = vmatpush2.msra.mxu0 0.0
    %4550 = vmatprep.subr.mxu0 0.0
    %4551 = vmatpush2.msra.mxu0 0.0
    %4552 = vmatprep.mubr.f32.mxu0 0.0
    %4553 = vmatmul.mubr.f32.gmra.mxu0 %v4486
    %v4554 = vpop.f32.mrf.mxu0
    %v4555 = vadd.f32 0.0, %v4554
    %v4556 = vpop.f32.mrf.mxu0
    %4557 = vdwg.mxu0
    %4559 = vrot.lane.b32.xlu0 %v4555, 16
    %v4560 = vpop.permute.xlu0 %4559
    %v4562 = vsel %vm50, %v2394, %v4560
    %v4563 = vld [vmem:[#allocation5 + $0x50] sm:$0xff]
    %v4564 = vld [vmem:[#allocation5 + $0x58] sm:$0xff]
    %v4565 = vld [vmem:[#allocation5 + $0x60] sm:$0xff]
    %v4566 = vld [vmem:[#allocation5 + $0x68] sm:$0xff]
    %v4568 = vsel %vm273, %v4562, 0
    %4570 = vmatprep.subr.mxu0 0.0
    %4571 = vmatpush1.msra.mxu0 0.0
    %4572 = vmatprep.subr.mxu0 0.0
    %4573 = vmatpush1.msra.mxu0 0.0
    %4574 = vmatprep.subr.mxu0 0.0
    %4575 = vmatpush1.msra.mxu0 0.0
    %4576 = vmatprep.subr.mxu0 0.0
    %4577 = vmatpush1.msra.mxu0 0.0
    %4578 = vmatprep.subr.mxu0 0.0
    %4579 = vmatpush1.msra.mxu0 0.0
    %4580 = vmatprep.subr.mxu0 0.0
    %4581 = vmatpush1.msra.mxu0 0.0
    %4582 = vmatprep.subr.mxu0 0.0
    %4583 = vmatpush1.msra.mxu0 0.0
    %4584 = vmatprep.subr.mxu0 0.0
    %4585 = vmatpush1.msra.mxu0 0.0
    %4586 = vmatprep.subr.mxu0 0.0
    %4587 = vmatpush1.msra.mxu0 0.0
    %4588 = vmatprep.subr.mxu0 0.0
    %4589 = vmatpush1.msra.mxu0 0.0
    %4590 = vmatprep.subr.mxu0 0.0
    %4591 = vmatpush1.msra.mxu0 0.0
    %4592 = vmatprep.subr.mxu0 0.0
    %4593 = vmatpush1.msra.mxu0 0.0
    %4594 = vmatprep.subr.mxu0 0.0
    %4595 = vmatpush1.msra.mxu0 %v4566
    %4596 = vmatprep.subr.mxu0 0.0
    %4597 = vmatpush1.msra.mxu0 %v4565
    %4598 = vmatprep.subr.mxu0 0.0
    %4599 = vmatpush1.msra.mxu0 %v4564
    %4600 = vmatprep.subr.mxu0 0.0
    %4601 = vmatpush1.msra.mxu0 %v4563
    %4602 = vmatprep.subr.mxu0 0.0
    %4603 = vmatpush2.msra.mxu0 0.0
    %4604 = vmatprep.subr.mxu0 0.0
    %4605 = vmatpush2.msra.mxu0 0.0
    %4606 = vmatprep.subr.mxu0 0.0
    %4607 = vmatpush2.msra.mxu0 0.0
    %4608 = vmatprep.subr.mxu0 0.0
    %4609 = vmatpush2.msra.mxu0 0.0
    %4610 = vmatprep.subr.mxu0 0.0
    %4611 = vmatpush2.msra.mxu0 0.0
    %4612 = vmatprep.subr.mxu0 0.0
    %4613 = vmatpush2.msra.mxu0 0.0
    %4614 = vmatprep.subr.mxu0 0.0
    %4615 = vmatpush2.msra.mxu0 0.0
    %4616 = vmatprep.subr.mxu0 0.0
    %4617 = vmatpush2.msra.mxu0 0.0
    %4618 = vmatprep.subr.mxu0 0.0
    %4619 = vmatpush2.msra.mxu0 0.0
    %4620 = vmatprep.subr.mxu0 0.0
    %4621 = vmatpush2.msra.mxu0 0.0
    %4622 = vmatprep.subr.mxu0 0.0
    %4623 = vmatpush2.msra.mxu0 0.0
    %4624 = vmatprep.subr.mxu0 0.0
    %4625 = vmatpush2.msra.mxu0 0.0
    %4626 = vmatprep.subr.mxu0 0.0
    %4627 = vmatpush2.msra.mxu0 0.0
    %4628 = vmatprep.subr.mxu0 0.0
    %4629 = vmatpush2.msra.mxu0 0.0
    %4630 = vmatprep.subr.mxu0 0.0
    %4631 = vmatpush2.msra.mxu0 0.0
    %4632 = vmatprep.subr.mxu0 0.0
    %4633 = vmatpush2.msra.mxu0 0.0
    %4634 = vmatprep.mubr.f32.mxu0 0.0
    %4635 = vmatmul.mubr.f32.gmra.mxu0 %v4568
    %v4636 = vpop.f32.mrf.mxu0
    %v4637 = vadd.f32 0.0, %v4636
    %v4638 = vpop.f32.mrf.mxu0
    %4639 = vdwg.mxu0
    %v4640 = vadd.f32 %v2394, %v4555
    %4642 = vrot.lane.b32.xlu0 %v4640, 32
    %v4643 = vpop.permute.xlu0 %4642
    %v4645 = vsub.f32 %v44, %v4643
    %v4646 = vadd.f32 %v2319, %v4484
    %v4647 = vsub.f32 %v4646, %v4637
    %v4648 = vmul.f32 %v4647, 0.5
    %v4649 = vadd.f32 %v210, %v2560
    %4651 = vrot.lane.b32.xlu0 %v349, 32
    %v4652 = vpop.permute.xlu0 %4651
    %v4654 = vadd.f32 %v4649, %v4652
    %v4655 = vmul.f32 %v4654, 0.25
    %4657 = vrot.lane.b32.xlu0 %v4459, 32
    %v4658 = vpop.permute.xlu0 %4657
    %4661 = vrot.lane.b32.xlu0 %v4648, 64
    %v4662 = vpop.permute.xlu0 %4661
    %4665 = vrot.lane.b32.xlu0 %v4645, 64
    %v4666 = vpop.permute.xlu0 %4665
    %4669 = vrot.lane.b32.xlu0 %v4655, 80
    %v4670 = vpop.permute.xlu0 %4669
    %v4672 = vsel %vm273, %v2319, %v4658
    %v4673 = vsel %vm132, %v4672, %v4662
    %vm4674 = vcmask 785408
    %v4675 = vsel %vm4674, %v4673, %v4666
    %vm4676 = vcmask 916480
    %v4677 = vsel %vm4676, %v4675, %v4670
    %4678 = vst [vmem:[%s3] sm:$0x3] %v4677
    // Predicated region
    $region22: #{basic_block_forward.1} parent=1 // pred_check
      _
    $region23: #{basic_block_forward.1} parent=1 // pred_check_branch
      %4680 = sbr.rel (0) target = $region25
    $region24: #{basic_block_forward.1} parent=1 // pred_region
      _
    $region25: #{basic_block_forward.1} parent=1 // pred_fallthru
      _
    // Predicated region
    $region26: #{basic_block_forward.1} parent=1 // pred_check
      _
    $region27: #{basic_block_forward.1} parent=1 // pred_check_branch
      %4682 = sbr.rel (0) target = $region29
    $region28: #{basic_block_forward.1} parent=1 // pred_region
      _
    $region29: #{basic_block_forward.1} parent=1 // pred_fallthru
      _
    %4683 = vsyncpa [#allocation3], 1
    %4684 = vsyncpa [#allocation4], 1

</llo_original>
